<compile_context>
chip_gen: v7x
topology: tpu7x:2x2x1
jax: 0.10.0
libtpu: 0.0.40
codegen_flags: <defaults>
</compile_context>

<pallas_src>
import functools

import jax
import jax.numpy as jnp
import numpy as np
from jax.experimental import pallas as pl
from jax.experimental.pallas import tpu as pltpu

EMBED_DIM = 128                   # real: 512
HEAD_DIM = 64
HEADS = EMBED_DIM // 64           # transformer_heads = width // 64
LAYERS = 2                        # real: 6
CONTEXT_LENGTH = 16               # real: 77
LN_EPS = 1e-12                    # TF-style LayerNorm eps (inside the sqrt)


# ---------------------------------------------------------------------------
# Fused kernel
# ---------------------------------------------------------------------------
def _layernorm(x, w, b):
    # TF-style LayerNorm (biased variance), f32 statistics, rsqrt on the EUP.
    u = jnp.mean(x, axis=-1, keepdims=True)
    xc = x - u
    s = jnp.mean(xc * xc, axis=-1, keepdims=True)
    return xc * jax.lax.rsqrt(s + LN_EPS) * w + b


def fused_video_header_kernel(x_ref, pos_ref, wqkv_ref, bqkv_ref, wout_ref,
                              vec_ref, wfc_ref, bfc_ref, wproj_ref,
                              o_ref, x_vmem, ctx_vmem, *, resident):
    """Grid = (batch_blocks, layers).  Per step: one ResidualAttentionBlock on a
    packed (BB*T, C) activation slab that lives in VMEM across the layer axis.
    `resident=True`: weight refs carry all layers (leading axis = L, constant
    block index -> single DMA, indexed in-kernel).  `resident=False`: weight
    refs carry one layer (leading axis 1, streamed per layer)."""
    l = pl.program_id(1)
    n_layers = pl.num_programs(1)
    BB, T, C = x_ref.shape
    M = BB * T
    d = HEAD_DIM
    li = l if resident else 0

    # ---- layer 0: add frame-position embeddings, load residual stream in VMEM
    @pl.when(l == 0)
    def _init():
        x_vmem[...] = (x_ref[...] + pos_ref[...][None]).reshape(M, C)

    x = x_vmem[...]                                   # (M, C) f32 resident acts
    vec = vec_ref[li]                                 # (8, C) f32 small params
    ln1_w, ln1_b = vec[0:1], vec[1:2]
    ln2_w, ln2_b = vec[2:3], vec[3:4]
    out_b, proj_b = vec[4:5], vec[5:6]

    # ---- multi-head self attention (nn.MultiheadAttention semantics) --------
    # Single full-width QKV projection: (M,C)@(C,3C), bf16 operands, f32 acc.
    # 1/sqrt(d) is already folded into W_q / b_q on the host.
    y = _layernorm(x, ln1_w, ln1_b).astype(jnp.bfloat16)          # (M, C) bf16
    qkv = (jnp.dot(y, wqkv_ref[li], preferred_element_type=jnp.float32)
           + bqkv_ref[li])                                        # (M, 3C) f32

    for h in range(HEADS):           # static unroll; only the small (T,T)/(T,d)
        q = qkv[:, h * d:(h + 1) * d].reshape(BB, T, d)           # matmuls are
        k = qkv[:, C + h * d:C + (h + 1) * d].reshape(BB, T, d)   # per-head now
        v = qkv[:, 2 * C + h * d:2 * C + (h + 1) * d].reshape(BB, T, d)
        s = jnp.einsum("btd,bsd->bts", q, k,
                       preferred_element_type=jnp.float32)        # (BB, T, T)
        s = s - jnp.max(s, axis=-1, keepdims=True)
        p = jnp.exp(s)
        p = p * pl.reciprocal(jnp.sum(p, axis=-1, keepdims=True), approx=False)
        ctx = jnp.einsum("bts,bsd->btd", p, v,
                         preferred_element_type=jnp.float32)      # (BB, T, d)
        # head-concatenated context lives in a (M, C) bf16 scratch
        ctx_vmem[:, h * d:(h + 1) * d] = ctx.reshape(M, d).astype(jnp.bfloat16)

    # Single full-K output projection: (M,C)@(C,C).
    attn = jnp.dot(ctx_vmem[...], wout_ref[li],
                   preferred_element_type=jnp.float32)
    x = x + attn + out_b

    # ---- MLP: c_fc -> QuickGELU -> c_proj -----------------------------------
    y2 = _layernorm(x, ln2_w, ln2_b).astype(jnp.bfloat16)
    h1 = jnp.dot(y2, wfc_ref[li], preferred_element_type=jnp.float32) + bfc_ref[li]
    h1 = h1 * jax.nn.sigmoid(1.702 * h1)                          # QuickGELU (f32)
    mlp = jnp.dot(h1.astype(jnp.bfloat16), wproj_ref[li],
                  preferred_element_type=jnp.float32) + proj_b
    x = x + mlp
    x_vmem[...] = x

    # ---- last layer: residual against the original input + temporal mean ----
    @pl.when(l == n_layers - 1)
    def _final():
        z = x.reshape(BB, T, C) + x_ref[...]
        o_ref[...] = jnp.mean(z, axis=1)                          # (BB, C)


# ---------------------------------------------------------------------------
# Generation-aware planning + wrapper
# ---------------------------------------------------------------------------
def _plan(B, T, C, layers, force_resident=None):
    """Pick batch-block size, weight residency and VMEM limit per TPU gen."""
    kind = ""
    try:
        kind = jax.devices()[0].device_kind.lower()
    except Exception:
        pass
    two_tc = ("v7" in kind) or ("7x" in kind)       # v7x: 2 TensorCores / chip
    vmem_cap = (64 if two_tc else 128) * 2 ** 20    # v7x: 64 MiB, v5e/v6e: 128
    try:
        vmem_cap = int(pltpu.get_tpu_info().vmem_capacity_bytes)
    except Exception:
        pass
    budget = int(vmem_cap * 0.85)                   # leave compiler headroom

    w_layer = 12 * C * C * 2                        # bf16 weight bytes / layer
    # per-token VMEM: x block (f32, 2 bufs) + residual slab + ctx slab (bf16)
    # + live f32 qkv / MLP-hidden intermediates
    row_bytes = 2 * 4 * C + 4 * C + 2 * C + 4 * (3 * C + 4 * C + 2 * C)

    # Keep the whole bf16 weight stack VMEM-resident when it fits comfortably
    # (v5e/v6e at the real config; always at this demo config). Otherwise
    # stream per layer (v7x's 64 MiB at the real 6-layer/512-dim config).
    resident = 2 * layers * w_layer <= budget // 2
    if force_resident is not None:
        resident = bool(force_resident)
    w_onchip = 2 * w_layer * (layers if resident else 1)

    rows = max(8, (budget - w_onchip) // (2 * row_bytes))   # 2x safety margin
    rows = min(rows, 2048)           # weight-DMA amortization saturates ~1-2k
    bb = max(1, min(B, rows // max(T, 1)))
    if two_tc and B >= 2:            # keep >=2 blocks so both TCs get work
        bb = min(bb, -(-B // 2))     # ceil(B/2)
    return bb, resident, budget


def video_header_forward(x, params, force_resident=None):
    """x: (B, T, C) float32 -> (B, C) float32, matching video_header.forward."""
    B, T, C = x.shape
    assert C == EMBED_DIM and T <= CONTEXT_LENGTH

    # Embedding lookup of arange(T) == static slice of the table (host-side glue).
    pos = params["pos_emb"][:T]                                   # (T, C) f32

    bb, resident, budget = _plan(B, T, C, LAYERS, force_resident)
    num_bb = pl.cdiv(B, bb)
    B_pad = num_bb * bb
    xp = x if B_pad == B else jnp.pad(x, ((0, B_pad - B), (0, 0), (0, 0)))

    lb = LAYERS if resident else 1
    wmap = (lambda b, l: (0, 0, 0)) if resident else (lambda b, l: (l, 0, 0))

    in_specs = [
        pl.BlockSpec((bb, T, C), lambda b, l: (b, 0, 0)),     # x (resident per batch block)
        pl.BlockSpec((T, C), lambda b, l: (0, 0)),            # pos emb
        pl.BlockSpec((lb, C, 3 * C), wmap),                   # W_qkv (bf16, pre-T, q pre-scaled)
        pl.BlockSpec((lb, 1, 3 * C), wmap),                   # b_qkv (f32)
        pl.BlockSpec((lb, C, C), wmap),                       # W_out (bf16, pre-T)
        pl.BlockSpec((lb, 8, C), wmap),                       # ln1/ln2 gamma,beta + out/proj bias
        pl.BlockSpec((lb, C, 4 * C), wmap),                   # W_fc (bf16, pre-T)
        pl.BlockSpec((lb, 1, 4 * C), wmap),                   # b_fc (f32)
        pl.BlockSpec((lb, 4 * C, C), wmap),                   # W_proj (bf16, pre-T)
    ]
    out_spec = pl.BlockSpec((None, bb, C), lambda b, l: (b, 0, 0))

    kernel = functools.partial(fused_video_header_kernel, resident=resident)
    out = pl.pallas_call(
        kernel,
        grid=(num_bb, LAYERS),
        in_specs=in_specs,
        out_specs=out_spec,
        out_shape=jax.ShapeDtypeStruct((num_bb, bb, C), jnp.float32),
        scratch_shapes=[pltpu.VMEM((bb * T, C), jnp.float32),    # residual stream
                        pltpu.VMEM((bb * T, C), jnp.bfloat16)],  # head-concat ctx
        compiler_params=pltpu.CompilerParams(
            dimension_semantics=("parallel", "arbitrary"),
            vmem_limit_bytes=int(budget),
        ),
    )(xp, pos, params["w_qkv"], params["b_qkv"], params["w_out"],
      params["vecs"], params["w_fc"], params["b_fc"], params["w_proj"])

    return out.reshape(B_pad, C)[:B]


# ---------------------------------------------------------------------------
# Parameters: canonical "PyTorch layout" init + host-side packing for the kernel
# ---------------------------------------------------------------------------
def init_torch_params(key):
    """Synthetic parameters in the PyTorch module's layout.  Big weight matrices
    are rounded to bf16 values so the f32 reference and the bf16 kernel consume
    identical weights; biases are nonzero to exercise every bias path."""
    C = EMBED_DIM

    def w_(k, shape):
        w = 0.02 * jax.random.normal(k, shape, jnp.float32)
        return w.astype(jnp.bfloat16).astype(jnp.float32)

    def b_(k, shape):
        return 0.02 * jax.random.normal(k, shape, jnp.float32)

    keys = jax.random.split(key, 1 + LAYERS)
    pos_emb = 0.02 * jax.random.normal(keys[0], (CONTEXT_LENGTH, C), jnp.float32)
    layers = []
    for l in range(LAYERS):
        lk = jax.random.split(keys[1 + l], 8)
        layers.append(dict(
            ln1_w=jnp.ones((C,), jnp.float32), ln1_b=jnp.zeros((C,), jnp.float32),
            in_w=w_(lk[0], (3 * C, C)), in_b=b_(lk[1], (3 * C,)),
            out_w=w_(lk[2], (C, C)), out_b=b_(lk[3], (C,)),
            ln2_w=jnp.ones((C,), jnp.float32), ln2_b=jnp.zeros((C,), jnp.float32),
            fc_w=w_(lk[4], (4 * C, C)), fc_b=b_(lk[5], (4 * C,)),
            proj_w=w_(lk[6], (C, 4 * C)), proj_b=b_(lk[7], (C,)),
        ))
    return {"pos_emb": pos_emb, "layers": layers}


def pack_params(tp):
    """Stack over layers and pre-transpose so the kernel never transposes.
    The attention scale 1/sqrt(d) (a power of two -> exact) is folded into
    W_q / b_q.  Big weights are stored in bf16, small vectors in f32."""
    C, d = EMBED_DIM, HEAD_DIM
    scale = 1.0 / (d ** 0.5)
    w_qkv, b_qkv, w_out, vecs, w_fc, b_fc, w_proj = [], [], [], [], [], [], []
    zrow = jnp.zeros((C,), jnp.float32)
    for p in tp["layers"]:
        wq = p["in_w"].T                              # (C, 3C): columns = [q|k|v]
        wq = wq.at[:, :C].multiply(scale)             # fold 1/sqrt(d) into W_q
        bq = p["in_b"].at[:C].multiply(scale)
        w_qkv.append(wq)
        b_qkv.append(bq.reshape(1, 3 * C))
        w_out.append(p["out_w"].T)                    # (C, C)
        vecs.append(jnp.stack([p["ln1_w"], p["ln1_b"], p["ln2_w"], p["ln2_b"],
                               p["out_b"], p["proj_b"], zrow, zrow], axis=0))
        w_fc.append(p["fc_w"].T)                      # (C, 4C)
        b_fc.append(p["fc_b"].reshape(1, 4 * C))
        w_proj.append(p["proj_w"].T)                  # (4C, C)
    bf = jnp.bfloat16
    return dict(
        pos_emb=tp["pos_emb"],
        w_qkv=jnp.stack(w_qkv).astype(bf),            # (L, C, 3C)
        b_qkv=jnp.stack(b_qkv),                       # (L, 1, 3C)  f32
        w_out=jnp.stack(w_out).astype(bf),            # (L, C, C)
        vecs=jnp.stack(vecs),                         # (L, 8, C)   f32
        w_fc=jnp.stack(w_fc).astype(bf),              # (L, C, 4C)
        b_fc=jnp.stack(b_fc),                         # (L, 1, 4C)  f32
        w_proj=jnp.stack(w_proj).astype(bf),          # (L, 4C, C)
    )


# ---------------------------------------------------------------------------
# Pure-JAX reference (correctness check only; mirrors the PyTorch module with
# the same bf16 matmul operands / f32 accumulation as the kernel)
# ---------------------------------------------------------------------------
def reference_forward(x, tp):
    HI = jax.lax.Precision.HIGHEST
    B, T, C = x.shape
    H, d = HEADS, HEAD_DIM
    x0 = x
    x = x + tp["pos_emb"][:T][None]

    def ln(z, w, b):
        u = jnp.mean(z, -1, keepdims=True)
        s = jnp.mean((z - u) ** 2, -1, keepdims=True)
        return w * ((z - u) / jnp.sqrt(s + LN_EPS)) + b

    def proj(a, w, b):          # a @ w.T + b, bf16 operands, f32 accumulation
        return jnp.einsum("btk,dk->btd", a.astype(jnp.bfloat16),
                          w.astype(jnp.bfloat16),
                          preferred_element_type=jnp.float32) + b

    for p in tp["layers"]:
        y = ln(x, p["ln1_w"], p["ln1_b"])
        qkv = proj(y, p["in_w"], p["in_b"])
        q, k, v = jnp.split(qkv, 3, axis=-1)
        q = q.reshape(B, T, H, d)
        k = k.reshape(B, T, H, d)
        v = v.reshape(B, T, H, d)
        s = jnp.einsum("bqhd,bkhd->bhqk", q, k, precision=HI) / np.sqrt(d)
        a = jax.nn.softmax(s, axis=-1)
        ctx = jnp.einsum("bhqk,bkhd->bqhd", a, v, precision=HI).reshape(B, T, C)
        x = x + proj(ctx, p["out_w"], p["out_b"])
        y = ln(x, p["ln2_w"], p["ln2_b"])
        h1 = proj(y, p["fc_w"], p["fc_b"])
        h1 = h1 * jax.nn.sigmoid(1.702 * h1)
        x = x + proj(h1, p["proj_w"], p["proj_b"])
    return jnp.mean(x + x0, axis=1)


# ---------------------------------------------------------------------------
if __name__ == "__main__":
    key = jax.random.PRNGKey(0)
    k_x, k_p = jax.random.split(key)

    B, T = 8, 8
    x = jax.random.normal(k_x, (B, T, EMBED_DIM), jnp.float32)
    torch_params = init_torch_params(k_p)
    kernel_params = pack_params(torch_params)

    fwd = jax.jit(functools.partial(video_header_forward, params=kernel_params))
    out = jax.block_until_ready(fwd(x))

    ref = jax.block_until_ready(reference_forward(x, torch_params))
    np.testing.assert_allclose(np.asarray(out), np.asarray(ref), rtol=2e-2, atol=2e-2)
    assert out.shape == (B, EMBED_DIM)

    # Also exercise the per-layer weight-streaming path (the auto plan keeps the
    # whole weight stack VMEM-resident at this small config).
    out_s = jax.block_until_ready(
        video_header_forward(x, kernel_params, force_resident=False))
    np.testing.assert_allclose(np.asarray(out_s), np.asarray(ref), rtol=2e-2, atol=2e-2)

    print("KERNEL_OK")
</pallas_src>

<mosaic_0001>
module attributes {stable_mosaic.version = 11 : i64} {
  func.func @fused_video_header_kernel(%arg0: i32, %arg1: i32, %arg2: memref<8x8x128xf32, #tpu.memory_space<vmem>>, %arg3: memref<8x128xf32, #tpu.memory_space<vmem>>, %arg4: memref<2x128x384xbf16, #tpu.memory_space<vmem>>, %arg5: memref<2x1x384xf32, #tpu.memory_space<vmem>>, %arg6: memref<2x128x128xbf16, #tpu.memory_space<vmem>>, %arg7: memref<2x8x128xf32, #tpu.memory_space<vmem>>, %arg8: memref<2x128x512xbf16, #tpu.memory_space<vmem>>, %arg9: memref<2x1x512xf32, #tpu.memory_space<vmem>>, %arg10: memref<2x512x128xbf16, #tpu.memory_space<vmem>>, %arg11: memref<1x8x128xf32, #tpu.memory_space<vmem>>, %arg12: memref<64x128xf32, #tpu.memory_space<vmem>>, %arg13: memref<64x128xbf16, #tpu.memory_space<vmem>>) attributes {dimension_semantics = [#tpu.dimension_semantics<parallel>, #tpu.dimension_semantics<arbitrary>], iteration_bounds = array<i64: 1, 2>, scalar_prefetch = 0 : i64, scratch_operands = 2 : i64, tpu.core_type = #tpu.core_type<tc>, window_params = [{transform_indices = @transform_0, window_bounds = array<i64: 8, 8, 128>}, {pipeline_mode = #tpu.pipeline_mode<synchronous>, transform_indices = @transform_1, window_bounds = array<i64: 8, 128>}, {pipeline_mode = #tpu.pipeline_mode<synchronous>, transform_indices = @transform_2, window_bounds = array<i64: 2, 128, 384>}, {pipeline_mode = #tpu.pipeline_mode<synchronous>, transform_indices = @transform_3, window_bounds = array<i64: 2, 1, 384>}, {pipeline_mode = #tpu.pipeline_mode<synchronous>, transform_indices = @transform_4, window_bounds = array<i64: 2, 128, 128>}, {pipeline_mode = #tpu.pipeline_mode<synchronous>, transform_indices = @transform_5, window_bounds = array<i64: 2, 8, 128>}, {pipeline_mode = #tpu.pipeline_mode<synchronous>, transform_indices = @transform_6, window_bounds = array<i64: 2, 128, 512>}, {pipeline_mode = #tpu.pipeline_mode<synchronous>, transform_indices = @transform_7, window_bounds = array<i64: 2, 1, 512>}, {pipeline_mode = #tpu.pipeline_mode<synchronous>, transform_indices = @transform_8, window_bounds = array<i64: 2, 512, 128>}, {transform_indices = @transform_9, window_bounds = array<i64: 1, 8, 128>}]} {
    %c0_i32 = arith.constant 0 : i32
    %0 = arith.cmpi eq, %arg1, %c0_i32 : i32
    %1 = arith.extui %0 : i1 to i32
    %c0_i32_0 = arith.constant 0 : i32
    %2 = arith.cmpi ne, %1, %c0_i32_0 : i32
    scf.if %2 {
      %c0_47 = arith.constant 0 : index
      %c0_48 = arith.constant 0 : index
      %c0_49 = arith.constant 0 : index
      %143 = vector.load %arg2[%c0_47, %c0_48, %c0_49] : memref<8x8x128xf32, #tpu.memory_space<vmem>>, vector<8x8x128xf32>
      %c0_50 = arith.constant 0 : index
      %c0_51 = arith.constant 0 : index
      %144 = vector.load %arg3[%c0_50, %c0_51] : memref<8x128xf32, #tpu.memory_space<vmem>>, vector<8x128xf32>
      %145 = vector.shape_cast %144 : vector<8x128xf32> to vector<1x8x128xf32>
      %146 = vector.broadcast %145 : vector<1x8x128xf32> to vector<8x8x128xf32>
      %147 = arith.addf %143, %146 : vector<8x8x128xf32>
      %148 = vector.shape_cast %147 : vector<8x8x128xf32> to vector<64x128xf32>
      %c0_52 = arith.constant 0 : index
      %c0_53 = arith.constant 0 : index
      %149 = vector.load %arg12[%c0_52, %c0_53] : memref<64x128xf32, #tpu.memory_space<vmem>>, vector<64x128xf32>
      tpu.vector_store %arg12[%c0_52, %c0_53], %148 {strides = array<i32>} : memref<64x128xf32, #tpu.memory_space<vmem>>, vector<64x128xf32>,
    } else {
    }
    %c0 = arith.constant 0 : index
    %c0_1 = arith.constant 0 : index
    %3 = vector.load %arg12[%c0, %c0_1] : memref<64x128xf32, #tpu.memory_space<vmem>>, vector<64x128xf32>
    %4 = arith.index_cast %arg1 : i32 to index
    %c0_2 = arith.constant 0 : index
    %c0_3 = arith.constant 0 : index
    %5 = vector.load %arg7[%4, %c0_2, %c0_3] : memref<2x8x128xf32, #tpu.memory_space<vmem>>, vector<1x8x128xf32>
    %6 = vector.shape_cast %5 : vector<1x8x128xf32> to vector<8x128xf32>
    %7 = vector.extract_strided_slice %6 {offsets = [0, 0], sizes = [1, 128], strides = [1, 1]} : vector<8x128xf32> to vector<1x128xf32>
    %8 = vector.extract_strided_slice %6 {offsets = [1, 0], sizes = [1, 128], strides = [1, 1]} : vector<8x128xf32> to vector<1x128xf32>
    %9 = vector.extract_strided_slice %6 {offsets = [2, 0], sizes = [1, 128], strides = [1, 1]} : vector<8x128xf32> to vector<1x128xf32>
    %10 = vector.extract_strided_slice %6 {offsets = [3, 0], sizes = [1, 128], strides = [1, 1]} : vector<8x128xf32> to vector<1x128xf32>
    %11 = vector.extract_strided_slice %6 {offsets = [4, 0], sizes = [1, 128], strides = [1, 1]} : vector<8x128xf32> to vector<1x128xf32>
    %12 = vector.extract_strided_slice %6 {offsets = [5, 0], sizes = [1, 128], strides = [1, 1]} : vector<8x128xf32> to vector<1x128xf32>
    %cst = arith.constant dense<0.000000e+00> : vector<64xf32>
    %13 = vector.multi_reduction <add>, %3, %cst [1] : vector<64x128xf32> to vector<64xf32>
    %14 = vector.shape_cast %13 : vector<64xf32> to vector<64x1xf32>
    %cst_4 = arith.constant 1.280000e+02 : f32
    %15 = vector.broadcast %cst_4 : f32 to vector<64x1xf32>
    %16 = arith.divf %14, %15 : vector<64x1xf32>
    %17 = vector.broadcast %16 : vector<64x1xf32> to vector<64x128xf32>
    %18 = arith.subf %3, %17 : vector<64x128xf32>
    %19 = arith.mulf %18, %18 : vector<64x128xf32>
    %cst_5 = arith.constant dense<0.000000e+00> : vector<64xf32>
    %20 = vector.multi_reduction <add>, %19, %cst_5 [1] : vector<64x128xf32> to vector<64xf32>
    %21 = vector.shape_cast %20 : vector<64xf32> to vector<64x1xf32>
    %cst_6 = arith.constant 1.280000e+02 : f32
    %22 = vector.broadcast %cst_6 : f32 to vector<64x1xf32>
    %23 = arith.divf %21, %22 : vector<64x1xf32>
    %cst_7 = arith.constant 9.99999996E-13 : f32
    %24 = vector.broadcast %cst_7 : f32 to vector<64x1xf32>
    %25 = arith.addf %23, %24 : vector<64x1xf32>
    %26 = math.rsqrt %25 : vector<64x1xf32>
    %27 = vector.broadcast %26 : vector<64x1xf32> to vector<64x128xf32>
    %28 = arith.mulf %18, %27 : vector<64x128xf32>
    %29 = vector.broadcast %7 : vector<1x128xf32> to vector<64x128xf32>
    %30 = arith.mulf %28, %29 : vector<64x128xf32>
    %31 = vector.broadcast %8 : vector<1x128xf32> to vector<64x128xf32>
    %32 = arith.addf %30, %31 : vector<64x128xf32>
    %33 = arith.truncf %32 : vector<64x128xf32> to vector<64x128xbf16>
    %34 = arith.index_cast %arg1 : i32 to index
    %c0_8 = arith.constant 0 : index
    %c0_9 = arith.constant 0 : index
    %35 = vector.load %arg4[%34, %c0_8, %c0_9] : memref<2x128x384xbf16, #tpu.memory_space<vmem>>, vector<1x128x384xbf16>
    %36 = vector.shape_cast %35 : vector<1x128x384xbf16> to vector<128x384xbf16>
    %cst_10 = arith.constant dense<0.000000e+00> : vector<64x384xf32>
    %37 = tpu.matmul %33, %36, %cst_10 {dimension_numbers = #tpu.dot_dimension_numbers<[1], [0], [0], [1], [0, 0, 1, 1], [], []>} : vector<64x128xbf16>, vector<128x384xbf16>, vector<64x384xf32> -> vector<64x384xf32>
    %38 = arith.index_cast %arg1 : i32 to index
    %c0_11 = arith.constant 0 : index
    %c0_12 = arith.constant 0 : index
    %39 = vector.load %arg5[%38, %c0_11, %c0_12] : memref<2x1x384xf32, #tpu.memory_space<vmem>>, vector<1x1x384xf32>
    %40 = vector.shape_cast %39 : vector<1x1x384xf32> to vector<1x384xf32>
    %41 = vector.broadcast %40 : vector<1x384xf32> to vector<64x384xf32>
    %42 = arith.addf %37, %41 : vector<64x384xf32>
    %43 = vector.extract_strided_slice %42 {offsets = [0, 0], sizes = [64, 64], strides = [1, 1]} : vector<64x384xf32> to vector<64x64xf32>
    %44 = vector.shape_cast %43 : vector<64x64xf32> to vector<8x8x64xf32>
    %45 = vector.extract_strided_slice %42 {offsets = [0, 128], sizes = [64, 64], strides = [1, 1]} : vector<64x384xf32> to vector<64x64xf32>
    %46 = vector.shape_cast %45 : vector<64x64xf32> to vector<8x8x64xf32>
    %47 = vector.extract_strided_slice %42 {offsets = [0, 256], sizes = [64, 64], strides = [1, 1]} : vector<64x384xf32> to vector<64x64xf32>
    %48 = vector.shape_cast %47 : vector<64x64xf32> to vector<8x8x64xf32>
    "tpu.trace_start"() <{level = 10 : i32, message = "btd,bsd->bts"}> : () -> ()
    %cst_13 = arith.constant dense<0.000000e+00> : vector<8x8x8xf32>
    %49 = tpu.matmul %44, %46, %cst_13 {dimension_numbers = #tpu.dot_dimension_numbers<[2], [2], [1], [1], [0, 0, 0, 1, 1, 1], [0], [0]>} : vector<8x8x64xf32>, vector<8x8x64xf32>, vector<8x8x8xf32> -> vector<8x8x8xf32>
    "tpu.trace_stop"() : () -> ()
    %cst_14 = arith.constant dense<0xFF800000> : vector<8x8xf32>
    %50 = vector.multi_reduction <maximumf>, %49, %cst_14 [2] : vector<8x8x8xf32> to vector<8x8xf32>
    %51 = vector.shape_cast %50 : vector<8x8xf32> to vector<8x8x1xf32>
    %52 = vector.broadcast %51 : vector<8x8x1xf32> to vector<8x8x8xf32>
    %53 = arith.subf %49, %52 : vector<8x8x8xf32>
    %54 = math.exp %53 : vector<8x8x8xf32>
    %cst_15 = arith.constant dense<0.000000e+00> : vector<8x8xf32>
    %55 = vector.multi_reduction <add>, %54, %cst_15 [2] : vector<8x8x8xf32> to vector<8x8xf32>
    %56 = vector.shape_cast %55 : vector<8x8xf32> to vector<8x8x1xf32>
    %57 = tpu.reciprocal %56 : vector<8x8x1xf32> -> vector<8x8x1xf32>
    %58 = vector.broadcast %57 : vector<8x8x1xf32> to vector<8x8x8xf32>
    %59 = arith.mulf %54, %58 : vector<8x8x8xf32>
    "tpu.trace_start"() <{level = 10 : i32, message = "bts,bsd->btd"}> : () -> ()
    %cst_16 = arith.constant dense<0.000000e+00> : vector<8x8x64xf32>
    %60 = tpu.matmul %59, %48, %cst_16 {dimension_numbers = #tpu.dot_dimension_numbers<[2], [1], [1], [2], [0, 0, 0, 1, 1, 2], [0], [0]>} : vector<8x8x8xf32>, vector<8x8x64xf32>, vector<8x8x64xf32> -> vector<8x8x64xf32>
    "tpu.trace_stop"() : () -> ()
    %61 = vector.shape_cast %60 : vector<8x8x64xf32> to vector<64x64xf32>
    %62 = arith.truncf %61 : vector<64x64xf32> to vector<64x64xbf16>
    %c0_17 = arith.constant 0 : index
    %c0_18 = arith.constant 0 : index
    %63 = vector.load %arg13[%c0_17, %c0_18] : memref<64x128xbf16, #tpu.memory_space<vmem>>, vector<64x64xbf16>
    tpu.vector_store %arg13[%c0_17, %c0_18], %62 {strides = array<i32>} : memref<64x128xbf16, #tpu.memory_space<vmem>>, vector<64x64xbf16>,
    %64 = vector.extract_strided_slice %42 {offsets = [0, 64], sizes = [64, 64], strides = [1, 1]} : vector<64x384xf32> to vector<64x64xf32>
    %65 = vector.shape_cast %64 : vector<64x64xf32> to vector<8x8x64xf32>
    %66 = vector.extract_strided_slice %42 {offsets = [0, 192], sizes = [64, 64], strides = [1, 1]} : vector<64x384xf32> to vector<64x64xf32>
    %67 = vector.shape_cast %66 : vector<64x64xf32> to vector<8x8x64xf32>
    %68 = vector.extract_strided_slice %42 {offsets = [0, 320], sizes = [64, 64], strides = [1, 1]} : vector<64x384xf32> to vector<64x64xf32>
    %69 = vector.shape_cast %68 : vector<64x64xf32> to vector<8x8x64xf32>
    "tpu.trace_start"() <{level = 10 : i32, message = "btd,bsd->bts"}> : () -> ()
    %cst_19 = arith.constant dense<0.000000e+00> : vector<8x8x8xf32>
    %70 = tpu.matmul %65, %67, %cst_19 {dimension_numbers = #tpu.dot_dimension_numbers<[2], [2], [1], [1], [0, 0, 0, 1, 1, 1], [0], [0]>} : vector<8x8x64xf32>, vector<8x8x64xf32>, vector<8x8x8xf32> -> vector<8x8x8xf32>
    "tpu.trace_stop"() : () -> ()
    %cst_20 = arith.constant dense<0xFF800000> : vector<8x8xf32>
    %71 = vector.multi_reduction <maximumf>, %70, %cst_20 [2] : vector<8x8x8xf32> to vector<8x8xf32>
    %72 = vector.shape_cast %71 : vector<8x8xf32> to vector<8x8x1xf32>
    %73 = vector.broadcast %72 : vector<8x8x1xf32> to vector<8x8x8xf32>
    %74 = arith.subf %70, %73 : vector<8x8x8xf32>
    %75 = math.exp %74 : vector<8x8x8xf32>
    %cst_21 = arith.constant dense<0.000000e+00> : vector<8x8xf32>
    %76 = vector.multi_reduction <add>, %75, %cst_21 [2] : vector<8x8x8xf32> to vector<8x8xf32>
    %77 = vector.shape_cast %76 : vector<8x8xf32> to vector<8x8x1xf32>
    %78 = tpu.reciprocal %77 : vector<8x8x1xf32> -> vector<8x8x1xf32>
    %79 = vector.broadcast %78 : vector<8x8x1xf32> to vector<8x8x8xf32>
    %80 = arith.mulf %75, %79 : vector<8x8x8xf32>
    "tpu.trace_start"() <{level = 10 : i32, message = "bts,bsd->btd"}> : () -> ()
    %cst_22 = arith.constant dense<0.000000e+00> : vector<8x8x64xf32>
    %81 = tpu.matmul %80, %69, %cst_22 {dimension_numbers = #tpu.dot_dimension_numbers<[2], [1], [1], [2], [0, 0, 0, 1, 1, 2], [0], [0]>} : vector<8x8x8xf32>, vector<8x8x64xf32>, vector<8x8x64xf32> -> vector<8x8x64xf32>
    "tpu.trace_stop"() : () -> ()
    %82 = vector.shape_cast %81 : vector<8x8x64xf32> to vector<64x64xf32>
    %83 = arith.truncf %82 : vector<64x64xf32> to vector<64x64xbf16>
    %c0_23 = arith.constant 0 : index
    %c64 = arith.constant 64 : index
    %84 = vector.load %arg13[%c0_23, %c64] : memref<64x128xbf16, #tpu.memory_space<vmem>>, vector<64x64xbf16>
    tpu.vector_store %arg13[%c0_23, %c64], %83 {strides = array<i32>} : memref<64x128xbf16, #tpu.memory_space<vmem>>, vector<64x64xbf16>,
    %c0_24 = arith.constant 0 : index
    %c0_25 = arith.constant 0 : index
    %85 = vector.load %arg13[%c0_24, %c0_25] : memref<64x128xbf16, #tpu.memory_space<vmem>>, vector<64x128xbf16>
    %86 = arith.index_cast %arg1 : i32 to index
    %c0_26 = arith.constant 0 : index
    %c0_27 = arith.constant 0 : index
    %87 = vector.load %arg6[%86, %c0_26, %c0_27] : memref<2x128x128xbf16, #tpu.memory_space<vmem>>, vector<1x128x128xbf16>
    %88 = vector.shape_cast %87 : vector<1x128x128xbf16> to vector<128x128xbf16>
    %cst_28 = arith.constant dense<0.000000e+00> : vector<64x128xf32>
    %89 = tpu.matmul %85, %88, %cst_28 {dimension_numbers = #tpu.dot_dimension_numbers<[1], [0], [0], [1], [0, 0, 1, 1], [], []>} : vector<64x128xbf16>, vector<128x128xbf16>, vector<64x128xf32> -> vector<64x128xf32>
    %90 = arith.addf %3, %89 : vector<64x128xf32>
    %91 = vector.broadcast %11 : vector<1x128xf32> to vector<64x128xf32>
    %92 = arith.addf %90, %91 : vector<64x128xf32>
    %cst_29 = arith.constant dense<0.000000e+00> : vector<64xf32>
    %93 = vector.multi_reduction <add>, %92, %cst_29 [1] : vector<64x128xf32> to vector<64xf32>
    %94 = vector.shape_cast %93 : vector<64xf32> to vector<64x1xf32>
    %cst_30 = arith.constant 1.280000e+02 : f32
    %95 = vector.broadcast %cst_30 : f32 to vector<64x1xf32>
    %96 = arith.divf %94, %95 : vector<64x1xf32>
    %97 = vector.broadcast %96 : vector<64x1xf32> to vector<64x128xf32>
    %98 = arith.subf %92, %97 : vector<64x128xf32>
    %99 = arith.mulf %98, %98 : vector<64x128xf32>
    %cst_31 = arith.constant dense<0.000000e+00> : vector<64xf32>
    %100 = vector.multi_reduction <add>, %99, %cst_31 [1] : vector<64x128xf32> to vector<64xf32>
    %101 = vector.shape_cast %100 : vector<64xf32> to vector<64x1xf32>
    %cst_32 = arith.constant 1.280000e+02 : f32
    %102 = vector.broadcast %cst_32 : f32 to vector<64x1xf32>
    %103 = arith.divf %101, %102 : vector<64x1xf32>
    %cst_33 = arith.constant 9.99999996E-13 : f32
    %104 = vector.broadcast %cst_33 : f32 to vector<64x1xf32>
    %105 = arith.addf %103, %104 : vector<64x1xf32>
    %106 = math.rsqrt %105 : vector<64x1xf32>
    %107 = vector.broadcast %106 : vector<64x1xf32> to vector<64x128xf32>
    %108 = arith.mulf %98, %107 : vector<64x128xf32>
    %109 = vector.broadcast %9 : vector<1x128xf32> to vector<64x128xf32>
    %110 = arith.mulf %108, %109 : vector<64x128xf32>
    %111 = vector.broadcast %10 : vector<1x128xf32> to vector<64x128xf32>
    %112 = arith.addf %110, %111 : vector<64x128xf32>
    %113 = arith.truncf %112 : vector<64x128xf32> to vector<64x128xbf16>
    %114 = arith.index_cast %arg1 : i32 to index
    %c0_34 = arith.constant 0 : index
    %c0_35 = arith.constant 0 : index
    %115 = vector.load %arg8[%114, %c0_34, %c0_35] : memref<2x128x512xbf16, #tpu.memory_space<vmem>>, vector<1x128x512xbf16>
    %116 = vector.shape_cast %115 : vector<1x128x512xbf16> to vector<128x512xbf16>
    %cst_36 = arith.constant dense<0.000000e+00> : vector<64x512xf32>
    %117 = tpu.matmul %113, %116, %cst_36 {dimension_numbers = #tpu.dot_dimension_numbers<[1], [0], [0], [1], [0, 0, 1, 1], [], []>} : vector<64x128xbf16>, vector<128x512xbf16>, vector<64x512xf32> -> vector<64x512xf32>
    %118 = arith.index_cast %arg1 : i32 to index
    %c0_37 = arith.constant 0 : index
    %c0_38 = arith.constant 0 : index
    %119 = vector.load %arg9[%118, %c0_37, %c0_38] : memref<2x1x512xf32, #tpu.memory_space<vmem>>, vector<1x1x512xf32>
    %120 = vector.shape_cast %119 : vector<1x1x512xf32> to vector<1x512xf32>
    %121 = vector.broadcast %120 : vector<1x512xf32> to vector<64x512xf32>
    %122 = arith.addf %117, %121 : vector<64x512xf32>
    %cst_39 = arith.constant 1.702000e+00 : f32
    %123 = vector.broadcast %cst_39 : f32 to vector<64x512xf32>
    %124 = arith.mulf %123, %122 : vector<64x512xf32>
    %125 = arith.negf %124 : vector<64x512xf32>
    %126 = math.exp %125 : vector<64x512xf32>
    %cst_40 = arith.constant 1.000000e+00 : f32
    %127 = vector.broadcast %cst_40 : f32 to vector<64x512xf32>
    %128 = arith.addf %127, %126 : vector<64x512xf32>
    %129 = arith.divf %127, %128 : vector<64x512xf32>
    %130 = arith.mulf %122, %129 : vector<64x512xf32>
    %131 = arith.truncf %130 : vector<64x512xf32> to vector<64x512xbf16>
    %132 = arith.index_cast %arg1 : i32 to index
    %c0_41 = arith.constant 0 : index
    %c0_42 = arith.constant 0 : index
    %133 = vector.load %arg10[%132, %c0_41, %c0_42] : memref<2x512x128xbf16, #tpu.memory_space<vmem>>, vector<1x512x128xbf16>
    %134 = vector.shape_cast %133 : vector<1x512x128xbf16> to vector<512x128xbf16>
    %cst_43 = arith.constant dense<0.000000e+00> : vector<64x128xf32>
    %135 = tpu.matmul %131, %134, %cst_43 {dimension_numbers = #tpu.dot_dimension_numbers<[1], [0], [0], [1], [0, 0, 1, 1], [], []>} : vector<64x512xbf16>, vector<512x128xbf16>, vector<64x128xf32> -> vector<64x128xf32>
    %136 = vector.broadcast %12 : vector<1x128xf32> to vector<64x128xf32>
    %137 = arith.addf %135, %136 : vector<64x128xf32>
    %138 = arith.addf %92, %137 : vector<64x128xf32>
    %c0_44 = arith.constant 0 : index
    %c0_45 = arith.constant 0 : index
    %139 = vector.load %arg12[%c0_44, %c0_45] : memref<64x128xf32, #tpu.memory_space<vmem>>, vector<64x128xf32>
    tpu.vector_store %arg12[%c0_44, %c0_45], %138 {strides = array<i32>} : memref<64x128xf32, #tpu.memory_space<vmem>>, vector<64x128xf32>,
    %c1_i32 = arith.constant 1 : i32
    %140 = arith.cmpi eq, %arg1, %c1_i32 : i32
    %141 = arith.extui %140 : i1 to i32
    %c0_i32_46 = arith.constant 0 : i32
    %142 = arith.cmpi ne, %141, %c0_i32_46 : i32
    scf.if %142 {
      %143 = vector.shape_cast %138 : vector<64x128xf32> to vector<8x8x128xf32>
      %c0_47 = arith.constant 0 : index
      %c0_48 = arith.constant 0 : index
      %c0_49 = arith.constant 0 : index
      %144 = vector.load %arg2[%c0_47, %c0_48, %c0_49] : memref<8x8x128xf32, #tpu.memory_space<vmem>>, vector<8x8x128xf32>
      %145 = arith.addf %143, %144 : vector<8x8x128xf32>
      %cst_50 = arith.constant dense<0.000000e+00> : vector<8x128xf32>
      %146 = vector.multi_reduction <add>, %145, %cst_50 [1] : vector<8x8x128xf32> to vector<8x128xf32>
      %cst_51 = arith.constant 8.000000e+00 : f32
      %147 = vector.broadcast %cst_51 : f32 to vector<8x128xf32>
      %148 = arith.divf %146, %147 : vector<8x128xf32>
      %c0_52 = arith.constant 0 : index
      %c0_53 = arith.constant 0 : index
      %c0_54 = arith.constant 0 : index
      %149 = vector.load %arg11[%c0_52, %c0_53, %c0_54] : memref<1x8x128xf32, #tpu.memory_space<vmem>>, vector<1x8x128xf32>
      %150 = vector.shape_cast %149 : vector<1x8x128xf32> to vector<8x128xf32>
      %151 = vector.shape_cast %148 : vector<8x128xf32> to vector<1x8x128xf32>
      tpu.vector_store %arg11[%c0_52, %c0_53, %c0_54], %151 {strides = array<i32>} : memref<1x8x128xf32, #tpu.memory_space<vmem>>, vector<1x8x128xf32>,
    } else {
    }
    return
  }
  func.func @transform_0(%arg0: i32, %arg1: i32) -> (i32, i32, i32) {
    %c0_i32 = arith.constant 0 : i32
    %c0_i32_0 = arith.constant 0 : i32
    %c0_i32_1 = arith.constant 0 : i32
    return %arg0, %c0_i32, %c0_i32_0 : i32, i32, i32
  }
  func.func @transform_1(%arg0: i32, %arg1: i32) -> (i32, i32) {
    %c0_i32 = arith.constant 0 : i32
    %c0_i32_0 = arith.constant 0 : i32
    %c0_i32_1 = arith.constant 0 : i32
    return %c0_i32, %c0_i32_0 : i32, i32
  }
  func.func @transform_2(%arg0: i32, %arg1: i32) -> (i32, i32, i32) {
    %c0_i32 = arith.constant 0 : i32
    %c0_i32_0 = arith.constant 0 : i32
    %c0_i32_1 = arith.constant 0 : i32
    %c0_i32_2 = arith.constant 0 : i32
    return %c0_i32, %c0_i32_0, %c0_i32_1 : i32, i32, i32
  }
  func.func @transform_3(%arg0: i32, %arg1: i32) -> (i32, i32, i32) {
    %c0_i32 = arith.constant 0 : i32
    %c0_i32_0 = arith.constant 0 : i32
    %c0_i32_1 = arith.constant 0 : i32
    %c0_i32_2 = arith.constant 0 : i32
    return %c0_i32, %c0_i32_0, %c0_i32_1 : i32, i32, i32
  }
  func.func @transform_4(%arg0: i32, %arg1: i32) -> (i32, i32, i32) {
    %c0_i32 = arith.constant 0 : i32
    %c0_i32_0 = arith.constant 0 : i32
    %c0_i32_1 = arith.constant 0 : i32
    %c0_i32_2 = arith.constant 0 : i32
    return %c0_i32, %c0_i32_0, %c0_i32_1 : i32, i32, i32
  }
  func.func @transform_5(%arg0: i32, %arg1: i32) -> (i32, i32, i32) {
    %c0_i32 = arith.constant 0 : i32
    %c0_i32_0 = arith.constant 0 : i32
    %c0_i32_1 = arith.constant 0 : i32
    %c0_i32_2 = arith.constant 0 : i32
    return %c0_i32, %c0_i32_0, %c0_i32_1 : i32, i32, i32
  }
  func.func @transform_6(%arg0: i32, %arg1: i32) -> (i32, i32, i32) {
    %c0_i32 = arith.constant 0 : i32
    %c0_i32_0 = arith.constant 0 : i32
    %c0_i32_1 = arith.constant 0 : i32
    %c0_i32_2 = arith.constant 0 : i32
    return %c0_i32, %c0_i32_0, %c0_i32_1 : i32, i32, i32
  }
  func.func @transform_7(%arg0: i32, %arg1: i32) -> (i32, i32, i32) {
    %c0_i32 = arith.constant 0 : i32
    %c0_i32_0 = arith.constant 0 : i32
    %c0_i32_1 = arith.constant 0 : i32
    %c0_i32_2 = arith.constant 0 : i32
    return %c0_i32, %c0_i32_0, %c0_i32_1 : i32, i32, i32
  }
  func.func @transform_8(%arg0: i32, %arg1: i32) -> (i32, i32, i32) {
    %c0_i32 = arith.constant 0 : i32
    %c0_i32_0 = arith.constant 0 : i32
    %c0_i32_1 = arith.constant 0 : i32
    %c0_i32_2 = arith.constant 0 : i32
    return %c0_i32, %c0_i32_0, %c0_i32_1 : i32, i32, i32
  }
  func.func @transform_9(%arg0: i32, %arg1: i32) -> (i32, i32, i32) {
    %c0_i32 = arith.constant 0 : i32
    %c0_i32_0 = arith.constant 0 : i32
    %c0_i32_1 = arith.constant 0 : i32
    return %arg0, %c0_i32, %c0_i32_0 : i32, i32, i32
  }
}

</mosaic_0001>

<llo_original>
// kernel: video_header_forward.1
$region0: #{video_header_forward.1}
  #allocation0 [shape = 'u32[]', space=smem, size = 0x4, offset = 0x4, fixed_abs, tag = 'smem constant byte address 0x4 - core index']
  #allocation1 [shape = 'u32[144,128]{1,0:T(1,128)}', space=vmem, size = 0x12000, scoped, tag = 'internal scratch']
  #allocation2 [shape = 'f32[64,128]{1,0:T(8,128)}', space=vmem, size = 0x8000, scoped, tag = 'scratch operand']
  #allocation3 [shape = 'bf16[64,128]{1,0:T(16,128)(2,1)}', space=vmem, size = 0x4000, scoped, tag = 'scratch operand']
  %s0 = inlined_call_operand.hbm [shape: f32[8,8,128], index: 0, kind: input, shape index: {}]
  %s1 = inlined_call_operand.hbm [shape: f32[8,128], index: 1, kind: input, shape index: {}]
  %s2 = inlined_call_operand.hbm [shape: bf16[2,128,384], index: 2, kind: input, shape index: {}]
  %s3 = inlined_call_operand.hbm [shape: f32[2,1,384], index: 3, kind: input, shape index: {}]
  %s4 = inlined_call_operand.hbm [shape: bf16[2,128,128], index: 4, kind: input, shape index: {}]
  %s5 = inlined_call_operand.hbm [shape: f32[2,8,128], index: 5, kind: input, shape index: {}]
  %s6 = inlined_call_operand.hbm [shape: bf16[2,128,512], index: 6, kind: input, shape index: {}]
  %s7 = inlined_call_operand.hbm [shape: f32[2,1,512], index: 7, kind: input, shape index: {}]
  %s8 = inlined_call_operand.hbm [shape: bf16[2,512,128], index: 8, kind: input, shape index: {}]
  %s9 = inlined_call_operand.hbm [shape: f32[1,8,128], index: 9, kind: output, shape index: {}]
  %s10 = sld [smem:[#allocation0]]
  $region113: #{video_header_forward.1} parent=0
    _
  %s12 = ssub.s32 1, %s10
  %s13 = scalar_select 0, %s12, %s10
  $region1: #{video_header_forward.1} parent=0
    #allocation4 [shape = 'u8[32768]{0}', space=vmem, size = 0x8000, scoped, tag = 'input window, operand 0, single buffered']
    #allocation5 [shape = 's32[2]{0}', space=sflag, size = 0x8, scoped, tag = 'scoped memory for video_header_forward.1']
    #allocation6 [shape = 's32[2]{0}', space=sflag, size = 0x8, scoped, tag = 'scoped memory for video_header_forward.1']
    #allocation7 [shape = 'u8[4096]{0}', space=vmem, size = 0x1000, scoped, tag = 'input window, operand 1, single buffered']
    #allocation8 [shape = 's32[1]{0}', space=sflag, size = 0x4, scoped, tag = 'scoped memory for video_header_forward.1']
    #allocation9 [shape = 'u8[196608]{0}', space=vmem, size = 0x30000, scoped, tag = 'input window, operand 2, single buffered']
    #allocation10 [shape = 'u8[3072]{0}', space=vmem, size = 0xc00, scoped, tag = 'input window, operand 3, single buffered']
    #allocation11 [shape = 's32[1]{0}', space=sflag, size = 0x4, scoped, tag = 'scoped memory for video_header_forward.1']
    #allocation12 [shape = 'u8[65536]{0}', space=vmem, size = 0x10000, scoped, tag = 'input window, operand 4, single buffered']
    #allocation13 [shape = 'u8[8192]{0}', space=vmem, size = 0x2000, scoped, tag = 'input window, operand 5, single buffered']
    #allocation14 [shape = 's32[1]{0}', space=sflag, size = 0x4, scoped, tag = 'scoped memory for video_header_forward.1']
    #allocation15 [shape = 'u8[262144]{0}', space=vmem, size = 0x40000, scoped, tag = 'input window, operand 6, single buffered']
    #allocation16 [shape = 'u8[4096]{0}', space=vmem, size = 0x1000, scoped, tag = 'input window, operand 7, single buffered']
    #allocation17 [shape = 's32[1]{0}', space=sflag, size = 0x4, scoped, tag = 'scoped memory for video_header_forward.1']
    #allocation18 [shape = 'u8[262144]{0}', space=vmem, size = 0x40000, scoped, tag = 'input window, operand 8, single buffered']
    #allocation19 [shape = 'u8[4096]{0}', space=vmem, size = 0x1000, scoped, tag = 'output window, operand 0, single buffered']
    %14 = vsyncpa [#allocation5], 0
    %15 = vsyncpa [#allocation8], 0
    %16 = vsyncpa [#allocation11], 0
    %17 = vsyncpa [#allocation14], 0
    %18 = vsyncpa [#allocation17], 0
    %19 = vsyncpa [#allocation6], 0
    loop: start=0, step=1, limit=4
    $region2: #{video_header_forward.1} parent=1 // loop_pre_header
      _
    $region3: #{video_header_forward.1} parent=1 // loop_header
      %s21 = sphi 0, %s25
      %p22 = scmp.ge.s32.totalorder %s21, 4
      %s28 = sphi 0, %s40
      %s29 = sphi 0, %s36
      %s30 = sphi 0, %s28
      %s31 = sphi 0, %s29
      %s32 = sphi 0, %s30
      %s33 = sphi 0, %s31
      %s43 = sphi 0, %s45
      %s46 = sphi 0, %s43
      %s47 = sphi 0, %s46
      %s63 = sphi 0, %s47
      %s67 = sphi 0, %s67
      %s69 = sphi 0, %s67
      %s70 = sphi 0, %s69
      %s84 = sphi 0, %s70
      %s88 = sphi 0, %s88
      %s90 = sphi 0, %s88
      %s91 = sphi 0, %s90
      %s105 = sphi 0, %s91
      %s109 = sphi 0, %s109
      %s111 = sphi 0, %s109
      %s112 = sphi 0, %s111
      %s126 = sphi 0, %s112
      %s130 = sphi 0, %s130
      %s132 = sphi 0, %s130
      %s133 = sphi 0, %s132
      %s147 = sphi 0, %s133
      %s151 = sphi 0, %s151
      %s153 = sphi 0, %s151
      %s154 = sphi 0, %s153
      %s168 = sphi 0, %s154
      %s172 = sphi 0, %s172
      %s174 = sphi 0, %s172
      %s175 = sphi 0, %s174
      %s189 = sphi 0, %s175
      %s193 = sphi 0, %s193
      %s195 = sphi 0, %s193
      %s196 = sphi 0, %s195
      %s210 = sphi 0, %s196
      %s214 = sphi 0, %s214
      %s216 = sphi 0, %s214
      %s217 = sphi 0, %s216
      %s231 = sphi 0, %s217
      %s237 = sphi 0, %s239
      %s240 = sphi 0, %s237
      %s241 = sphi 0, %s240
      %s257 = sphi 0, %s241
    $region4: #{video_header_forward.1} parent=1 // loop_header_branch
      %24 = sbr.rel (%p22) target = $region8
    $region5: #{video_header_forward.1} parent=1 // loop_body
      %s26 = ssub.s32 %s21, 1
      %s27 = ssub.s32 %s21, 2
      %s34 = sadd.s32 1, %s29
      %p35 = scmp.ge.s32.totalorder %s34, 2
      %s36 = scalar_select %p35, 0, %s34
      %s37 = sadd.s32 1, %s28
      %s38 = scalar_select %p35, %s37, %s28
      %p39 = scmp.ge.s32.totalorder %s38, 1
      %s40 = scalar_select %p39, 0, %s38
      %s41 = ssub.s32 %s28, %s40
      %p42 = scmp.eq.s32.totalorder %s41, 0
      %s44 = sadd.s32 %s43, 1
      %s45 = scalar_select %p42, %s43, %s44
      %p48 = pneg %p42
      %p49 = scmp.eq.s32.totalorder %s21, 1
      %p50 = por %p48, %p49
      %p51 = scmp.ne.s32.totalorder %s43, %s46
      %p52 = scmp.eq.s32.totalorder %s21, 0
      %p53 = por %p51, %p52
      %p54 = scmp.ne.s32.totalorder %s43, %s46
      %p55 = scmp.eq.s32.totalorder %s26, 1
      %p56 = por %p54, %p55
      %p57 = scmp.ne.s32.totalorder %s46, %s47
      %p58 = scmp.eq.s32.totalorder %s26, 0
      %p59 = por %p57, %p58
      %p60 = scmp.ne.s32.totalorder %s46, %s47
      %p61 = scmp.eq.s32.totalorder %s27, 1
      %p62 = por %p60, %p61
      %p64 = scmp.ne.s32.totalorder %s47, %s63
      %p65 = scmp.eq.s32.totalorder %s27, 0
      %p66 = por %p64, %p65
      %s68 = sadd.s32 %s67, 1
      %p71 = scmp.eq.s32.totalorder %s21, 1
      %p72 = scmp.ne.s32.totalorder %s67, %s69
      %p73 = scmp.eq.s32.totalorder %s21, 0
      %p74 = por %p72, %p73
      %p75 = scmp.ne.s32.totalorder %s67, %s69
      %p76 = scmp.eq.s32.totalorder %s26, 1
      %p77 = por %p75, %p76
      %p78 = scmp.ne.s32.totalorder %s69, %s70
      %p79 = scmp.eq.s32.totalorder %s26, 0
      %p80 = por %p78, %p79
      %p81 = scmp.ne.s32.totalorder %s69, %s70
      %p82 = scmp.eq.s32.totalorder %s27, 1
      %p83 = por %p81, %p82
      %p85 = scmp.ne.s32.totalorder %s70, %s84
      %p86 = scmp.eq.s32.totalorder %s27, 0
      %p87 = por %p85, %p86
      %s89 = sadd.s32 %s88, 1
      %p92 = scmp.eq.s32.totalorder %s21, 1
      %p93 = scmp.ne.s32.totalorder %s88, %s90
      %p94 = scmp.eq.s32.totalorder %s21, 0
      %p95 = por %p93, %p94
      %p96 = scmp.ne.s32.totalorder %s88, %s90
      %p97 = scmp.eq.s32.totalorder %s26, 1
      %p98 = por %p96, %p97
      %p99 = scmp.ne.s32.totalorder %s90, %s91
      %p100 = scmp.eq.s32.totalorder %s26, 0
      %p101 = por %p99, %p100
      %p102 = scmp.ne.s32.totalorder %s90, %s91
      %p103 = scmp.eq.s32.totalorder %s27, 1
      %p104 = por %p102, %p103
      %p106 = scmp.ne.s32.totalorder %s91, %s105
      %p107 = scmp.eq.s32.totalorder %s27, 0
      %p108 = por %p106, %p107
      %s110 = sadd.s32 %s109, 1
      %p113 = scmp.eq.s32.totalorder %s21, 1
      %p114 = scmp.ne.s32.totalorder %s109, %s111
      %p115 = scmp.eq.s32.totalorder %s21, 0
      %p116 = por %p114, %p115
      %p117 = scmp.ne.s32.totalorder %s109, %s111
      %p118 = scmp.eq.s32.totalorder %s26, 1
      %p119 = por %p117, %p118
      %p120 = scmp.ne.s32.totalorder %s111, %s112
      %p121 = scmp.eq.s32.totalorder %s26, 0
      %p122 = por %p120, %p121
      %p123 = scmp.ne.s32.totalorder %s111, %s112
      %p124 = scmp.eq.s32.totalorder %s27, 1
      %p125 = por %p123, %p124
      %p127 = scmp.ne.s32.totalorder %s112, %s126
      %p128 = scmp.eq.s32.totalorder %s27, 0
      %p129 = por %p127, %p128
      %s131 = sadd.s32 %s130, 1
      %p134 = scmp.eq.s32.totalorder %s21, 1
      %p135 = scmp.ne.s32.totalorder %s130, %s132
      %p136 = scmp.eq.s32.totalorder %s21, 0
      %p137 = por %p135, %p136
      %p138 = scmp.ne.s32.totalorder %s130, %s132
      %p139 = scmp.eq.s32.totalorder %s26, 1
      %p140 = por %p138, %p139
      %p141 = scmp.ne.s32.totalorder %s132, %s133
      %p142 = scmp.eq.s32.totalorder %s26, 0
      %p143 = por %p141, %p142
      %p144 = scmp.ne.s32.totalorder %s132, %s133
      %p145 = scmp.eq.s32.totalorder %s27, 1
      %p146 = por %p144, %p145
      %p148 = scmp.ne.s32.totalorder %s133, %s147
      %p149 = scmp.eq.s32.totalorder %s27, 0
      %p150 = por %p148, %p149
      %s152 = sadd.s32 %s151, 1
      %p155 = scmp.eq.s32.totalorder %s21, 1
      %p156 = scmp.ne.s32.totalorder %s151, %s153
      %p157 = scmp.eq.s32.totalorder %s21, 0
      %p158 = por %p156, %p157
      %p159 = scmp.ne.s32.totalorder %s151, %s153
      %p160 = scmp.eq.s32.totalorder %s26, 1
      %p161 = por %p159, %p160
      %p162 = scmp.ne.s32.totalorder %s153, %s154
      %p163 = scmp.eq.s32.totalorder %s26, 0
      %p164 = por %p162, %p163
      %p165 = scmp.ne.s32.totalorder %s153, %s154
      %p166 = scmp.eq.s32.totalorder %s27, 1
      %p167 = por %p165, %p166
      %p169 = scmp.ne.s32.totalorder %s154, %s168
      %p170 = scmp.eq.s32.totalorder %s27, 0
      %p171 = por %p169, %p170
      %s173 = sadd.s32 %s172, 1
      %p176 = scmp.eq.s32.totalorder %s21, 1
      %p177 = scmp.ne.s32.totalorder %s172, %s174
      %p178 = scmp.eq.s32.totalorder %s21, 0
      %p179 = por %p177, %p178
      %p180 = scmp.ne.s32.totalorder %s172, %s174
      %p181 = scmp.eq.s32.totalorder %s26, 1
      %p182 = por %p180, %p181
      %p183 = scmp.ne.s32.totalorder %s174, %s175
      %p184 = scmp.eq.s32.totalorder %s26, 0
      %p185 = por %p183, %p184
      %p186 = scmp.ne.s32.totalorder %s174, %s175
      %p187 = scmp.eq.s32.totalorder %s27, 1
      %p188 = por %p186, %p187
      %p190 = scmp.ne.s32.totalorder %s175, %s189
      %p191 = scmp.eq.s32.totalorder %s27, 0
      %p192 = por %p190, %p191
      %s194 = sadd.s32 %s193, 1
      %p197 = scmp.eq.s32.totalorder %s21, 1
      %p198 = scmp.ne.s32.totalorder %s193, %s195
      %p199 = scmp.eq.s32.totalorder %s21, 0
      %p200 = por %p198, %p199
      %p201 = scmp.ne.s32.totalorder %s193, %s195
      %p202 = scmp.eq.s32.totalorder %s26, 1
      %p203 = por %p201, %p202
      %p204 = scmp.ne.s32.totalorder %s195, %s196
      %p205 = scmp.eq.s32.totalorder %s26, 0
      %p206 = por %p204, %p205
      %p207 = scmp.ne.s32.totalorder %s195, %s196
      %p208 = scmp.eq.s32.totalorder %s27, 1
      %p209 = por %p207, %p208
      %p211 = scmp.ne.s32.totalorder %s196, %s210
      %p212 = scmp.eq.s32.totalorder %s27, 0
      %p213 = por %p211, %p212
      %s215 = sadd.s32 %s214, 1
      %p218 = scmp.eq.s32.totalorder %s21, 1
      %p219 = scmp.ne.s32.totalorder %s214, %s216
      %p220 = scmp.eq.s32.totalorder %s21, 0
      %p221 = por %p219, %p220
      %p222 = scmp.ne.s32.totalorder %s214, %s216
      %p223 = scmp.eq.s32.totalorder %s26, 1
      %p224 = por %p222, %p223
      %p225 = scmp.ne.s32.totalorder %s216, %s217
      %p226 = scmp.eq.s32.totalorder %s26, 0
      %p227 = por %p225, %p226
      %p228 = scmp.ne.s32.totalorder %s216, %s217
      %p229 = scmp.eq.s32.totalorder %s27, 1
      %p230 = por %p228, %p229
      %p232 = scmp.ne.s32.totalorder %s217, %s231
      %p233 = scmp.eq.s32.totalorder %s27, 0
      %p234 = por %p232, %p233
      %s235 = ssub.s32 %s28, %s40
      %p236 = scmp.eq.s32.totalorder %s235, 0
      %s238 = sadd.s32 %s237, 1
      %s239 = scalar_select %p236, %s237, %s238
      %p242 = pneg %p236
      %p243 = scmp.eq.s32.totalorder %s21, 1
      %p244 = por %p242, %p243
      %p245 = scmp.ne.s32.totalorder %s237, %s240
      %p246 = scmp.eq.s32.totalorder %s21, 0
      %p247 = por %p245, %p246
      %p248 = scmp.ne.s32.totalorder %s237, %s240
      %p249 = scmp.eq.s32.totalorder %s26, 1
      %p250 = por %p248, %p249
      %p251 = scmp.ne.s32.totalorder %s240, %s241
      %p252 = scmp.eq.s32.totalorder %s26, 0
      %p253 = por %p251, %p252
      %p254 = scmp.ne.s32.totalorder %s240, %s241
      %p255 = scmp.eq.s32.totalorder %s27, 1
      %p256 = por %p254, %p255
      %p258 = scmp.ne.s32.totalorder %s241, %s257
      %p259 = scmp.eq.s32.totalorder %s27, 0
      %p260 = por %p258, %p259
      %p261 = scmp.le.s32.totalorder 1, %s21
      %p262 = scmp.lt.s32.totalorder %s21, 3
      %p263 = pnand %p261, %p262
      %p264 = pneg %p263
      // Predicated region
      $region9: #{video_header_forward.1} parent=5 // pred_check
        _
      $region10: #{video_header_forward.1} parent=5 // pred_check_branch
        %266 = sbr.rel (%p263) target = $region12
      $region11: #{video_header_forward.1} parent=5 // pred_region
        %s267 = ssub.s32 %s21, 1
        // Predicated region
        $region13: #{video_header_forward.1} parent=11 // pred_check
          %p268 = pneg %p59
        $region14: #{video_header_forward.1} parent=11 // pred_check_branch
          %270 = sbr.rel (%p268) target = $region16
        $region15: #{video_header_forward.1} parent=11 // pred_region
          %s271 = smul.u32 8, %s30
          %s273 = ssub.s32 1024, 1024
          %274 = vsyncadd [#allocation5], %s273
          %s275 = smul.addr %s271, 128
          %s276 = scalar_lea.hbm %s0, %s275
          %s277 = sshll.u32 [#allocation4], 4
          %s278 = int_to_ptr.vmem [resolvable:$true] %s277
          %283 = dma.hbm_to_vmem [thread:$0]  %s276, 1024, %s278, [#allocation5], 128, 128, 8
        $region16: #{video_header_forward.1} parent=11 // pred_fallthru
          _
        // Predicated region
        $region17: #{video_header_forward.1} parent=11 // pred_check
          %p284 = pneg %p80
        $region18: #{video_header_forward.1} parent=11 // pred_check_branch
          %286 = sbr.rel (%p284) target = $region20
        $region19: #{video_header_forward.1} parent=11 // pred_region
          %s288 = ssub.s32 128, 128
          %289 = vsyncadd [#allocation8], %s288
          %s291 = sshll.u32 [#allocation7], 4
          %s292 = int_to_ptr.vmem [resolvable:$true] %s291
          %294 = dma.hbm_to_vmem [thread:$0]  %s1, 128, %s292, [#allocation8]
        $region20: #{video_header_forward.1} parent=11 // pred_fallthru
          _
        // Predicated region
        $region21: #{video_header_forward.1} parent=11 // pred_check
          %p295 = pneg %p101
        $region22: #{video_header_forward.1} parent=11 // pred_check_branch
          %297 = sbr.rel (%p295) target = $region24
        $region23: #{video_header_forward.1} parent=11 // pred_region
          %s299 = ssub.s32 6144, 6144
          %300 = vsyncadd [#allocation8], %s299
          %s301 = sshll.u32 [#allocation9], 4
          %s302 = int_to_ptr.vmem [resolvable:$true] %s301
          %307 = dma.hbm_to_vmem [thread:$0]  %s2, 6144, %s302, [#allocation8], 192, 192, 12
        $region24: #{video_header_forward.1} parent=11 // pred_fallthru
          _
        // Predicated region
        $region25: #{video_header_forward.1} parent=11 // pred_check
          %p308 = pneg %p122
        $region26: #{video_header_forward.1} parent=11 // pred_check_branch
          %310 = sbr.rel (%p308) target = $region28
        $region27: #{video_header_forward.1} parent=11 // pred_region
          %s312 = ssub.s32 96, 96
          %313 = vsyncadd [#allocation11], %s312
          %s314 = sshll.u32 [#allocation10], 4
          %s315 = int_to_ptr.vmem [resolvable:$true] %s314
          %320 = dma.hbm_to_vmem [thread:$0]  %s3, 96, %s315, [#allocation11], 48, 48, 3
        $region28: #{video_header_forward.1} parent=11 // pred_fallthru
          _
        // Predicated region
        $region29: #{video_header_forward.1} parent=11 // pred_check
          %p321 = pneg %p143
        $region30: #{video_header_forward.1} parent=11 // pred_check_branch
          %323 = sbr.rel (%p321) target = $region32
        $region31: #{video_header_forward.1} parent=11 // pred_region
          %s325 = ssub.s32 2048, 2048
          %326 = vsyncadd [#allocation11], %s325
          %s327 = sshll.u32 [#allocation12], 4
          %s328 = int_to_ptr.vmem [resolvable:$true] %s327
          %333 = dma.hbm_to_vmem [thread:$0]  %s4, 2048, %s328, [#allocation11], 64, 64, 4
        $region32: #{video_header_forward.1} parent=11 // pred_fallthru
          _
        // Predicated region
        $region33: #{video_header_forward.1} parent=11 // pred_check
          %p334 = pneg %p164
        $region34: #{video_header_forward.1} parent=11 // pred_check_branch
          %336 = sbr.rel (%p334) target = $region36
        $region35: #{video_header_forward.1} parent=11 // pred_region
          %s338 = ssub.s32 256, 256
          %339 = vsyncadd [#allocation14], %s338
          %s340 = sshll.u32 [#allocation13], 4
          %s341 = int_to_ptr.vmem [resolvable:$true] %s340
          %346 = dma.hbm_to_vmem [thread:$0]  %s5, 256, %s341, [#allocation14], 128, 128, 8
        $region36: #{video_header_forward.1} parent=11 // pred_fallthru
          _
        // Predicated region
        $region37: #{video_header_forward.1} parent=11 // pred_check
          %p347 = pneg %p185
        $region38: #{video_header_forward.1} parent=11 // pred_check_branch
          %349 = sbr.rel (%p347) target = $region40
        $region39: #{video_header_forward.1} parent=11 // pred_region
          %s351 = ssub.s32 8192, 8192
          %352 = vsyncadd [#allocation14], %s351
          %s353 = sshll.u32 [#allocation15], 4
          %s354 = int_to_ptr.vmem [resolvable:$true] %s353
          %359 = dma.hbm_to_vmem [thread:$0]  %s6, 8192, %s354, [#allocation14], 256, 256, 16
        $region40: #{video_header_forward.1} parent=11 // pred_fallthru
          _
        // Predicated region
        $region41: #{video_header_forward.1} parent=11 // pred_check
          %p360 = pneg %p206
        $region42: #{video_header_forward.1} parent=11 // pred_check_branch
          %362 = sbr.rel (%p360) target = $region44
        $region43: #{video_header_forward.1} parent=11 // pred_region
          %s364 = ssub.s32 128, 128
          %365 = vsyncadd [#allocation17], %s364
          %s366 = sshll.u32 [#allocation16], 4
          %s367 = int_to_ptr.vmem [resolvable:$true] %s366
          %372 = dma.hbm_to_vmem [thread:$0]  %s7, 128, %s367, [#allocation17], 64, 64, 4
        $region44: #{video_header_forward.1} parent=11 // pred_fallthru
          _
        // Predicated region
        $region45: #{video_header_forward.1} parent=11 // pred_check
          %p373 = pneg %p227
        $region46: #{video_header_forward.1} parent=11 // pred_check_branch
          %375 = sbr.rel (%p373) target = $region48
        $region47: #{video_header_forward.1} parent=11 // pred_region
          %s377 = ssub.s32 8192, 8192
          %378 = vsyncadd [#allocation17], %s377
          %s379 = sshll.u32 [#allocation18], 4
          %s380 = int_to_ptr.vmem [resolvable:$true] %s379
          %385 = dma.hbm_to_vmem [thread:$0]  %s8, 8192, %s380, [#allocation17], 64, 64, 4
        $region48: #{video_header_forward.1} parent=11 // pred_fallthru
          _
      $region12: #{video_header_forward.1} parent=5 // pred_fallthru
        _
      %p386 = scmp.lt.s32.totalorder %s21, 2
      // Predicated region
      $region49: #{video_header_forward.1} parent=5 // pred_check
        %p387 = pneg %p386
      $region50: #{video_header_forward.1} parent=5 // pred_check_branch
        %389 = sbr.rel (%p387) target = $region52
      $region51: #{video_header_forward.1} parent=5 // pred_region
        _
      $region52: #{video_header_forward.1} parent=5 // pred_fallthru
        _
      %p390 = scmp.le.s32.totalorder 1, %s21
      %p391 = scmp.lt.s32.totalorder %s21, 3
      %p392 = pnand %p390, %p391
      %p393 = pneg %p392
      // Predicated region
      $region53: #{video_header_forward.1} parent=5 // pred_check
        _
      $region54: #{video_header_forward.1} parent=5 // pred_check_branch
        %395 = sbr.rel (%p392) target = $region56
      $region55: #{video_header_forward.1} parent=5 // pred_region
        %s396 = ssub.s32 %s21, 1
        // Predicated region
        $region57: #{video_header_forward.1} parent=55 // pred_check
          %p397 = pneg %p59
        $region58: #{video_header_forward.1} parent=55 // pred_check_branch
          %399 = sbr.rel (%p397) target = $region60
        $region59: #{video_header_forward.1} parent=55 // pred_region
          %400 = dma.done [#allocation5], 1024
        $region60: #{video_header_forward.1} parent=55 // pred_fallthru
          _
        // Predicated region
        $region61: #{video_header_forward.1} parent=55 // pred_check
          %p401 = pneg %p80
        $region62: #{video_header_forward.1} parent=55 // pred_check_branch
          %403 = sbr.rel (%p401) target = $region64
        $region63: #{video_header_forward.1} parent=55 // pred_region
          %404 = dma.done [#allocation8], 128
        $region64: #{video_header_forward.1} parent=55 // pred_fallthru
          _
        // Predicated region
        $region65: #{video_header_forward.1} parent=55 // pred_check
          %p405 = pneg %p101
        $region66: #{video_header_forward.1} parent=55 // pred_check_branch
          %407 = sbr.rel (%p405) target = $region68
        $region67: #{video_header_forward.1} parent=55 // pred_region
          %408 = dma.done [#allocation8], 6144
        $region68: #{video_header_forward.1} parent=55 // pred_fallthru
          _
        // Predicated region
        $region69: #{video_header_forward.1} parent=55 // pred_check
          %p409 = pneg %p122
        $region70: #{video_header_forward.1} parent=55 // pred_check_branch
          %411 = sbr.rel (%p409) target = $region72
        $region71: #{video_header_forward.1} parent=55 // pred_region
          %412 = dma.done [#allocation11], 96
        $region72: #{video_header_forward.1} parent=55 // pred_fallthru
          _
        // Predicated region
        $region73: #{video_header_forward.1} parent=55 // pred_check
          %p413 = pneg %p143
        $region74: #{video_header_forward.1} parent=55 // pred_check_branch
          %415 = sbr.rel (%p413) target = $region76
        $region75: #{video_header_forward.1} parent=55 // pred_region
          %416 = dma.done [#allocation11], 2048
        $region76: #{video_header_forward.1} parent=55 // pred_fallthru
          _
        // Predicated region
        $region77: #{video_header_forward.1} parent=55 // pred_check
          %p417 = pneg %p164
        $region78: #{video_header_forward.1} parent=55 // pred_check_branch
          %419 = sbr.rel (%p417) target = $region80
        $region79: #{video_header_forward.1} parent=55 // pred_region
          %420 = dma.done [#allocation14], 256
        $region80: #{video_header_forward.1} parent=55 // pred_fallthru
          _
        // Predicated region
        $region81: #{video_header_forward.1} parent=55 // pred_check
          %p421 = pneg %p185
        $region82: #{video_header_forward.1} parent=55 // pred_check_branch
          %423 = sbr.rel (%p421) target = $region84
        $region83: #{video_header_forward.1} parent=55 // pred_region
          %424 = dma.done [#allocation14], 8192
        $region84: #{video_header_forward.1} parent=55 // pred_fallthru
          _
        // Predicated region
        $region85: #{video_header_forward.1} parent=55 // pred_check
          %p425 = pneg %p206
        $region86: #{video_header_forward.1} parent=55 // pred_check_branch
          %427 = sbr.rel (%p425) target = $region88
        $region87: #{video_header_forward.1} parent=55 // pred_region
          %428 = dma.done [#allocation17], 128
        $region88: #{video_header_forward.1} parent=55 // pred_fallthru
          _
        // Predicated region
        $region89: #{video_header_forward.1} parent=55 // pred_check
          %p429 = pneg %p227
        $region90: #{video_header_forward.1} parent=55 // pred_check_branch
          %431 = sbr.rel (%p429) target = $region92
        $region91: #{video_header_forward.1} parent=55 // pred_region
          %432 = dma.done [#allocation17], 8192
        $region92: #{video_header_forward.1} parent=55 // pred_fallthru
          _
        %p433 = pneg %p59
        %p434 = pneg %p56
        %p435 = pneg %p80
        %p436 = pneg %p77
        %p437 = pneg %p101
        %p438 = pneg %p98
        %p439 = pneg %p122
        %p440 = pneg %p119
        %p441 = pneg %p143
        %p442 = pneg %p140
        %p443 = pneg %p164
        %p444 = pneg %p161
        %p445 = pneg %p185
        %p446 = pneg %p182
        %p447 = pneg %p206
        %p448 = pneg %p203
        %p449 = pneg %p227
        %p450 = pneg %p224
        %p451 = pneg %p253
        %p452 = pneg %p250
        %s453 = smul.u32 8, %s30
        %p455 = scmp.eq.s32.totalorder %s31, 0
        // Predicated region
        $region93: #{video_header_forward.1} parent=55 // pred_check
          %p456 = pneg %p455
        $region94: #{video_header_forward.1} parent=55 // pred_check_branch
          %458 = sbr.rel (%p456) target = $region96
        $region95: #{video_header_forward.1} parent=55 // pred_region
          %v459 = vld [vmem:[#allocation4] sm:$0xff]
          %v460 = vld [vmem:[#allocation4 + $0x8] sm:$0xff]
          %v461 = vld [vmem:[#allocation4 + $0x10] sm:$0xff]
          %v462 = vld [vmem:[#allocation4 + $0x18] sm:$0xff]
          %v463 = vld [vmem:[#allocation4 + $0x20] sm:$0xff]
          %v464 = vld [vmem:[#allocation4 + $0x28] sm:$0xff]
          %v465 = vld [vmem:[#allocation4 + $0x30] sm:$0xff]
          %v466 = vld [vmem:[#allocation4 + $0x38] sm:$0xff]
          %v467 = vld [vmem:[#allocation7] sm:$0xff]
          %v468 = vadd.f32 %v459, %v467
          %v469 = vadd.f32 %v460, %v467
          %v470 = vadd.f32 %v461, %v467
          %v471 = vadd.f32 %v462, %v467
          %v472 = vadd.f32 %v463, %v467
          %v473 = vadd.f32 %v464, %v467
          %v474 = vadd.f32 %v465, %v467
          %v475 = vadd.f32 %v466, %v467
          %476 = vst [vmem:[#allocation2] sm:$0xff] %v468
          %477 = vst [vmem:[#allocation2 + $0x8] sm:$0xff] %v469
          %478 = vst [vmem:[#allocation2 + $0x10] sm:$0xff] %v470
          %479 = vst [vmem:[#allocation2 + $0x18] sm:$0xff] %v471
          %480 = vst [vmem:[#allocation2 + $0x20] sm:$0xff] %v472
          %481 = vst [vmem:[#allocation2 + $0x28] sm:$0xff] %v473
          %482 = vst [vmem:[#allocation2 + $0x30] sm:$0xff] %v474
          %483 = vst [vmem:[#allocation2 + $0x38] sm:$0xff] %v475
        $region96: #{video_header_forward.1} parent=55 // pred_fallthru
          _
        %v484 = vld [vmem:[#allocation2] sm:$0xff]
        %v485 = vld [vmem:[#allocation2 + $0x8] sm:$0xff]
        %v486 = vld [vmem:[#allocation2 + $0x10] sm:$0xff]
        %v487 = vld [vmem:[#allocation2 + $0x18] sm:$0xff]
        %v488 = vld [vmem:[#allocation2 + $0x20] sm:$0xff]
        %v489 = vld [vmem:[#allocation2 + $0x28] sm:$0xff]
        %v490 = vld [vmem:[#allocation2 + $0x30] sm:$0xff]
        %v491 = vld [vmem:[#allocation2 + $0x38] sm:$0xff]
        %s492 = smul.u32 %s31, 8
        %s493 = scalar_lea.vmem [#allocation13], %s492
        %v494 = vld [vmem:[%s493] sm:$0xff]
        %495 = vadd.xlane.f32.xlu0 %v484
        %v496 = vpop.xlane.xlu0 %495
        %497 = vadd.xlane.f32.xlu0 %v485
        %v498 = vpop.xlane.xlu0 %497
        %499 = vadd.xlane.f32.xlu0 %v486
        %v500 = vpop.xlane.xlu0 %499
        %501 = vadd.xlane.f32.xlu0 %v487
        %v502 = vpop.xlane.xlu0 %501
        %503 = vadd.xlane.f32.xlu0 %v488
        %v504 = vpop.xlane.xlu0 %503
        %505 = vadd.xlane.f32.xlu0 %v489
        %v506 = vpop.xlane.xlu0 %505
        %507 = vadd.xlane.f32.xlu0 %v490
        %v508 = vpop.xlane.xlu0 %507
        %509 = vadd.xlane.f32.xlu0 %v491
        %v510 = vpop.xlane.xlu0 %509
        %v511 = vrcp.pop 128.0
        %v512 = vmul.f32 %v496, %v511
        %v513 = vmul.f32 %v498, %v511
        %v514 = vmul.f32 %v500, %v511
        %v515 = vmul.f32 %v502, %v511
        %v516 = vmul.f32 %v504, %v511
        %v517 = vmul.f32 %v506, %v511
        %v518 = vmul.f32 %v508, %v511
        %v519 = vmul.f32 %v510, %v511
        %v520 = vsub.f32 %v484, %v512
        %v521 = vsub.f32 %v485, %v513
        %v522 = vsub.f32 %v486, %v514
        %v523 = vsub.f32 %v487, %v515
        %v524 = vsub.f32 %v488, %v516
        %v525 = vsub.f32 %v489, %v517
        %v526 = vsub.f32 %v490, %v518
        %v527 = vsub.f32 %v491, %v519
        %v528 = vmul.f32 %v520, %v520
        %v529 = vmul.f32 %v521, %v521
        %v530 = vmul.f32 %v522, %v522
        %v531 = vmul.f32 %v523, %v523
        %v532 = vmul.f32 %v524, %v524
        %v533 = vmul.f32 %v525, %v525
        %v534 = vmul.f32 %v526, %v526
        %v535 = vmul.f32 %v527, %v527
        %536 = vadd.xlane.f32.xlu0 %v528
        %v537 = vpop.xlane.xlu0 %536
        %538 = vadd.xlane.f32.xlu0 %v529
        %v539 = vpop.xlane.xlu0 %538
        %540 = vadd.xlane.f32.xlu0 %v530
        %v541 = vpop.xlane.xlu0 %540
        %542 = vadd.xlane.f32.xlu0 %v531
        %v543 = vpop.xlane.xlu0 %542
        %544 = vadd.xlane.f32.xlu0 %v532
        %v545 = vpop.xlane.xlu0 %544
        %546 = vadd.xlane.f32.xlu0 %v533
        %v547 = vpop.xlane.xlu0 %546
        %548 = vadd.xlane.f32.xlu0 %v534
        %v549 = vpop.xlane.xlu0 %548
        %550 = vadd.xlane.f32.xlu0 %v535
        %v551 = vpop.xlane.xlu0 %550
        %v552 = vmul.f32 %v537, %v511
        %v553 = vmul.f32 %v539, %v511
        %v554 = vmul.f32 %v541, %v511
        %v555 = vmul.f32 %v543, %v511
        %v556 = vmul.f32 %v545, %v511
        %v557 = vmul.f32 %v547, %v511
        %v558 = vmul.f32 %v549, %v511
        %v559 = vmul.f32 %v551, %v511
        %v560 = vadd.f32 %v552, 1e-12
        %v561 = vadd.f32 %v553, 1e-12
        %v562 = vadd.f32 %v554, 1e-12
        %v563 = vadd.f32 %v555, 1e-12
        %v564 = vadd.f32 %v556, 1e-12
        %v565 = vadd.f32 %v557, 1e-12
        %v566 = vadd.f32 %v558, 1e-12
        %v567 = vadd.f32 %v559, 1e-12
        %v568 = vrsqrt.pop %v560
        %v569 = vrsqrt.pop %v561
        %v570 = vrsqrt.pop %v562
        %v571 = vrsqrt.pop %v563
        %v572 = vrsqrt.pop %v564
        %v573 = vrsqrt.pop %v565
        %v574 = vrsqrt.pop %v566
        %v575 = vrsqrt.pop %v567
        %v576 = vmul.f32 %v520, %v568
        %v577 = vmul.f32 %v521, %v569
        %v578 = vmul.f32 %v522, %v570
        %v579 = vmul.f32 %v523, %v571
        %v580 = vmul.f32 %v524, %v572
        %v581 = vmul.f32 %v525, %v573
        %v582 = vmul.f32 %v526, %v574
        %v583 = vmul.f32 %v527, %v575
        %v584 = vlaneseq
        %v585 = vshrl.u32 %v584, 7
        %v586 = vsub.s32 0, %v585
        %v587 = vrot.slane %v494, %v586
        %v588 = vmul.f32 %v576, %v587
        %v589 = vmul.f32 %v577, %v587
        %v590 = vmul.f32 %v578, %v587
        %v591 = vmul.f32 %v579, %v587
        %v592 = vmul.f32 %v580, %v587
        %v593 = vmul.f32 %v581, %v587
        %v594 = vmul.f32 %v582, %v587
        %v595 = vmul.f32 %v583, %v587
        %v596 = vlaneseq
        %v597 = vshrl.u32 %v596, 7
        %v598 = vsub.s32 1, %v597
        %v599 = vrot.slane %v494, %v598
        %v600 = vadd.f32 %v588, %v599
        %v601 = vadd.f32 %v589, %v599
        %v602 = vadd.f32 %v590, %v599
        %v603 = vadd.f32 %v591, %v599
        %v604 = vadd.f32 %v592, %v599
        %v605 = vadd.f32 %v593, %v599
        %v606 = vadd.f32 %v594, %v599
        %v607 = vadd.f32 %v595, %v599
        %v608 = vpack.c.bf16 %v601, %v600
        %v609 = vpack.c.bf16 %v603, %v602
        %v610 = vpack.c.bf16 %v605, %v604
        %v611 = vpack.c.bf16 %v607, %v606
        %s612 = smul.u32 %s31, 48
        %s613 = smul.addr %s612, 4
        %s614 = scalar_lea.vmem [#allocation9], %s613
        %v615 = vld [vmem:[%s614] sm:$0xff]
        %v616 = vld [vmem:[%s614 + $0x8] sm:$0xf]
        %v617 = vld [vmem:[%s614 + $0xc] sm:$0xff]
        %v618 = vld [vmem:[%s614 + $0x14] sm:$0xf]
        %v619 = vld [vmem:[%s614 + $0x18] sm:$0xff]
        %v620 = vld [vmem:[%s614 + $0x20] sm:$0xf]
        %v621 = vld [vmem:[%s614 + $0x24] sm:$0xff]
        %v622 = vld [vmem:[%s614 + $0x2c] sm:$0xf]
        %v623 = vld [vmem:[%s614 + $0x30] sm:$0xff]
        %v624 = vld [vmem:[%s614 + $0x38] sm:$0xf]
        %v625 = vld [vmem:[%s614 + $0x3c] sm:$0xff]
        %v626 = vld [vmem:[%s614 + $0x44] sm:$0xf]
        %v627 = vld [vmem:[%s614 + $0x48] sm:$0xff]
        %v628 = vld [vmem:[%s614 + $0x50] sm:$0xf]
        %v629 = vld [vmem:[%s614 + $0x54] sm:$0xff]
        %v630 = vld [vmem:[%s614 + $0x5c] sm:$0xf]
        %v631 = vld [vmem:[%s614 + $0x60] sm:$0xff]
        %v632 = vld [vmem:[%s614 + $0x68] sm:$0xf]
        %v633 = vld [vmem:[%s614 + $0x6c] sm:$0xff]
        %v634 = vld [vmem:[%s614 + $0x74] sm:$0xf]
        %v635 = vld [vmem:[%s614 + $0x78] sm:$0xff]
        %v636 = vld [vmem:[%s614 + $0x80] sm:$0xf]
        %v637 = vld [vmem:[%s614 + $0x84] sm:$0xff]
        %v638 = vld [vmem:[%s614 + $0x8c] sm:$0xf]
        %v639 = vld [vmem:[%s614 + $0x90] sm:$0xff]
        %v640 = vld [vmem:[%s614 + $0x98] sm:$0xf]
        %v641 = vld [vmem:[%s614 + $0x9c] sm:$0xff]
        %v642 = vld [vmem:[%s614 + $0xa4] sm:$0xf]
        %v643 = vld [vmem:[%s614 + $0xa8] sm:$0xff]
        %v644 = vld [vmem:[%s614 + $0xb0] sm:$0xf]
        %v645 = vld [vmem:[%s614 + $0xb4] sm:$0xff]
        %v646 = vld [vmem:[%s614 + $0xbc] sm:$0xf]
        %s647 = smul.u32 %s31, 3
        %s648 = scalar_lea.vmem [#allocation10], %s647
        %v649 = vld [vmem:[%s648] sm:$0x7]
        %v651 = vlaneseq
        %v652 = vshrl.u32 %v651, 7
        %v653 = vsub.s32 0, %v652
        %v654 = vrot.slane %v649, %v653
        %v655 = vlaneseq
        %v656 = vshrl.u32 %v655, 7
        %v657 = vsub.s32 1, %v656
        %v658 = vrot.slane %v649, %v657
        %v659 = vlaneseq
        %v660 = vshrl.u32 %v659, 7
        %v661 = vsub.s32 2, %v660
        %v662 = vrot.slane %v649, %v661
        %v698 = vunpack.c.l.b16 %v615
        %v699 = vunpack.c.h.b16 %v615
        %v700 = vunpack.c.l.b16 %v616
        %v701 = vunpack.c.l.b16 %v617
        %v702 = vunpack.c.h.b16 %v617
        %v703 = vunpack.c.l.b16 %v618
        %v704 = vunpack.c.l.b16 %v619
        %v705 = vunpack.c.h.b16 %v619
        %v706 = vunpack.c.l.b16 %v620
        %v707 = vunpack.c.l.b16 %v621
        %v708 = vunpack.c.h.b16 %v621
        %v709 = vunpack.c.l.b16 %v622
        %v710 = vunpack.c.l.b16 %v623
        %v711 = vunpack.c.h.b16 %v623
        %v712 = vunpack.c.l.b16 %v624
        %v713 = vunpack.c.l.b16 %v625
        %v714 = vunpack.c.h.b16 %v625
        %v715 = vunpack.c.l.b16 %v626
        %v716 = vunpack.c.l.b16 %v627
        %v717 = vunpack.c.h.b16 %v627
        %v718 = vunpack.c.l.b16 %v628
        %v719 = vunpack.c.l.b16 %v629
        %v720 = vunpack.c.h.b16 %v629
        %v721 = vunpack.c.l.b16 %v630
        %v722 = vunpack.c.l.b16 %v631
        %v723 = vunpack.c.h.b16 %v631
        %v724 = vunpack.c.l.b16 %v632
        %v725 = vunpack.c.l.b16 %v633
        %v726 = vunpack.c.h.b16 %v633
        %v727 = vunpack.c.l.b16 %v634
        %v728 = vunpack.c.l.b16 %v635
        %v729 = vunpack.c.h.b16 %v635
        %v730 = vunpack.c.l.b16 %v636
        %v731 = vunpack.c.l.b16 %v637
        %v732 = vunpack.c.h.b16 %v637
        %v733 = vunpack.c.l.b16 %v638
        %v734 = vunpack.c.l.b16 %v639
        %v735 = vunpack.c.h.b16 %v639
        %v736 = vunpack.c.l.b16 %v640
        %v737 = vunpack.c.l.b16 %v641
        %v738 = vunpack.c.h.b16 %v641
        %v739 = vunpack.c.l.b16 %v642
        %v740 = vunpack.c.l.b16 %v643
        %v741 = vunpack.c.h.b16 %v643
        %v742 = vunpack.c.l.b16 %v644
        %v743 = vunpack.c.l.b16 %v645
        %v744 = vunpack.c.h.b16 %v645
        %v745 = vunpack.c.l.b16 %v646
        %v746 = vpack.c.b16 %v701, %v698
        %v747 = vpack.c.b16 %v702, %v699
        %v748 = vpack.c.b16 %v703, %v700
        %v749 = vpack.c.b16 %v707, %v704
        %v750 = vpack.c.b16 %v708, %v705
        %v751 = vpack.c.b16 %v709, %v706
        %v752 = vpack.c.b16 %v713, %v710
        %v753 = vpack.c.b16 %v714, %v711
        %v754 = vpack.c.b16 %v715, %v712
        %v755 = vpack.c.b16 %v719, %v716
        %v756 = vpack.c.b16 %v720, %v717
        %v757 = vpack.c.b16 %v721, %v718
        %v758 = vpack.c.b16 %v725, %v722
        %v759 = vpack.c.b16 %v726, %v723
        %v760 = vpack.c.b16 %v727, %v724
        %v761 = vpack.c.b16 %v731, %v728
        %v762 = vpack.c.b16 %v732, %v729
        %v763 = vpack.c.b16 %v733, %v730
        %v764 = vpack.c.b16 %v737, %v734
        %v765 = vpack.c.b16 %v738, %v735
        %v766 = vpack.c.b16 %v739, %v736
        %v767 = vpack.c.b16 %v743, %v740
        %v768 = vpack.c.b16 %v744, %v741
        %v769 = vpack.c.b16 %v745, %v742
        %794 = vmatprep.subr.bf16.mxu0 %v747
        %795 = vmatpush1.bf16.msra.mxu0 %v746
        %796 = vmatprep.subr.bf16.mxu0 %v750
        %797 = vmatpush1.bf16.msra.mxu0 %v749
        %798 = vmatprep.subr.bf16.mxu0 %v753
        %799 = vmatpush1.bf16.msra.mxu0 %v752
        %800 = vmatprep.subr.bf16.mxu0 %v756
        %801 = vmatpush1.bf16.msra.mxu0 %v755
        %802 = vmatprep.subr.bf16.mxu0 %v759
        %803 = vmatpush1.bf16.msra.mxu0 %v758
        %804 = vmatprep.subr.bf16.mxu0 %v762
        %805 = vmatpush1.bf16.msra.mxu0 %v761
        %806 = vmatprep.subr.bf16.mxu0 %v765
        %807 = vmatpush1.bf16.msra.mxu0 %v764
        %808 = vmatprep.subr.bf16.mxu0 %v768
        %809 = vmatpush1.bf16.msra.mxu0 %v767
        %810 = vmatprep.subr.bf16.mxu0 0
        %811 = vmatpush1.bf16.msra.mxu0 0
        %812 = vmatprep.subr.bf16.mxu0 0
        %813 = vmatpush1.bf16.msra.mxu0 0
        %814 = vmatprep.subr.bf16.mxu0 0
        %815 = vmatpush1.bf16.msra.mxu0 0
        %816 = vmatprep.subr.bf16.mxu0 0
        %817 = vmatpush1.bf16.msra.mxu0 0
        %818 = vmatprep.subr.bf16.mxu0 0
        %819 = vmatpush1.bf16.msra.mxu0 0
        %820 = vmatprep.subr.bf16.mxu0 0
        %821 = vmatpush1.bf16.msra.mxu0 0
        %822 = vmatprep.subr.bf16.mxu0 0
        %823 = vmatpush1.bf16.msra.mxu0 0
        %824 = vmatprep.subr.bf16.mxu0 0
        %825 = vmatpush1.bf16.msra.mxu0 0
        %826 = vmatprep.mubr.bf16.mxu0 0
        %827 = vmatmul.mubr.bf16.gmra.mrb[0].mxu0 %v608
        %v828 = vpop.f32.mrb[0].mxu0
        %v829 = vadd.f32 %v654, %v828
        %v830 = vpop.f32.mrb[0].mxu0
        %v831 = vadd.f32 %v658, %v830
        %v832 = vpop.f32.mrb[0].mxu0
        %v833 = vadd.f32 %v654, %v832
        %v834 = vpop.f32.mrb[0].mxu0
        %v835 = vadd.f32 %v658, %v834
        %836 = vmatprep.mubr.bf16.mxu0 0
        %837 = vmatmul.mubr.bf16.gmra.mrb[0].mxu0 %v609
        %v838 = vpop.f32.mrb[0].mxu0
        %v839 = vadd.f32 %v654, %v838
        %v840 = vpop.f32.mrb[0].mxu0
        %v841 = vadd.f32 %v658, %v840
        %v842 = vpop.f32.mrb[0].mxu0
        %v843 = vadd.f32 %v654, %v842
        %v844 = vpop.f32.mrb[0].mxu0
        %v845 = vadd.f32 %v658, %v844
        %846 = vmatprep.mubr.bf16.mxu0 0
        %847 = vmatmul.mubr.bf16.gmra.mrb[0].mxu0 %v610
        %v848 = vpop.f32.mrb[0].mxu0
        %v849 = vadd.f32 %v654, %v848
        %v850 = vpop.f32.mrb[0].mxu0
        %v851 = vadd.f32 %v658, %v850
        %v852 = vpop.f32.mrb[0].mxu0
        %v853 = vadd.f32 %v654, %v852
        %v854 = vpop.f32.mrb[0].mxu0
        %v855 = vadd.f32 %v658, %v854
        %856 = vmatprep.mubr.bf16.mxu0 0
        %857 = vmatmul.mubr.bf16.gmra.mrb[0].mxu0 %v611
        %v858 = vpop.f32.mrb[0].mxu0
        %v859 = vadd.f32 %v654, %v858
        %v860 = vpop.f32.mrb[0].mxu0
        %v861 = vadd.f32 %v658, %v860
        %v862 = vpop.f32.mrb[0].mxu0
        %v863 = vadd.f32 %v654, %v862
        %v864 = vpop.f32.mrb[0].mxu0
        %v865 = vadd.f32 %v658, %v864
        %866 = vdwg.mxu0
        %867 = vmatprep.subr.bf16.mxu0 0
        %868 = vmatpush1.bf16.msra.mxu0 %v748
        %869 = vmatprep.subr.bf16.mxu0 0
        %870 = vmatpush1.bf16.msra.mxu0 %v751
        %871 = vmatprep.subr.bf16.mxu0 0
        %872 = vmatpush1.bf16.msra.mxu0 %v754
        %873 = vmatprep.subr.bf16.mxu0 0
        %874 = vmatpush1.bf16.msra.mxu0 %v757
        %875 = vmatprep.subr.bf16.mxu0 0
        %876 = vmatpush1.bf16.msra.mxu0 %v760
        %877 = vmatprep.subr.bf16.mxu0 0
        %878 = vmatpush1.bf16.msra.mxu0 %v763
        %879 = vmatprep.subr.bf16.mxu0 0
        %880 = vmatpush1.bf16.msra.mxu0 %v766
        %881 = vmatprep.subr.bf16.mxu0 0
        %882 = vmatpush1.bf16.msra.mxu0 %v769
        %883 = vmatprep.subr.bf16.mxu0 0
        %884 = vmatpush1.bf16.msra.mxu0 0
        %885 = vmatprep.subr.bf16.mxu0 0
        %886 = vmatpush1.bf16.msra.mxu0 0
        %887 = vmatprep.subr.bf16.mxu0 0
        %888 = vmatpush1.bf16.msra.mxu0 0
        %889 = vmatprep.subr.bf16.mxu0 0
        %890 = vmatpush1.bf16.msra.mxu0 0
        %891 = vmatprep.subr.bf16.mxu0 0
        %892 = vmatpush1.bf16.msra.mxu0 0
        %893 = vmatprep.subr.bf16.mxu0 0
        %894 = vmatpush1.bf16.msra.mxu0 0
        %895 = vmatprep.subr.bf16.mxu0 0
        %896 = vmatpush1.bf16.msra.mxu0 0
        %897 = vmatprep.subr.bf16.mxu0 0
        %898 = vmatpush1.bf16.msra.mxu0 0
        %899 = vmatprep.mubr.bf16.mxu0 0
        %900 = vmatmul.mubr.bf16.gmra.mrb[0].mxu0 %v608
        %v901 = vpop.f32.mrb[0].mxu0
        %v902 = vadd.f32 %v662, %v901
        %v903 = vpop.f32.mrb[0].mxu0
        %v904 = vpop.f32.mrb[0].mxu0
        %v905 = vadd.f32 %v662, %v904
        %v906 = vpop.f32.mrb[0].mxu0
        %907 = vmatprep.mubr.bf16.mxu0 0
        %908 = vmatmul.mubr.bf16.gmra.mrb[0].mxu0 %v609
        %v909 = vpop.f32.mrb[0].mxu0
        %v910 = vadd.f32 %v662, %v909
        %v911 = vpop.f32.mrb[0].mxu0
        %v912 = vpop.f32.mrb[0].mxu0
        %v913 = vadd.f32 %v662, %v912
        %v914 = vpop.f32.mrb[0].mxu0
        %915 = vmatprep.mubr.bf16.mxu0 0
        %916 = vmatmul.mubr.bf16.gmra.mrb[0].mxu0 %v610
        %v917 = vpop.f32.mrb[0].mxu0
        %v918 = vadd.f32 %v662, %v917
        %v919 = vpop.f32.mrb[0].mxu0
        %v920 = vpop.f32.mrb[0].mxu0
        %v921 = vadd.f32 %v662, %v920
        %v922 = vpop.f32.mrb[0].mxu0
        %923 = vmatprep.mubr.bf16.mxu0 0
        %924 = vmatmul.mubr.bf16.gmra.mrb[0].mxu0 %v611
        %v925 = vpop.f32.mrb[0].mxu0
        %v926 = vadd.f32 %v662, %v925
        %v927 = vpop.f32.mrb[0].mxu0
        %v928 = vpop.f32.mrb[0].mxu0
        %v929 = vadd.f32 %v662, %v928
        %v930 = vpop.f32.mrb[0].mxu0
        %931 = vdwg.mxu0
        %vm932 = vcmask 523264
        %v934 = vsel %vm932, %v829, 0
        %v937 = vsel %vm932, %v831, 0
        %939 = vmatprep.subr.mxu0 0.0
        %940 = vmatpush1.xpose.msra.mxu0 %v937
        %941 = vmatprep.subr.mxu0 0.0
        %942 = vmatpush1.xpose.msra.mxu0 0.0
        %943 = vmatprep.subr.mxu0 0.0
        %944 = vmatpush1.xpose.msra.mxu0 0.0
        %945 = vmatprep.subr.mxu0 0.0
        %946 = vmatpush1.xpose.msra.mxu0 0.0
        %947 = vmatprep.subr.mxu0 0.0
        %948 = vmatpush1.xpose.msra.mxu0 0.0
        %949 = vmatprep.subr.mxu0 0.0
        %950 = vmatpush1.xpose.msra.mxu0 0.0
        %951 = vmatprep.subr.mxu0 0.0
        %952 = vmatpush1.xpose.msra.mxu0 0.0
        %953 = vmatprep.subr.mxu0 0.0
        %954 = vmatpush1.xpose.msra.mxu0 0.0
        %955 = vmatprep.subr.mxu0 0.0
        %956 = vmatpush1.xpose.msra.mxu0 0.0
        %957 = vmatprep.subr.mxu0 0.0
        %958 = vmatpush1.xpose.msra.mxu0 0.0
        %959 = vmatprep.subr.mxu0 0.0
        %960 = vmatpush1.xpose.msra.mxu0 0.0
        %961 = vmatprep.subr.mxu0 0.0
        %962 = vmatpush1.xpose.msra.mxu0 0.0
        %963 = vmatprep.subr.mxu0 0.0
        %964 = vmatpush1.xpose.msra.mxu0 0.0
        %965 = vmatprep.subr.mxu0 0.0
        %966 = vmatpush1.xpose.msra.mxu0 0.0
        %967 = vmatprep.subr.mxu0 0.0
        %968 = vmatpush1.xpose.msra.mxu0 0.0
        %969 = vmatprep.subr.mxu0 0.0
        %970 = vmatpush1.xpose.msra.mxu0 0.0
        %971 = vmatprep.subr.mxu0 0.0
        %972 = vmatpush1.xpose.msra.mxu0 0.0
        %973 = vmatprep.subr.mxu0 0.0
        %974 = vmatpush1.xpose.msra.mxu0 0.0
        %975 = vmatprep.subr.mxu0 0.0
        %976 = vmatpush1.xpose.msra.mxu0 0.0
        %977 = vmatprep.subr.mxu0 0.0
        %978 = vmatpush1.xpose.msra.mxu0 0.0
        %979 = vmatprep.subr.mxu0 0.0
        %980 = vmatpush1.xpose.msra.mxu0 0.0
        %981 = vmatprep.subr.mxu0 0.0
        %982 = vmatpush1.xpose.msra.mxu0 0.0
        %983 = vmatprep.subr.mxu0 0.0
        %984 = vmatpush1.xpose.msra.mxu0 0.0
        %985 = vmatprep.subr.mxu0 0.0
        %986 = vmatpush1.xpose.msra.mxu0 0.0
        %987 = vmatprep.subr.mxu0 0.0
        %988 = vmatpush1.xpose.msra.mxu0 0.0
        %989 = vmatprep.subr.mxu0 0.0
        %990 = vmatpush1.xpose.msra.mxu0 0.0
        %991 = vmatprep.subr.mxu0 0.0
        %992 = vmatpush1.xpose.msra.mxu0 0.0
        %993 = vmatprep.subr.mxu0 0.0
        %994 = vmatpush1.xpose.msra.mxu0 0.0
        %995 = vmatprep.subr.mxu0 0.0
        %996 = vmatpush1.xpose.msra.mxu0 0.0
        %997 = vmatprep.subr.mxu0 0.0
        %998 = vmatpush1.xpose.msra.mxu0 0.0
        %999 = vmatprep.subr.mxu0 0.0
        %1000 = vmatpush1.xpose.msra.mxu0 0.0
        %1001 = vmatprep.subr.mxu0 0.0
        %1002 = vmatpush1.xpose.msra.mxu0 0.0
        %1003 = vmatprep.mubr.f32.mxu0 0.0
        %1004 = vmatmul.mubr.f32.gmra.mrb[0].mxu0 %v934
        %v1005 = vpop.f32.mrb[0].mxu0
        %v1006 = vadd.f32 0.0, %v1005
        %v1007 = vpop.f32.mrb[0].mxu0
        %1008 = vdwg.mxu0
        %v1010 = vsel %vm932, %v833, 0
        %v1013 = vsel %vm932, %v835, 0
        %1015 = vmatprep.subr.mxu0 0.0
        %1016 = vmatpush1.xpose.msra.mxu0 %v1013
        %1017 = vmatprep.subr.mxu0 0.0
        %1018 = vmatpush1.xpose.msra.mxu0 0.0
        %1019 = vmatprep.subr.mxu0 0.0
        %1020 = vmatpush1.xpose.msra.mxu0 0.0
        %1021 = vmatprep.subr.mxu0 0.0
        %1022 = vmatpush1.xpose.msra.mxu0 0.0
        %1023 = vmatprep.subr.mxu0 0.0
        %1024 = vmatpush1.xpose.msra.mxu0 0.0
        %1025 = vmatprep.subr.mxu0 0.0
        %1026 = vmatpush1.xpose.msra.mxu0 0.0
        %1027 = vmatprep.subr.mxu0 0.0
        %1028 = vmatpush1.xpose.msra.mxu0 0.0
        %1029 = vmatprep.subr.mxu0 0.0
        %1030 = vmatpush1.xpose.msra.mxu0 0.0
        %1031 = vmatprep.subr.mxu0 0.0
        %1032 = vmatpush1.xpose.msra.mxu0 0.0
        %1033 = vmatprep.subr.mxu0 0.0
        %1034 = vmatpush1.xpose.msra.mxu0 0.0
        %1035 = vmatprep.subr.mxu0 0.0
        %1036 = vmatpush1.xpose.msra.mxu0 0.0
        %1037 = vmatprep.subr.mxu0 0.0
        %1038 = vmatpush1.xpose.msra.mxu0 0.0
        %1039 = vmatprep.subr.mxu0 0.0
        %1040 = vmatpush1.xpose.msra.mxu0 0.0
        %1041 = vmatprep.subr.mxu0 0.0
        %1042 = vmatpush1.xpose.msra.mxu0 0.0
        %1043 = vmatprep.subr.mxu0 0.0
        %1044 = vmatpush1.xpose.msra.mxu0 0.0
        %1045 = vmatprep.subr.mxu0 0.0
        %1046 = vmatpush1.xpose.msra.mxu0 0.0
        %1047 = vmatprep.subr.mxu0 0.0
        %1048 = vmatpush1.xpose.msra.mxu0 0.0
        %1049 = vmatprep.subr.mxu0 0.0
        %1050 = vmatpush1.xpose.msra.mxu0 0.0
        %1051 = vmatprep.subr.mxu0 0.0
        %1052 = vmatpush1.xpose.msra.mxu0 0.0
        %1053 = vmatprep.subr.mxu0 0.0
        %1054 = vmatpush1.xpose.msra.mxu0 0.0
        %1055 = vmatprep.subr.mxu0 0.0
        %1056 = vmatpush1.xpose.msra.mxu0 0.0
        %1057 = vmatprep.subr.mxu0 0.0
        %1058 = vmatpush1.xpose.msra.mxu0 0.0
        %1059 = vmatprep.subr.mxu0 0.0
        %1060 = vmatpush1.xpose.msra.mxu0 0.0
        %1061 = vmatprep.subr.mxu0 0.0
        %1062 = vmatpush1.xpose.msra.mxu0 0.0
        %1063 = vmatprep.subr.mxu0 0.0
        %1064 = vmatpush1.xpose.msra.mxu0 0.0
        %1065 = vmatprep.subr.mxu0 0.0
        %1066 = vmatpush1.xpose.msra.mxu0 0.0
        %1067 = vmatprep.subr.mxu0 0.0
        %1068 = vmatpush1.xpose.msra.mxu0 0.0
        %1069 = vmatprep.subr.mxu0 0.0
        %1070 = vmatpush1.xpose.msra.mxu0 0.0
        %1071 = vmatprep.subr.mxu0 0.0
        %1072 = vmatpush1.xpose.msra.mxu0 0.0
        %1073 = vmatprep.subr.mxu0 0.0
        %1074 = vmatpush1.xpose.msra.mxu0 0.0
        %1075 = vmatprep.subr.mxu0 0.0
        %1076 = vmatpush1.xpose.msra.mxu0 0.0
        %1077 = vmatprep.subr.mxu0 0.0
        %1078 = vmatpush1.xpose.msra.mxu0 0.0
        %1079 = vmatprep.mubr.f32.mxu0 0.0
        %1080 = vmatmul.mubr.f32.gmra.mrb[0].mxu0 %v1010
        %v1081 = vpop.f32.mrb[0].mxu0
        %v1082 = vadd.f32 0.0, %v1081
        %v1083 = vpop.f32.mrb[0].mxu0
        %1084 = vdwg.mxu0
        %v1086 = vsel %vm932, %v839, 0
        %v1089 = vsel %vm932, %v841, 0
        %1091 = vmatprep.subr.mxu0 0.0
        %1092 = vmatpush1.xpose.msra.mxu0 %v1089
        %1093 = vmatprep.subr.mxu0 0.0
        %1094 = vmatpush1.xpose.msra.mxu0 0.0
        %1095 = vmatprep.subr.mxu0 0.0
        %1096 = vmatpush1.xpose.msra.mxu0 0.0
        %1097 = vmatprep.subr.mxu0 0.0
        %1098 = vmatpush1.xpose.msra.mxu0 0.0
        %1099 = vmatprep.subr.mxu0 0.0
        %1100 = vmatpush1.xpose.msra.mxu0 0.0
        %1101 = vmatprep.subr.mxu0 0.0
        %1102 = vmatpush1.xpose.msra.mxu0 0.0
        %1103 = vmatprep.subr.mxu0 0.0
        %1104 = vmatpush1.xpose.msra.mxu0 0.0
        %1105 = vmatprep.subr.mxu0 0.0
        %1106 = vmatpush1.xpose.msra.mxu0 0.0
        %1107 = vmatprep.subr.mxu0 0.0
        %1108 = vmatpush1.xpose.msra.mxu0 0.0
        %1109 = vmatprep.subr.mxu0 0.0
        %1110 = vmatpush1.xpose.msra.mxu0 0.0
        %1111 = vmatprep.subr.mxu0 0.0
        %1112 = vmatpush1.xpose.msra.mxu0 0.0
        %1113 = vmatprep.subr.mxu0 0.0
        %1114 = vmatpush1.xpose.msra.mxu0 0.0
        %1115 = vmatprep.subr.mxu0 0.0
        %1116 = vmatpush1.xpose.msra.mxu0 0.0
        %1117 = vmatprep.subr.mxu0 0.0
        %1118 = vmatpush1.xpose.msra.mxu0 0.0
        %1119 = vmatprep.subr.mxu0 0.0
        %1120 = vmatpush1.xpose.msra.mxu0 0.0
        %1121 = vmatprep.subr.mxu0 0.0
        %1122 = vmatpush1.xpose.msra.mxu0 0.0
        %1123 = vmatprep.subr.mxu0 0.0
        %1124 = vmatpush1.xpose.msra.mxu0 0.0
        %1125 = vmatprep.subr.mxu0 0.0
        %1126 = vmatpush1.xpose.msra.mxu0 0.0
        %1127 = vmatprep.subr.mxu0 0.0
        %1128 = vmatpush1.xpose.msra.mxu0 0.0
        %1129 = vmatprep.subr.mxu0 0.0
        %1130 = vmatpush1.xpose.msra.mxu0 0.0
        %1131 = vmatprep.subr.mxu0 0.0
        %1132 = vmatpush1.xpose.msra.mxu0 0.0
        %1133 = vmatprep.subr.mxu0 0.0
        %1134 = vmatpush1.xpose.msra.mxu0 0.0
        %1135 = vmatprep.subr.mxu0 0.0
        %1136 = vmatpush1.xpose.msra.mxu0 0.0
        %1137 = vmatprep.subr.mxu0 0.0
        %1138 = vmatpush1.xpose.msra.mxu0 0.0
        %1139 = vmatprep.subr.mxu0 0.0
        %1140 = vmatpush1.xpose.msra.mxu0 0.0
        %1141 = vmatprep.subr.mxu0 0.0
        %1142 = vmatpush1.xpose.msra.mxu0 0.0
        %1143 = vmatprep.subr.mxu0 0.0
        %1144 = vmatpush1.xpose.msra.mxu0 0.0
        %1145 = vmatprep.subr.mxu0 0.0
        %1146 = vmatpush1.xpose.msra.mxu0 0.0
        %1147 = vmatprep.subr.mxu0 0.0
        %1148 = vmatpush1.xpose.msra.mxu0 0.0
        %1149 = vmatprep.subr.mxu0 0.0
        %1150 = vmatpush1.xpose.msra.mxu0 0.0
        %1151 = vmatprep.subr.mxu0 0.0
        %1152 = vmatpush1.xpose.msra.mxu0 0.0
        %1153 = vmatprep.subr.mxu0 0.0
        %1154 = vmatpush1.xpose.msra.mxu0 0.0
        %1155 = vmatprep.mubr.f32.mxu0 0.0
        %1156 = vmatmul.mubr.f32.gmra.mrb[0].mxu0 %v1086
        %v1157 = vpop.f32.mrb[0].mxu0
        %v1158 = vadd.f32 0.0, %v1157
        %v1159 = vpop.f32.mrb[0].mxu0
        %1160 = vdwg.mxu0
        %v1162 = vsel %vm932, %v843, 0
        %v1165 = vsel %vm932, %v845, 0
        %1167 = vmatprep.subr.mxu0 0.0
        %1168 = vmatpush1.xpose.msra.mxu0 %v1165
        %1169 = vmatprep.subr.mxu0 0.0
        %1170 = vmatpush1.xpose.msra.mxu0 0.0
        %1171 = vmatprep.subr.mxu0 0.0
        %1172 = vmatpush1.xpose.msra.mxu0 0.0
        %1173 = vmatprep.subr.mxu0 0.0
        %1174 = vmatpush1.xpose.msra.mxu0 0.0
        %1175 = vmatprep.subr.mxu0 0.0
        %1176 = vmatpush1.xpose.msra.mxu0 0.0
        %1177 = vmatprep.subr.mxu0 0.0
        %1178 = vmatpush1.xpose.msra.mxu0 0.0
        %1179 = vmatprep.subr.mxu0 0.0
        %1180 = vmatpush1.xpose.msra.mxu0 0.0
        %1181 = vmatprep.subr.mxu0 0.0
        %1182 = vmatpush1.xpose.msra.mxu0 0.0
        %1183 = vmatprep.subr.mxu0 0.0
        %1184 = vmatpush1.xpose.msra.mxu0 0.0
        %1185 = vmatprep.subr.mxu0 0.0
        %1186 = vmatpush1.xpose.msra.mxu0 0.0
        %1187 = vmatprep.subr.mxu0 0.0
        %1188 = vmatpush1.xpose.msra.mxu0 0.0
        %1189 = vmatprep.subr.mxu0 0.0
        %1190 = vmatpush1.xpose.msra.mxu0 0.0
        %1191 = vmatprep.subr.mxu0 0.0
        %1192 = vmatpush1.xpose.msra.mxu0 0.0
        %1193 = vmatprep.subr.mxu0 0.0
        %1194 = vmatpush1.xpose.msra.mxu0 0.0
        %1195 = vmatprep.subr.mxu0 0.0
        %1196 = vmatpush1.xpose.msra.mxu0 0.0
        %1197 = vmatprep.subr.mxu0 0.0
        %1198 = vmatpush1.xpose.msra.mxu0 0.0
        %1199 = vmatprep.subr.mxu0 0.0
        %1200 = vmatpush1.xpose.msra.mxu0 0.0
        %1201 = vmatprep.subr.mxu0 0.0
        %1202 = vmatpush1.xpose.msra.mxu0 0.0
        %1203 = vmatprep.subr.mxu0 0.0
        %1204 = vmatpush1.xpose.msra.mxu0 0.0
        %1205 = vmatprep.subr.mxu0 0.0
        %1206 = vmatpush1.xpose.msra.mxu0 0.0
        %1207 = vmatprep.subr.mxu0 0.0
        %1208 = vmatpush1.xpose.msra.mxu0 0.0
        %1209 = vmatprep.subr.mxu0 0.0
        %1210 = vmatpush1.xpose.msra.mxu0 0.0
        %1211 = vmatprep.subr.mxu0 0.0
        %1212 = vmatpush1.xpose.msra.mxu0 0.0
        %1213 = vmatprep.subr.mxu0 0.0
        %1214 = vmatpush1.xpose.msra.mxu0 0.0
        %1215 = vmatprep.subr.mxu0 0.0
        %1216 = vmatpush1.xpose.msra.mxu0 0.0
        %1217 = vmatprep.subr.mxu0 0.0
        %1218 = vmatpush1.xpose.msra.mxu0 0.0
        %1219 = vmatprep.subr.mxu0 0.0
        %1220 = vmatpush1.xpose.msra.mxu0 0.0
        %1221 = vmatprep.subr.mxu0 0.0
        %1222 = vmatpush1.xpose.msra.mxu0 0.0
        %1223 = vmatprep.subr.mxu0 0.0
        %1224 = vmatpush1.xpose.msra.mxu0 0.0
        %1225 = vmatprep.subr.mxu0 0.0
        %1226 = vmatpush1.xpose.msra.mxu0 0.0
        %1227 = vmatprep.subr.mxu0 0.0
        %1228 = vmatpush1.xpose.msra.mxu0 0.0
        %1229 = vmatprep.subr.mxu0 0.0
        %1230 = vmatpush1.xpose.msra.mxu0 0.0
        %1231 = vmatprep.mubr.f32.mxu0 0.0
        %1232 = vmatmul.mubr.f32.gmra.mrb[0].mxu0 %v1162
        %v1233 = vpop.f32.mrb[0].mxu0
        %v1234 = vadd.f32 0.0, %v1233
        %v1235 = vpop.f32.mrb[0].mxu0
        %1236 = vdwg.mxu0
        %v1238 = vsel %vm932, %v849, 0
        %v1241 = vsel %vm932, %v851, 0
        %1243 = vmatprep.subr.mxu0 0.0
        %1244 = vmatpush1.xpose.msra.mxu0 %v1241
        %1245 = vmatprep.subr.mxu0 0.0
        %1246 = vmatpush1.xpose.msra.mxu0 0.0
        %1247 = vmatprep.subr.mxu0 0.0
        %1248 = vmatpush1.xpose.msra.mxu0 0.0
        %1249 = vmatprep.subr.mxu0 0.0
        %1250 = vmatpush1.xpose.msra.mxu0 0.0
        %1251 = vmatprep.subr.mxu0 0.0
        %1252 = vmatpush1.xpose.msra.mxu0 0.0
        %1253 = vmatprep.subr.mxu0 0.0
        %1254 = vmatpush1.xpose.msra.mxu0 0.0
        %1255 = vmatprep.subr.mxu0 0.0
        %1256 = vmatpush1.xpose.msra.mxu0 0.0
        %1257 = vmatprep.subr.mxu0 0.0
        %1258 = vmatpush1.xpose.msra.mxu0 0.0
        %1259 = vmatprep.subr.mxu0 0.0
        %1260 = vmatpush1.xpose.msra.mxu0 0.0
        %1261 = vmatprep.subr.mxu0 0.0
        %1262 = vmatpush1.xpose.msra.mxu0 0.0
        %1263 = vmatprep.subr.mxu0 0.0
        %1264 = vmatpush1.xpose.msra.mxu0 0.0
        %1265 = vmatprep.subr.mxu0 0.0
        %1266 = vmatpush1.xpose.msra.mxu0 0.0
        %1267 = vmatprep.subr.mxu0 0.0
        %1268 = vmatpush1.xpose.msra.mxu0 0.0
        %1269 = vmatprep.subr.mxu0 0.0
        %1270 = vmatpush1.xpose.msra.mxu0 0.0
        %1271 = vmatprep.subr.mxu0 0.0
        %1272 = vmatpush1.xpose.msra.mxu0 0.0
        %1273 = vmatprep.subr.mxu0 0.0
        %1274 = vmatpush1.xpose.msra.mxu0 0.0
        %1275 = vmatprep.subr.mxu0 0.0
        %1276 = vmatpush1.xpose.msra.mxu0 0.0
        %1277 = vmatprep.subr.mxu0 0.0
        %1278 = vmatpush1.xpose.msra.mxu0 0.0
        %1279 = vmatprep.subr.mxu0 0.0
        %1280 = vmatpush1.xpose.msra.mxu0 0.0
        %1281 = vmatprep.subr.mxu0 0.0
        %1282 = vmatpush1.xpose.msra.mxu0 0.0
        %1283 = vmatprep.subr.mxu0 0.0
        %1284 = vmatpush1.xpose.msra.mxu0 0.0
        %1285 = vmatprep.subr.mxu0 0.0
        %1286 = vmatpush1.xpose.msra.mxu0 0.0
        %1287 = vmatprep.subr.mxu0 0.0
        %1288 = vmatpush1.xpose.msra.mxu0 0.0
        %1289 = vmatprep.subr.mxu0 0.0
        %1290 = vmatpush1.xpose.msra.mxu0 0.0
        %1291 = vmatprep.subr.mxu0 0.0
        %1292 = vmatpush1.xpose.msra.mxu0 0.0
        %1293 = vmatprep.subr.mxu0 0.0
        %1294 = vmatpush1.xpose.msra.mxu0 0.0
        %1295 = vmatprep.subr.mxu0 0.0
        %1296 = vmatpush1.xpose.msra.mxu0 0.0
        %1297 = vmatprep.subr.mxu0 0.0
        %1298 = vmatpush1.xpose.msra.mxu0 0.0
        %1299 = vmatprep.subr.mxu0 0.0
        %1300 = vmatpush1.xpose.msra.mxu0 0.0
        %1301 = vmatprep.subr.mxu0 0.0
        %1302 = vmatpush1.xpose.msra.mxu0 0.0
        %1303 = vmatprep.subr.mxu0 0.0
        %1304 = vmatpush1.xpose.msra.mxu0 0.0
        %1305 = vmatprep.subr.mxu0 0.0
        %1306 = vmatpush1.xpose.msra.mxu0 0.0
        %1307 = vmatprep.mubr.f32.mxu0 0.0
        %1308 = vmatmul.mubr.f32.gmra.mrb[0].mxu0 %v1238
        %v1309 = vpop.f32.mrb[0].mxu0
        %v1310 = vadd.f32 0.0, %v1309
        %v1311 = vpop.f32.mrb[0].mxu0
        %1312 = vdwg.mxu0
        %v1314 = vsel %vm932, %v853, 0
        %v1317 = vsel %vm932, %v855, 0
        %1319 = vmatprep.subr.mxu0 0.0
        %1320 = vmatpush1.xpose.msra.mxu0 %v1317
        %1321 = vmatprep.subr.mxu0 0.0
        %1322 = vmatpush1.xpose.msra.mxu0 0.0
        %1323 = vmatprep.subr.mxu0 0.0
        %1324 = vmatpush1.xpose.msra.mxu0 0.0
        %1325 = vmatprep.subr.mxu0 0.0
        %1326 = vmatpush1.xpose.msra.mxu0 0.0
        %1327 = vmatprep.subr.mxu0 0.0
        %1328 = vmatpush1.xpose.msra.mxu0 0.0
        %1329 = vmatprep.subr.mxu0 0.0
        %1330 = vmatpush1.xpose.msra.mxu0 0.0
        %1331 = vmatprep.subr.mxu0 0.0
        %1332 = vmatpush1.xpose.msra.mxu0 0.0
        %1333 = vmatprep.subr.mxu0 0.0
        %1334 = vmatpush1.xpose.msra.mxu0 0.0
        %1335 = vmatprep.subr.mxu0 0.0
        %1336 = vmatpush1.xpose.msra.mxu0 0.0
        %1337 = vmatprep.subr.mxu0 0.0
        %1338 = vmatpush1.xpose.msra.mxu0 0.0
        %1339 = vmatprep.subr.mxu0 0.0
        %1340 = vmatpush1.xpose.msra.mxu0 0.0
        %1341 = vmatprep.subr.mxu0 0.0
        %1342 = vmatpush1.xpose.msra.mxu0 0.0
        %1343 = vmatprep.subr.mxu0 0.0
        %1344 = vmatpush1.xpose.msra.mxu0 0.0
        %1345 = vmatprep.subr.mxu0 0.0
        %1346 = vmatpush1.xpose.msra.mxu0 0.0
        %1347 = vmatprep.subr.mxu0 0.0
        %1348 = vmatpush1.xpose.msra.mxu0 0.0
        %1349 = vmatprep.subr.mxu0 0.0
        %1350 = vmatpush1.xpose.msra.mxu0 0.0
        %1351 = vmatprep.subr.mxu0 0.0
        %1352 = vmatpush1.xpose.msra.mxu0 0.0
        %1353 = vmatprep.subr.mxu0 0.0
        %1354 = vmatpush1.xpose.msra.mxu0 0.0
        %1355 = vmatprep.subr.mxu0 0.0
        %1356 = vmatpush1.xpose.msra.mxu0 0.0
        %1357 = vmatprep.subr.mxu0 0.0
        %1358 = vmatpush1.xpose.msra.mxu0 0.0
        %1359 = vmatprep.subr.mxu0 0.0
        %1360 = vmatpush1.xpose.msra.mxu0 0.0
        %1361 = vmatprep.subr.mxu0 0.0
        %1362 = vmatpush1.xpose.msra.mxu0 0.0
        %1363 = vmatprep.subr.mxu0 0.0
        %1364 = vmatpush1.xpose.msra.mxu0 0.0
        %1365 = vmatprep.subr.mxu0 0.0
        %1366 = vmatpush1.xpose.msra.mxu0 0.0
        %1367 = vmatprep.subr.mxu0 0.0
        %1368 = vmatpush1.xpose.msra.mxu0 0.0
        %1369 = vmatprep.subr.mxu0 0.0
        %1370 = vmatpush1.xpose.msra.mxu0 0.0
        %1371 = vmatprep.subr.mxu0 0.0
        %1372 = vmatpush1.xpose.msra.mxu0 0.0
        %1373 = vmatprep.subr.mxu0 0.0
        %1374 = vmatpush1.xpose.msra.mxu0 0.0
        %1375 = vmatprep.subr.mxu0 0.0
        %1376 = vmatpush1.xpose.msra.mxu0 0.0
        %1377 = vmatprep.subr.mxu0 0.0
        %1378 = vmatpush1.xpose.msra.mxu0 0.0
        %1379 = vmatprep.subr.mxu0 0.0
        %1380 = vmatpush1.xpose.msra.mxu0 0.0
        %1381 = vmatprep.subr.mxu0 0.0
        %1382 = vmatpush1.xpose.msra.mxu0 0.0
        %1383 = vmatprep.mubr.f32.mxu0 0.0
        %1384 = vmatmul.mubr.f32.gmra.mrb[0].mxu0 %v1314
        %v1385 = vpop.f32.mrb[0].mxu0
        %v1386 = vadd.f32 0.0, %v1385
        %v1387 = vpop.f32.mrb[0].mxu0
        %1388 = vdwg.mxu0
        %v1390 = vsel %vm932, %v859, 0
        %v1393 = vsel %vm932, %v861, 0
        %1395 = vmatprep.subr.mxu0 0.0
        %1396 = vmatpush1.xpose.msra.mxu0 %v1393
        %1397 = vmatprep.subr.mxu0 0.0
        %1398 = vmatpush1.xpose.msra.mxu0 0.0
        %1399 = vmatprep.subr.mxu0 0.0
        %1400 = vmatpush1.xpose.msra.mxu0 0.0
        %1401 = vmatprep.subr.mxu0 0.0
        %1402 = vmatpush1.xpose.msra.mxu0 0.0
        %1403 = vmatprep.subr.mxu0 0.0
        %1404 = vmatpush1.xpose.msra.mxu0 0.0
        %1405 = vmatprep.subr.mxu0 0.0
        %1406 = vmatpush1.xpose.msra.mxu0 0.0
        %1407 = vmatprep.subr.mxu0 0.0
        %1408 = vmatpush1.xpose.msra.mxu0 0.0
        %1409 = vmatprep.subr.mxu0 0.0
        %1410 = vmatpush1.xpose.msra.mxu0 0.0
        %1411 = vmatprep.subr.mxu0 0.0
        %1412 = vmatpush1.xpose.msra.mxu0 0.0
        %1413 = vmatprep.subr.mxu0 0.0
        %1414 = vmatpush1.xpose.msra.mxu0 0.0
        %1415 = vmatprep.subr.mxu0 0.0
        %1416 = vmatpush1.xpose.msra.mxu0 0.0
        %1417 = vmatprep.subr.mxu0 0.0
        %1418 = vmatpush1.xpose.msra.mxu0 0.0
        %1419 = vmatprep.subr.mxu0 0.0
        %1420 = vmatpush1.xpose.msra.mxu0 0.0
        %1421 = vmatprep.subr.mxu0 0.0
        %1422 = vmatpush1.xpose.msra.mxu0 0.0
        %1423 = vmatprep.subr.mxu0 0.0
        %1424 = vmatpush1.xpose.msra.mxu0 0.0
        %1425 = vmatprep.subr.mxu0 0.0
        %1426 = vmatpush1.xpose.msra.mxu0 0.0
        %1427 = vmatprep.subr.mxu0 0.0
        %1428 = vmatpush1.xpose.msra.mxu0 0.0
        %1429 = vmatprep.subr.mxu0 0.0
        %1430 = vmatpush1.xpose.msra.mxu0 0.0
        %1431 = vmatprep.subr.mxu0 0.0
        %1432 = vmatpush1.xpose.msra.mxu0 0.0
        %1433 = vmatprep.subr.mxu0 0.0
        %1434 = vmatpush1.xpose.msra.mxu0 0.0
        %1435 = vmatprep.subr.mxu0 0.0
        %1436 = vmatpush1.xpose.msra.mxu0 0.0
        %1437 = vmatprep.subr.mxu0 0.0
        %1438 = vmatpush1.xpose.msra.mxu0 0.0
        %1439 = vmatprep.subr.mxu0 0.0
        %1440 = vmatpush1.xpose.msra.mxu0 0.0
        %1441 = vmatprep.subr.mxu0 0.0
        %1442 = vmatpush1.xpose.msra.mxu0 0.0
        %1443 = vmatprep.subr.mxu0 0.0
        %1444 = vmatpush1.xpose.msra.mxu0 0.0
        %1445 = vmatprep.subr.mxu0 0.0
        %1446 = vmatpush1.xpose.msra.mxu0 0.0
        %1447 = vmatprep.subr.mxu0 0.0
        %1448 = vmatpush1.xpose.msra.mxu0 0.0
        %1449 = vmatprep.subr.mxu0 0.0
        %1450 = vmatpush1.xpose.msra.mxu0 0.0
        %1451 = vmatprep.subr.mxu0 0.0
        %1452 = vmatpush1.xpose.msra.mxu0 0.0
        %1453 = vmatprep.subr.mxu0 0.0
        %1454 = vmatpush1.xpose.msra.mxu0 0.0
        %1455 = vmatprep.subr.mxu0 0.0
        %1456 = vmatpush1.xpose.msra.mxu0 0.0
        %1457 = vmatprep.subr.mxu0 0.0
        %1458 = vmatpush1.xpose.msra.mxu0 0.0
        %1459 = vmatprep.mubr.f32.mxu0 0.0
        %1460 = vmatmul.mubr.f32.gmra.mrb[0].mxu0 %v1390
        %v1461 = vpop.f32.mrb[0].mxu0
        %v1462 = vadd.f32 0.0, %v1461
        %v1463 = vpop.f32.mrb[0].mxu0
        %1464 = vdwg.mxu0
        %v1466 = vsel %vm932, %v863, 0
        %v1469 = vsel %vm932, %v865, 0
        %1471 = vmatprep.subr.mxu0 0.0
        %1472 = vmatpush1.xpose.msra.mxu0 %v1469
        %1473 = vmatprep.subr.mxu0 0.0
        %1474 = vmatpush1.xpose.msra.mxu0 0.0
        %1475 = vmatprep.subr.mxu0 0.0
        %1476 = vmatpush1.xpose.msra.mxu0 0.0
        %1477 = vmatprep.subr.mxu0 0.0
        %1478 = vmatpush1.xpose.msra.mxu0 0.0
        %1479 = vmatprep.subr.mxu0 0.0
        %1480 = vmatpush1.xpose.msra.mxu0 0.0
        %1481 = vmatprep.subr.mxu0 0.0
        %1482 = vmatpush1.xpose.msra.mxu0 0.0
        %1483 = vmatprep.subr.mxu0 0.0
        %1484 = vmatpush1.xpose.msra.mxu0 0.0
        %1485 = vmatprep.subr.mxu0 0.0
        %1486 = vmatpush1.xpose.msra.mxu0 0.0
        %1487 = vmatprep.subr.mxu0 0.0
        %1488 = vmatpush1.xpose.msra.mxu0 0.0
        %1489 = vmatprep.subr.mxu0 0.0
        %1490 = vmatpush1.xpose.msra.mxu0 0.0
        %1491 = vmatprep.subr.mxu0 0.0
        %1492 = vmatpush1.xpose.msra.mxu0 0.0
        %1493 = vmatprep.subr.mxu0 0.0
        %1494 = vmatpush1.xpose.msra.mxu0 0.0
        %1495 = vmatprep.subr.mxu0 0.0
        %1496 = vmatpush1.xpose.msra.mxu0 0.0
        %1497 = vmatprep.subr.mxu0 0.0
        %1498 = vmatpush1.xpose.msra.mxu0 0.0
        %1499 = vmatprep.subr.mxu0 0.0
        %1500 = vmatpush1.xpose.msra.mxu0 0.0
        %1501 = vmatprep.subr.mxu0 0.0
        %1502 = vmatpush1.xpose.msra.mxu0 0.0
        %1503 = vmatprep.subr.mxu0 0.0
        %1504 = vmatpush1.xpose.msra.mxu0 0.0
        %1505 = vmatprep.subr.mxu0 0.0
        %1506 = vmatpush1.xpose.msra.mxu0 0.0
        %1507 = vmatprep.subr.mxu0 0.0
        %1508 = vmatpush1.xpose.msra.mxu0 0.0
        %1509 = vmatprep.subr.mxu0 0.0
        %1510 = vmatpush1.xpose.msra.mxu0 0.0
        %1511 = vmatprep.subr.mxu0 0.0
        %1512 = vmatpush1.xpose.msra.mxu0 0.0
        %1513 = vmatprep.subr.mxu0 0.0
        %1514 = vmatpush1.xpose.msra.mxu0 0.0
        %1515 = vmatprep.subr.mxu0 0.0
        %1516 = vmatpush1.xpose.msra.mxu0 0.0
        %1517 = vmatprep.subr.mxu0 0.0
        %1518 = vmatpush1.xpose.msra.mxu0 0.0
        %1519 = vmatprep.subr.mxu0 0.0
        %1520 = vmatpush1.xpose.msra.mxu0 0.0
        %1521 = vmatprep.subr.mxu0 0.0
        %1522 = vmatpush1.xpose.msra.mxu0 0.0
        %1523 = vmatprep.subr.mxu0 0.0
        %1524 = vmatpush1.xpose.msra.mxu0 0.0
        %1525 = vmatprep.subr.mxu0 0.0
        %1526 = vmatpush1.xpose.msra.mxu0 0.0
        %1527 = vmatprep.subr.mxu0 0.0
        %1528 = vmatpush1.xpose.msra.mxu0 0.0
        %1529 = vmatprep.subr.mxu0 0.0
        %1530 = vmatpush1.xpose.msra.mxu0 0.0
        %1531 = vmatprep.subr.mxu0 0.0
        %1532 = vmatpush1.xpose.msra.mxu0 0.0
        %1533 = vmatprep.subr.mxu0 0.0
        %1534 = vmatpush1.xpose.msra.mxu0 0.0
        %1535 = vmatprep.mubr.f32.mxu0 0.0
        %1536 = vmatmul.mubr.f32.gmra.mrb[0].mxu0 %v1466
        %v1537 = vpop.f32.mrb[0].mxu0
        %v1538 = vadd.f32 0.0, %v1537
        %v1539 = vpop.f32.mrb[0].mxu0
        %1540 = vdwg.mxu0
        %vm1541 = vcmask 64512
        %v1542 = vsel %vm1541, %v1006, -inf
        %1543 = vmax.xlane.f32.xlu0 %v1542
        %v1544 = vpop.xlane.xlu0 %1543
        %v1545 = vsel %vm1541, %v1082, -inf
        %1546 = vmax.xlane.f32.xlu0 %v1545
        %v1547 = vpop.xlane.xlu0 %1546
        %v1548 = vsel %vm1541, %v1158, -inf
        %1549 = vmax.xlane.f32.xlu0 %v1548
        %v1550 = vpop.xlane.xlu0 %1549
        %v1551 = vsel %vm1541, %v1234, -inf
        %1552 = vmax.xlane.f32.xlu0 %v1551
        %v1553 = vpop.xlane.xlu0 %1552
        %v1554 = vsel %vm1541, %v1310, -inf
        %1555 = vmax.xlane.f32.xlu0 %v1554
        %v1556 = vpop.xlane.xlu0 %1555
        %v1557 = vsel %vm1541, %v1386, -inf
        %1558 = vmax.xlane.f32.xlu0 %v1557
        %v1559 = vpop.xlane.xlu0 %1558
        %v1560 = vsel %vm1541, %v1462, -inf
        %1561 = vmax.xlane.f32.xlu0 %v1560
        %v1562 = vpop.xlane.xlu0 %1561
        %v1563 = vsel %vm1541, %v1538, -inf
        %1564 = vmax.xlane.f32.xlu0 %v1563
        %v1565 = vpop.xlane.xlu0 %1564
        %v1566 = vsub.f32 %v1006, %v1544
        %v1567 = vsub.f32 %v1082, %v1547
        %v1568 = vsub.f32 %v1158, %v1550
        %v1569 = vsub.f32 %v1234, %v1553
        %v1570 = vsub.f32 %v1310, %v1556
        %v1571 = vsub.f32 %v1386, %v1559
        %v1572 = vsub.f32 %v1462, %v1562
        %v1573 = vsub.f32 %v1538, %v1565
        %v1574 = vmul.f32 %v1566, 1.442695
        %v1575 = vpow.pop %v1574
        %v1576 = vmul.f32 %v1567, 1.442695
        %v1577 = vpow.pop %v1576
        %v1578 = vmul.f32 %v1568, 1.442695
        %v1579 = vpow.pop %v1578
        %v1580 = vmul.f32 %v1569, 1.442695
        %v1581 = vpow.pop %v1580
        %v1582 = vmul.f32 %v1570, 1.442695
        %v1583 = vpow.pop %v1582
        %v1584 = vmul.f32 %v1571, 1.442695
        %v1585 = vpow.pop %v1584
        %v1586 = vmul.f32 %v1572, 1.442695
        %v1587 = vpow.pop %v1586
        %v1588 = vmul.f32 %v1573, 1.442695
        %v1589 = vpow.pop %v1588
        %v1590 = vsel %vm1541, %v1575, 0.0
        %1591 = vadd.xlane.f32.xlu0 %v1590
        %v1592 = vpop.xlane.xlu0 %1591
        %v1593 = vsel %vm1541, %v1577, 0.0
        %1594 = vadd.xlane.f32.xlu0 %v1593
        %v1595 = vpop.xlane.xlu0 %1594
        %v1596 = vsel %vm1541, %v1579, 0.0
        %1597 = vadd.xlane.f32.xlu0 %v1596
        %v1598 = vpop.xlane.xlu0 %1597
        %v1599 = vsel %vm1541, %v1581, 0.0
        %1600 = vadd.xlane.f32.xlu0 %v1599
        %v1601 = vpop.xlane.xlu0 %1600
        %v1602 = vsel %vm1541, %v1583, 0.0
        %1603 = vadd.xlane.f32.xlu0 %v1602
        %v1604 = vpop.xlane.xlu0 %1603
        %v1605 = vsel %vm1541, %v1585, 0.0
        %1606 = vadd.xlane.f32.xlu0 %v1605
        %v1607 = vpop.xlane.xlu0 %1606
        %v1608 = vsel %vm1541, %v1587, 0.0
        %1609 = vadd.xlane.f32.xlu0 %v1608
        %v1610 = vpop.xlane.xlu0 %1609
        %v1611 = vsel %vm1541, %v1589, 0.0
        %1612 = vadd.xlane.f32.xlu0 %v1611
        %v1613 = vpop.xlane.xlu0 %1612
        %v1614 = vrcp.pop %v1592
        %v1615 = vrcp.pop %v1595
        %v1616 = vrcp.pop %v1598
        %v1617 = vrcp.pop %v1601
        %v1618 = vrcp.pop %v1604
        %v1619 = vrcp.pop %v1607
        %v1620 = vrcp.pop %v1610
        %v1621 = vrcp.pop %v1613
        %v1622 = vmul.f32 %v1575, %v1614
        %v1623 = vmul.f32 %v1577, %v1615
        %v1624 = vmul.f32 %v1579, %v1616
        %v1625 = vmul.f32 %v1581, %v1617
        %v1626 = vmul.f32 %v1583, %v1618
        %v1627 = vmul.f32 %v1585, %v1619
        %v1628 = vmul.f32 %v1587, %v1620
        %v1629 = vmul.f32 %v1589, %v1621
        %v1631 = vsel %vm1541, %v1622, 0
        %1633 = vmatprep.subr.mxu0 0.0
        %1634 = vmatpush1.msra.mxu0 %v902
        %1635 = vmatprep.subr.mxu0 0.0
        %1636 = vmatpush1.msra.mxu0 0.0
        %1637 = vmatprep.subr.mxu0 0.0
        %1638 = vmatpush1.msra.mxu0 0.0
        %1639 = vmatprep.subr.mxu0 0.0
        %1640 = vmatpush1.msra.mxu0 0.0
        %1641 = vmatprep.subr.mxu0 0.0
        %1642 = vmatpush1.msra.mxu0 0.0
        %1643 = vmatprep.subr.mxu0 0.0
        %1644 = vmatpush1.msra.mxu0 0.0
        %1645 = vmatprep.subr.mxu0 0.0
        %1646 = vmatpush1.msra.mxu0 0.0
        %1647 = vmatprep.subr.mxu0 0.0
        %1648 = vmatpush1.msra.mxu0 0.0
        %1649 = vmatprep.subr.mxu0 0.0
        %1650 = vmatpush1.msra.mxu0 0.0
        %1651 = vmatprep.subr.mxu0 0.0
        %1652 = vmatpush1.msra.mxu0 0.0
        %1653 = vmatprep.subr.mxu0 0.0
        %1654 = vmatpush1.msra.mxu0 0.0
        %1655 = vmatprep.subr.mxu0 0.0
        %1656 = vmatpush1.msra.mxu0 0.0
        %1657 = vmatprep.subr.mxu0 0.0
        %1658 = vmatpush1.msra.mxu0 0.0
        %1659 = vmatprep.subr.mxu0 0.0
        %1660 = vmatpush1.msra.mxu0 0.0
        %1661 = vmatprep.subr.mxu0 0.0
        %1662 = vmatpush1.msra.mxu0 0.0
        %1663 = vmatprep.subr.mxu0 0.0
        %1664 = vmatpush1.msra.mxu0 0.0
        %1665 = vmatprep.subr.mxu0 0.0
        %1666 = vmatpush1.msra.mxu0 0.0
        %1667 = vmatprep.subr.mxu0 0.0
        %1668 = vmatpush1.msra.mxu0 0.0
        %1669 = vmatprep.subr.mxu0 0.0
        %1670 = vmatpush1.msra.mxu0 0.0
        %1671 = vmatprep.subr.mxu0 0.0
        %1672 = vmatpush1.msra.mxu0 0.0
        %1673 = vmatprep.subr.mxu0 0.0
        %1674 = vmatpush1.msra.mxu0 0.0
        %1675 = vmatprep.subr.mxu0 0.0
        %1676 = vmatpush1.msra.mxu0 0.0
        %1677 = vmatprep.subr.mxu0 0.0
        %1678 = vmatpush1.msra.mxu0 0.0
        %1679 = vmatprep.subr.mxu0 0.0
        %1680 = vmatpush1.msra.mxu0 0.0
        %1681 = vmatprep.subr.mxu0 0.0
        %1682 = vmatpush1.msra.mxu0 0.0
        %1683 = vmatprep.subr.mxu0 0.0
        %1684 = vmatpush1.msra.mxu0 0.0
        %1685 = vmatprep.subr.mxu0 0.0
        %1686 = vmatpush1.msra.mxu0 0.0
        %1687 = vmatprep.subr.mxu0 0.0
        %1688 = vmatpush1.msra.mxu0 0.0
        %1689 = vmatprep.subr.mxu0 0.0
        %1690 = vmatpush1.msra.mxu0 0.0
        %1691 = vmatprep.subr.mxu0 0.0
        %1692 = vmatpush1.msra.mxu0 0.0
        %1693 = vmatprep.subr.mxu0 0.0
        %1694 = vmatpush1.msra.mxu0 0.0
        %1695 = vmatprep.subr.mxu0 0.0
        %1696 = vmatpush1.msra.mxu0 0.0
        %1697 = vmatprep.mubr.f32.mxu0 0.0
        %1698 = vmatmul.mubr.f32.gmra.mrb[0].mxu0 %v1631
        %v1699 = vpop.f32.mrb[0].mxu0
        %v1700 = vadd.f32 0.0, %v1699
        %v1701 = vpop.f32.mrb[0].mxu0
        %1702 = vdwg.mxu0
        %v1704 = vsel %vm1541, %v1623, 0
        %1706 = vmatprep.subr.mxu0 0.0
        %1707 = vmatpush1.msra.mxu0 %v905
        %1708 = vmatprep.subr.mxu0 0.0
        %1709 = vmatpush1.msra.mxu0 0.0
        %1710 = vmatprep.subr.mxu0 0.0
        %1711 = vmatpush1.msra.mxu0 0.0
        %1712 = vmatprep.subr.mxu0 0.0
        %1713 = vmatpush1.msra.mxu0 0.0
        %1714 = vmatprep.subr.mxu0 0.0
        %1715 = vmatpush1.msra.mxu0 0.0
        %1716 = vmatprep.subr.mxu0 0.0
        %1717 = vmatpush1.msra.mxu0 0.0
        %1718 = vmatprep.subr.mxu0 0.0
        %1719 = vmatpush1.msra.mxu0 0.0
        %1720 = vmatprep.subr.mxu0 0.0
        %1721 = vmatpush1.msra.mxu0 0.0
        %1722 = vmatprep.subr.mxu0 0.0
        %1723 = vmatpush1.msra.mxu0 0.0
        %1724 = vmatprep.subr.mxu0 0.0
        %1725 = vmatpush1.msra.mxu0 0.0
        %1726 = vmatprep.subr.mxu0 0.0
        %1727 = vmatpush1.msra.mxu0 0.0
        %1728 = vmatprep.subr.mxu0 0.0
        %1729 = vmatpush1.msra.mxu0 0.0
        %1730 = vmatprep.subr.mxu0 0.0
        %1731 = vmatpush1.msra.mxu0 0.0
        %1732 = vmatprep.subr.mxu0 0.0
        %1733 = vmatpush1.msra.mxu0 0.0
        %1734 = vmatprep.subr.mxu0 0.0
        %1735 = vmatpush1.msra.mxu0 0.0
        %1736 = vmatprep.subr.mxu0 0.0
        %1737 = vmatpush1.msra.mxu0 0.0
        %1738 = vmatprep.subr.mxu0 0.0
        %1739 = vmatpush1.msra.mxu0 0.0
        %1740 = vmatprep.subr.mxu0 0.0
        %1741 = vmatpush1.msra.mxu0 0.0
        %1742 = vmatprep.subr.mxu0 0.0
        %1743 = vmatpush1.msra.mxu0 0.0
        %1744 = vmatprep.subr.mxu0 0.0
        %1745 = vmatpush1.msra.mxu0 0.0
        %1746 = vmatprep.subr.mxu0 0.0
        %1747 = vmatpush1.msra.mxu0 0.0
        %1748 = vmatprep.subr.mxu0 0.0
        %1749 = vmatpush1.msra.mxu0 0.0
        %1750 = vmatprep.subr.mxu0 0.0
        %1751 = vmatpush1.msra.mxu0 0.0
        %1752 = vmatprep.subr.mxu0 0.0
        %1753 = vmatpush1.msra.mxu0 0.0
        %1754 = vmatprep.subr.mxu0 0.0
        %1755 = vmatpush1.msra.mxu0 0.0
        %1756 = vmatprep.subr.mxu0 0.0
        %1757 = vmatpush1.msra.mxu0 0.0
        %1758 = vmatprep.subr.mxu0 0.0
        %1759 = vmatpush1.msra.mxu0 0.0
        %1760 = vmatprep.subr.mxu0 0.0
        %1761 = vmatpush1.msra.mxu0 0.0
        %1762 = vmatprep.subr.mxu0 0.0
        %1763 = vmatpush1.msra.mxu0 0.0
        %1764 = vmatprep.subr.mxu0 0.0
        %1765 = vmatpush1.msra.mxu0 0.0
        %1766 = vmatprep.subr.mxu0 0.0
        %1767 = vmatpush1.msra.mxu0 0.0
        %1768 = vmatprep.subr.mxu0 0.0
        %1769 = vmatpush1.msra.mxu0 0.0
        %1770 = vmatprep.mubr.f32.mxu0 0.0
        %1771 = vmatmul.mubr.f32.gmra.mrb[0].mxu0 %v1704
        %v1772 = vpop.f32.mrb[0].mxu0
        %v1773 = vadd.f32 0.0, %v1772
        %v1774 = vpop.f32.mrb[0].mxu0
        %1775 = vdwg.mxu0
        %v1777 = vsel %vm1541, %v1624, 0
        %1779 = vmatprep.subr.mxu0 0.0
        %1780 = vmatpush1.msra.mxu0 %v910
        %1781 = vmatprep.subr.mxu0 0.0
        %1782 = vmatpush1.msra.mxu0 0.0
        %1783 = vmatprep.subr.mxu0 0.0
        %1784 = vmatpush1.msra.mxu0 0.0
        %1785 = vmatprep.subr.mxu0 0.0
        %1786 = vmatpush1.msra.mxu0 0.0
        %1787 = vmatprep.subr.mxu0 0.0
        %1788 = vmatpush1.msra.mxu0 0.0
        %1789 = vmatprep.subr.mxu0 0.0
        %1790 = vmatpush1.msra.mxu0 0.0
        %1791 = vmatprep.subr.mxu0 0.0
        %1792 = vmatpush1.msra.mxu0 0.0
        %1793 = vmatprep.subr.mxu0 0.0
        %1794 = vmatpush1.msra.mxu0 0.0
        %1795 = vmatprep.subr.mxu0 0.0
        %1796 = vmatpush1.msra.mxu0 0.0
        %1797 = vmatprep.subr.mxu0 0.0
        %1798 = vmatpush1.msra.mxu0 0.0
        %1799 = vmatprep.subr.mxu0 0.0
        %1800 = vmatpush1.msra.mxu0 0.0
        %1801 = vmatprep.subr.mxu0 0.0
        %1802 = vmatpush1.msra.mxu0 0.0
        %1803 = vmatprep.subr.mxu0 0.0
        %1804 = vmatpush1.msra.mxu0 0.0
        %1805 = vmatprep.subr.mxu0 0.0
        %1806 = vmatpush1.msra.mxu0 0.0
        %1807 = vmatprep.subr.mxu0 0.0
        %1808 = vmatpush1.msra.mxu0 0.0
        %1809 = vmatprep.subr.mxu0 0.0
        %1810 = vmatpush1.msra.mxu0 0.0
        %1811 = vmatprep.subr.mxu0 0.0
        %1812 = vmatpush1.msra.mxu0 0.0
        %1813 = vmatprep.subr.mxu0 0.0
        %1814 = vmatpush1.msra.mxu0 0.0
        %1815 = vmatprep.subr.mxu0 0.0
        %1816 = vmatpush1.msra.mxu0 0.0
        %1817 = vmatprep.subr.mxu0 0.0
        %1818 = vmatpush1.msra.mxu0 0.0
        %1819 = vmatprep.subr.mxu0 0.0
        %1820 = vmatpush1.msra.mxu0 0.0
        %1821 = vmatprep.subr.mxu0 0.0
        %1822 = vmatpush1.msra.mxu0 0.0
        %1823 = vmatprep.subr.mxu0 0.0
        %1824 = vmatpush1.msra.mxu0 0.0
        %1825 = vmatprep.subr.mxu0 0.0
        %1826 = vmatpush1.msra.mxu0 0.0
        %1827 = vmatprep.subr.mxu0 0.0
        %1828 = vmatpush1.msra.mxu0 0.0
        %1829 = vmatprep.subr.mxu0 0.0
        %1830 = vmatpush1.msra.mxu0 0.0
        %1831 = vmatprep.subr.mxu0 0.0
        %1832 = vmatpush1.msra.mxu0 0.0
        %1833 = vmatprep.subr.mxu0 0.0
        %1834 = vmatpush1.msra.mxu0 0.0
        %1835 = vmatprep.subr.mxu0 0.0
        %1836 = vmatpush1.msra.mxu0 0.0
        %1837 = vmatprep.subr.mxu0 0.0
        %1838 = vmatpush1.msra.mxu0 0.0
        %1839 = vmatprep.subr.mxu0 0.0
        %1840 = vmatpush1.msra.mxu0 0.0
        %1841 = vmatprep.subr.mxu0 0.0
        %1842 = vmatpush1.msra.mxu0 0.0
        %1843 = vmatprep.mubr.f32.mxu0 0.0
        %1844 = vmatmul.mubr.f32.gmra.mrb[0].mxu0 %v1777
        %v1845 = vpop.f32.mrb[0].mxu0
        %v1846 = vadd.f32 0.0, %v1845
        %v1847 = vpop.f32.mrb[0].mxu0
        %1848 = vdwg.mxu0
        %v1850 = vsel %vm1541, %v1625, 0
        %1852 = vmatprep.subr.mxu0 0.0
        %1853 = vmatpush1.msra.mxu0 %v913
        %1854 = vmatprep.subr.mxu0 0.0
        %1855 = vmatpush1.msra.mxu0 0.0
        %1856 = vmatprep.subr.mxu0 0.0
        %1857 = vmatpush1.msra.mxu0 0.0
        %1858 = vmatprep.subr.mxu0 0.0
        %1859 = vmatpush1.msra.mxu0 0.0
        %1860 = vmatprep.subr.mxu0 0.0
        %1861 = vmatpush1.msra.mxu0 0.0
        %1862 = vmatprep.subr.mxu0 0.0
        %1863 = vmatpush1.msra.mxu0 0.0
        %1864 = vmatprep.subr.mxu0 0.0
        %1865 = vmatpush1.msra.mxu0 0.0
        %1866 = vmatprep.subr.mxu0 0.0
        %1867 = vmatpush1.msra.mxu0 0.0
        %1868 = vmatprep.subr.mxu0 0.0
        %1869 = vmatpush1.msra.mxu0 0.0
        %1870 = vmatprep.subr.mxu0 0.0
        %1871 = vmatpush1.msra.mxu0 0.0
        %1872 = vmatprep.subr.mxu0 0.0
        %1873 = vmatpush1.msra.mxu0 0.0
        %1874 = vmatprep.subr.mxu0 0.0
        %1875 = vmatpush1.msra.mxu0 0.0
        %1876 = vmatprep.subr.mxu0 0.0
        %1877 = vmatpush1.msra.mxu0 0.0
        %1878 = vmatprep.subr.mxu0 0.0
        %1879 = vmatpush1.msra.mxu0 0.0
        %1880 = vmatprep.subr.mxu0 0.0
        %1881 = vmatpush1.msra.mxu0 0.0
        %1882 = vmatprep.subr.mxu0 0.0
        %1883 = vmatpush1.msra.mxu0 0.0
        %1884 = vmatprep.subr.mxu0 0.0
        %1885 = vmatpush1.msra.mxu0 0.0
        %1886 = vmatprep.subr.mxu0 0.0
        %1887 = vmatpush1.msra.mxu0 0.0
        %1888 = vmatprep.subr.mxu0 0.0
        %1889 = vmatpush1.msra.mxu0 0.0
        %1890 = vmatprep.subr.mxu0 0.0
        %1891 = vmatpush1.msra.mxu0 0.0
        %1892 = vmatprep.subr.mxu0 0.0
        %1893 = vmatpush1.msra.mxu0 0.0
        %1894 = vmatprep.subr.mxu0 0.0
        %1895 = vmatpush1.msra.mxu0 0.0
        %1896 = vmatprep.subr.mxu0 0.0
        %1897 = vmatpush1.msra.mxu0 0.0
        %1898 = vmatprep.subr.mxu0 0.0
        %1899 = vmatpush1.msra.mxu0 0.0
        %1900 = vmatprep.subr.mxu0 0.0
        %1901 = vmatpush1.msra.mxu0 0.0
        %1902 = vmatprep.subr.mxu0 0.0
        %1903 = vmatpush1.msra.mxu0 0.0
        %1904 = vmatprep.subr.mxu0 0.0
        %1905 = vmatpush1.msra.mxu0 0.0
        %1906 = vmatprep.subr.mxu0 0.0
        %1907 = vmatpush1.msra.mxu0 0.0
        %1908 = vmatprep.subr.mxu0 0.0
        %1909 = vmatpush1.msra.mxu0 0.0
        %1910 = vmatprep.subr.mxu0 0.0
        %1911 = vmatpush1.msra.mxu0 0.0
        %1912 = vmatprep.subr.mxu0 0.0
        %1913 = vmatpush1.msra.mxu0 0.0
        %1914 = vmatprep.subr.mxu0 0.0
        %1915 = vmatpush1.msra.mxu0 0.0
        %1916 = vmatprep.mubr.f32.mxu0 0.0
        %1917 = vmatmul.mubr.f32.gmra.mrb[0].mxu0 %v1850
        %v1918 = vpop.f32.mrb[0].mxu0
        %v1919 = vadd.f32 0.0, %v1918
        %v1920 = vpop.f32.mrb[0].mxu0
        %1921 = vdwg.mxu0
        %v1923 = vsel %vm1541, %v1626, 0
        %1925 = vmatprep.subr.mxu0 0.0
        %1926 = vmatpush1.msra.mxu0 %v918
        %1927 = vmatprep.subr.mxu0 0.0
        %1928 = vmatpush1.msra.mxu0 0.0
        %1929 = vmatprep.subr.mxu0 0.0
        %1930 = vmatpush1.msra.mxu0 0.0
        %1931 = vmatprep.subr.mxu0 0.0
        %1932 = vmatpush1.msra.mxu0 0.0
        %1933 = vmatprep.subr.mxu0 0.0
        %1934 = vmatpush1.msra.mxu0 0.0
        %1935 = vmatprep.subr.mxu0 0.0
        %1936 = vmatpush1.msra.mxu0 0.0
        %1937 = vmatprep.subr.mxu0 0.0
        %1938 = vmatpush1.msra.mxu0 0.0
        %1939 = vmatprep.subr.mxu0 0.0
        %1940 = vmatpush1.msra.mxu0 0.0
        %1941 = vmatprep.subr.mxu0 0.0
        %1942 = vmatpush1.msra.mxu0 0.0
        %1943 = vmatprep.subr.mxu0 0.0
        %1944 = vmatpush1.msra.mxu0 0.0
        %1945 = vmatprep.subr.mxu0 0.0
        %1946 = vmatpush1.msra.mxu0 0.0
        %1947 = vmatprep.subr.mxu0 0.0
        %1948 = vmatpush1.msra.mxu0 0.0
        %1949 = vmatprep.subr.mxu0 0.0
        %1950 = vmatpush1.msra.mxu0 0.0
        %1951 = vmatprep.subr.mxu0 0.0
        %1952 = vmatpush1.msra.mxu0 0.0
        %1953 = vmatprep.subr.mxu0 0.0
        %1954 = vmatpush1.msra.mxu0 0.0
        %1955 = vmatprep.subr.mxu0 0.0
        %1956 = vmatpush1.msra.mxu0 0.0
        %1957 = vmatprep.subr.mxu0 0.0
        %1958 = vmatpush1.msra.mxu0 0.0
        %1959 = vmatprep.subr.mxu0 0.0
        %1960 = vmatpush1.msra.mxu0 0.0
        %1961 = vmatprep.subr.mxu0 0.0
        %1962 = vmatpush1.msra.mxu0 0.0
        %1963 = vmatprep.subr.mxu0 0.0
        %1964 = vmatpush1.msra.mxu0 0.0
        %1965 = vmatprep.subr.mxu0 0.0
        %1966 = vmatpush1.msra.mxu0 0.0
        %1967 = vmatprep.subr.mxu0 0.0
        %1968 = vmatpush1.msra.mxu0 0.0
        %1969 = vmatprep.subr.mxu0 0.0
        %1970 = vmatpush1.msra.mxu0 0.0
        %1971 = vmatprep.subr.mxu0 0.0
        %1972 = vmatpush1.msra.mxu0 0.0
        %1973 = vmatprep.subr.mxu0 0.0
        %1974 = vmatpush1.msra.mxu0 0.0
        %1975 = vmatprep.subr.mxu0 0.0
        %1976 = vmatpush1.msra.mxu0 0.0
        %1977 = vmatprep.subr.mxu0 0.0
        %1978 = vmatpush1.msra.mxu0 0.0
        %1979 = vmatprep.subr.mxu0 0.0
        %1980 = vmatpush1.msra.mxu0 0.0
        %1981 = vmatprep.subr.mxu0 0.0
        %1982 = vmatpush1.msra.mxu0 0.0
        %1983 = vmatprep.subr.mxu0 0.0
        %1984 = vmatpush1.msra.mxu0 0.0
        %1985 = vmatprep.subr.mxu0 0.0
        %1986 = vmatpush1.msra.mxu0 0.0
        %1987 = vmatprep.subr.mxu0 0.0
        %1988 = vmatpush1.msra.mxu0 0.0
        %1989 = vmatprep.mubr.f32.mxu0 0.0
        %1990 = vmatmul.mubr.f32.gmra.mrb[0].mxu0 %v1923
        %v1991 = vpop.f32.mrb[0].mxu0
        %v1992 = vadd.f32 0.0, %v1991
        %v1993 = vpop.f32.mrb[0].mxu0
        %1994 = vdwg.mxu0
        %v1996 = vsel %vm1541, %v1627, 0
        %1998 = vmatprep.subr.mxu0 0.0
        %1999 = vmatpush1.msra.mxu0 %v921
        %2000 = vmatprep.subr.mxu0 0.0
        %2001 = vmatpush1.msra.mxu0 0.0
        %2002 = vmatprep.subr.mxu0 0.0
        %2003 = vmatpush1.msra.mxu0 0.0
        %2004 = vmatprep.subr.mxu0 0.0
        %2005 = vmatpush1.msra.mxu0 0.0
        %2006 = vmatprep.subr.mxu0 0.0
        %2007 = vmatpush1.msra.mxu0 0.0
        %2008 = vmatprep.subr.mxu0 0.0
        %2009 = vmatpush1.msra.mxu0 0.0
        %2010 = vmatprep.subr.mxu0 0.0
        %2011 = vmatpush1.msra.mxu0 0.0
        %2012 = vmatprep.subr.mxu0 0.0
        %2013 = vmatpush1.msra.mxu0 0.0
        %2014 = vmatprep.subr.mxu0 0.0
        %2015 = vmatpush1.msra.mxu0 0.0
        %2016 = vmatprep.subr.mxu0 0.0
        %2017 = vmatpush1.msra.mxu0 0.0
        %2018 = vmatprep.subr.mxu0 0.0
        %2019 = vmatpush1.msra.mxu0 0.0
        %2020 = vmatprep.subr.mxu0 0.0
        %2021 = vmatpush1.msra.mxu0 0.0
        %2022 = vmatprep.subr.mxu0 0.0
        %2023 = vmatpush1.msra.mxu0 0.0
        %2024 = vmatprep.subr.mxu0 0.0
        %2025 = vmatpush1.msra.mxu0 0.0
        %2026 = vmatprep.subr.mxu0 0.0
        %2027 = vmatpush1.msra.mxu0 0.0
        %2028 = vmatprep.subr.mxu0 0.0
        %2029 = vmatpush1.msra.mxu0 0.0
        %2030 = vmatprep.subr.mxu0 0.0
        %2031 = vmatpush1.msra.mxu0 0.0
        %2032 = vmatprep.subr.mxu0 0.0
        %2033 = vmatpush1.msra.mxu0 0.0
        %2034 = vmatprep.subr.mxu0 0.0
        %2035 = vmatpush1.msra.mxu0 0.0
        %2036 = vmatprep.subr.mxu0 0.0
        %2037 = vmatpush1.msra.mxu0 0.0
        %2038 = vmatprep.subr.mxu0 0.0
        %2039 = vmatpush1.msra.mxu0 0.0
        %2040 = vmatprep.subr.mxu0 0.0
        %2041 = vmatpush1.msra.mxu0 0.0
        %2042 = vmatprep.subr.mxu0 0.0
        %2043 = vmatpush1.msra.mxu0 0.0
        %2044 = vmatprep.subr.mxu0 0.0
        %2045 = vmatpush1.msra.mxu0 0.0
        %2046 = vmatprep.subr.mxu0 0.0
        %2047 = vmatpush1.msra.mxu0 0.0
        %2048 = vmatprep.subr.mxu0 0.0
        %2049 = vmatpush1.msra.mxu0 0.0
        %2050 = vmatprep.subr.mxu0 0.0
        %2051 = vmatpush1.msra.mxu0 0.0
        %2052 = vmatprep.subr.mxu0 0.0
        %2053 = vmatpush1.msra.mxu0 0.0
        %2054 = vmatprep.subr.mxu0 0.0
        %2055 = vmatpush1.msra.mxu0 0.0
        %2056 = vmatprep.subr.mxu0 0.0
        %2057 = vmatpush1.msra.mxu0 0.0
        %2058 = vmatprep.subr.mxu0 0.0
        %2059 = vmatpush1.msra.mxu0 0.0
        %2060 = vmatprep.subr.mxu0 0.0
        %2061 = vmatpush1.msra.mxu0 0.0
        %2062 = vmatprep.mubr.f32.mxu0 0.0
        %2063 = vmatmul.mubr.f32.gmra.mrb[0].mxu0 %v1996
        %v2064 = vpop.f32.mrb[0].mxu0
        %v2065 = vadd.f32 0.0, %v2064
        %v2066 = vpop.f32.mrb[0].mxu0
        %2067 = vdwg.mxu0
        %v2069 = vsel %vm1541, %v1628, 0
        %2071 = vmatprep.subr.mxu0 0.0
        %2072 = vmatpush1.msra.mxu0 %v926
        %2073 = vmatprep.subr.mxu0 0.0
        %2074 = vmatpush1.msra.mxu0 0.0
        %2075 = vmatprep.subr.mxu0 0.0
        %2076 = vmatpush1.msra.mxu0 0.0
        %2077 = vmatprep.subr.mxu0 0.0
        %2078 = vmatpush1.msra.mxu0 0.0
        %2079 = vmatprep.subr.mxu0 0.0
        %2080 = vmatpush1.msra.mxu0 0.0
        %2081 = vmatprep.subr.mxu0 0.0
        %2082 = vmatpush1.msra.mxu0 0.0
        %2083 = vmatprep.subr.mxu0 0.0
        %2084 = vmatpush1.msra.mxu0 0.0
        %2085 = vmatprep.subr.mxu0 0.0
        %2086 = vmatpush1.msra.mxu0 0.0
        %2087 = vmatprep.subr.mxu0 0.0
        %2088 = vmatpush1.msra.mxu0 0.0
        %2089 = vmatprep.subr.mxu0 0.0
        %2090 = vmatpush1.msra.mxu0 0.0
        %2091 = vmatprep.subr.mxu0 0.0
        %2092 = vmatpush1.msra.mxu0 0.0
        %2093 = vmatprep.subr.mxu0 0.0
        %2094 = vmatpush1.msra.mxu0 0.0
        %2095 = vmatprep.subr.mxu0 0.0
        %2096 = vmatpush1.msra.mxu0 0.0
        %2097 = vmatprep.subr.mxu0 0.0
        %2098 = vmatpush1.msra.mxu0 0.0
        %2099 = vmatprep.subr.mxu0 0.0
        %2100 = vmatpush1.msra.mxu0 0.0
        %2101 = vmatprep.subr.mxu0 0.0
        %2102 = vmatpush1.msra.mxu0 0.0
        %2103 = vmatprep.subr.mxu0 0.0
        %2104 = vmatpush1.msra.mxu0 0.0
        %2105 = vmatprep.subr.mxu0 0.0
        %2106 = vmatpush1.msra.mxu0 0.0
        %2107 = vmatprep.subr.mxu0 0.0
        %2108 = vmatpush1.msra.mxu0 0.0
        %2109 = vmatprep.subr.mxu0 0.0
        %2110 = vmatpush1.msra.mxu0 0.0
        %2111 = vmatprep.subr.mxu0 0.0
        %2112 = vmatpush1.msra.mxu0 0.0
        %2113 = vmatprep.subr.mxu0 0.0
        %2114 = vmatpush1.msra.mxu0 0.0
        %2115 = vmatprep.subr.mxu0 0.0
        %2116 = vmatpush1.msra.mxu0 0.0
        %2117 = vmatprep.subr.mxu0 0.0
        %2118 = vmatpush1.msra.mxu0 0.0
        %2119 = vmatprep.subr.mxu0 0.0
        %2120 = vmatpush1.msra.mxu0 0.0
        %2121 = vmatprep.subr.mxu0 0.0
        %2122 = vmatpush1.msra.mxu0 0.0
        %2123 = vmatprep.subr.mxu0 0.0
        %2124 = vmatpush1.msra.mxu0 0.0
        %2125 = vmatprep.subr.mxu0 0.0
        %2126 = vmatpush1.msra.mxu0 0.0
        %2127 = vmatprep.subr.mxu0 0.0
        %2128 = vmatpush1.msra.mxu0 0.0
        %2129 = vmatprep.subr.mxu0 0.0
        %2130 = vmatpush1.msra.mxu0 0.0
        %2131 = vmatprep.subr.mxu0 0.0
        %2132 = vmatpush1.msra.mxu0 0.0
        %2133 = vmatprep.subr.mxu0 0.0
        %2134 = vmatpush1.msra.mxu0 0.0
        %2135 = vmatprep.mubr.f32.mxu0 0.0
        %2136 = vmatmul.mubr.f32.gmra.mrb[0].mxu0 %v2069
        %v2137 = vpop.f32.mrb[0].mxu0
        %v2138 = vadd.f32 0.0, %v2137
        %v2139 = vpop.f32.mrb[0].mxu0
        %2140 = vdwg.mxu0
        %v2142 = vsel %vm1541, %v1629, 0
        %2144 = vmatprep.subr.mxu0 0.0
        %2145 = vmatpush1.msra.mxu0 %v929
        %2146 = vmatprep.subr.mxu0 0.0
        %2147 = vmatpush1.msra.mxu0 0.0
        %2148 = vmatprep.subr.mxu0 0.0
        %2149 = vmatpush1.msra.mxu0 0.0
        %2150 = vmatprep.subr.mxu0 0.0
        %2151 = vmatpush1.msra.mxu0 0.0
        %2152 = vmatprep.subr.mxu0 0.0
        %2153 = vmatpush1.msra.mxu0 0.0
        %2154 = vmatprep.subr.mxu0 0.0
        %2155 = vmatpush1.msra.mxu0 0.0
        %2156 = vmatprep.subr.mxu0 0.0
        %2157 = vmatpush1.msra.mxu0 0.0
        %2158 = vmatprep.subr.mxu0 0.0
        %2159 = vmatpush1.msra.mxu0 0.0
        %2160 = vmatprep.subr.mxu0 0.0
        %2161 = vmatpush1.msra.mxu0 0.0
        %2162 = vmatprep.subr.mxu0 0.0
        %2163 = vmatpush1.msra.mxu0 0.0
        %2164 = vmatprep.subr.mxu0 0.0
        %2165 = vmatpush1.msra.mxu0 0.0
        %2166 = vmatprep.subr.mxu0 0.0
        %2167 = vmatpush1.msra.mxu0 0.0
        %2168 = vmatprep.subr.mxu0 0.0
        %2169 = vmatpush1.msra.mxu0 0.0
        %2170 = vmatprep.subr.mxu0 0.0
        %2171 = vmatpush1.msra.mxu0 0.0
        %2172 = vmatprep.subr.mxu0 0.0
        %2173 = vmatpush1.msra.mxu0 0.0
        %2174 = vmatprep.subr.mxu0 0.0
        %2175 = vmatpush1.msra.mxu0 0.0
        %2176 = vmatprep.subr.mxu0 0.0
        %2177 = vmatpush1.msra.mxu0 0.0
        %2178 = vmatprep.subr.mxu0 0.0
        %2179 = vmatpush1.msra.mxu0 0.0
        %2180 = vmatprep.subr.mxu0 0.0
        %2181 = vmatpush1.msra.mxu0 0.0
        %2182 = vmatprep.subr.mxu0 0.0
        %2183 = vmatpush1.msra.mxu0 0.0
        %2184 = vmatprep.subr.mxu0 0.0
        %2185 = vmatpush1.msra.mxu0 0.0
        %2186 = vmatprep.subr.mxu0 0.0
        %2187 = vmatpush1.msra.mxu0 0.0
        %2188 = vmatprep.subr.mxu0 0.0
        %2189 = vmatpush1.msra.mxu0 0.0
        %2190 = vmatprep.subr.mxu0 0.0
        %2191 = vmatpush1.msra.mxu0 0.0
        %2192 = vmatprep.subr.mxu0 0.0
        %2193 = vmatpush1.msra.mxu0 0.0
        %2194 = vmatprep.subr.mxu0 0.0
        %2195 = vmatpush1.msra.mxu0 0.0
        %2196 = vmatprep.subr.mxu0 0.0
        %2197 = vmatpush1.msra.mxu0 0.0
        %2198 = vmatprep.subr.mxu0 0.0
        %2199 = vmatpush1.msra.mxu0 0.0
        %2200 = vmatprep.subr.mxu0 0.0
        %2201 = vmatpush1.msra.mxu0 0.0
        %2202 = vmatprep.subr.mxu0 0.0
        %2203 = vmatpush1.msra.mxu0 0.0
        %2204 = vmatprep.subr.mxu0 0.0
        %2205 = vmatpush1.msra.mxu0 0.0
        %2206 = vmatprep.subr.mxu0 0.0
        %2207 = vmatpush1.msra.mxu0 0.0
        %2208 = vmatprep.mubr.f32.mxu0 0.0
        %2209 = vmatmul.mubr.f32.gmra.mrb[0].mxu0 %v2142
        %v2210 = vpop.f32.mrb[0].mxu0
        %v2211 = vadd.f32 0.0, %v2210
        %v2212 = vpop.f32.mrb[0].mxu0
        %2213 = vdwg.mxu0
        %v2214 = vpack.c.bf16 %v1773, %v1700
        %v2215 = vpack.c.bf16 %v1919, %v1846
        %v2216 = vpack.c.bf16 %v2065, %v1992
        %v2217 = vpack.c.bf16 %v2211, %v2138
        %2218 = vst.msk [vmem:[#allocation3] sm:$0xff] %vm932, %v2214
        %2219 = vst.msk [vmem:[#allocation3 + $0x8] sm:$0xff] %vm932, %v2215
        %2220 = vst.msk [vmem:[#allocation3 + $0x10] sm:$0xff] %vm932, %v2216
        %2221 = vst.msk [vmem:[#allocation3 + $0x18] sm:$0xff] %vm932, %v2217
        %2222 = vrot.lane.b32.xlu0 %v829, 64
        %v2223 = vpop.permute.xlu0 %2222
        %2224 = vrot.lane.b32.xlu0 %v831, 64
        %v2225 = vpop.permute.xlu0 %2224
        %v2226 = vsel %vm932, %v2223, 0
        %v2228 = vsel %vm932, %v2225, 0
        %2230 = vmatprep.subr.mxu0 0.0
        %2231 = vmatpush1.xpose.msra.mxu0 %v2228
        %2232 = vmatprep.subr.mxu0 0.0
        %2233 = vmatpush1.xpose.msra.mxu0 0.0
        %2234 = vmatprep.subr.mxu0 0.0
        %2235 = vmatpush1.xpose.msra.mxu0 0.0
        %2236 = vmatprep.subr.mxu0 0.0
        %2237 = vmatpush1.xpose.msra.mxu0 0.0
        %2238 = vmatprep.subr.mxu0 0.0
        %2239 = vmatpush1.xpose.msra.mxu0 0.0
        %2240 = vmatprep.subr.mxu0 0.0
        %2241 = vmatpush1.xpose.msra.mxu0 0.0
        %2242 = vmatprep.subr.mxu0 0.0
        %2243 = vmatpush1.xpose.msra.mxu0 0.0
        %2244 = vmatprep.subr.mxu0 0.0
        %2245 = vmatpush1.xpose.msra.mxu0 0.0
        %2246 = vmatprep.subr.mxu0 0.0
        %2247 = vmatpush1.xpose.msra.mxu0 0.0
        %2248 = vmatprep.subr.mxu0 0.0
        %2249 = vmatpush1.xpose.msra.mxu0 0.0
        %2250 = vmatprep.subr.mxu0 0.0
        %2251 = vmatpush1.xpose.msra.mxu0 0.0
        %2252 = vmatprep.subr.mxu0 0.0
        %2253 = vmatpush1.xpose.msra.mxu0 0.0
        %2254 = vmatprep.subr.mxu0 0.0
        %2255 = vmatpush1.xpose.msra.mxu0 0.0
        %2256 = vmatprep.subr.mxu0 0.0
        %2257 = vmatpush1.xpose.msra.mxu0 0.0
        %2258 = vmatprep.subr.mxu0 0.0
        %2259 = vmatpush1.xpose.msra.mxu0 0.0
        %2260 = vmatprep.subr.mxu0 0.0
        %2261 = vmatpush1.xpose.msra.mxu0 0.0
        %2262 = vmatprep.subr.mxu0 0.0
        %2263 = vmatpush1.xpose.msra.mxu0 0.0
        %2264 = vmatprep.subr.mxu0 0.0
        %2265 = vmatpush1.xpose.msra.mxu0 0.0
        %2266 = vmatprep.subr.mxu0 0.0
        %2267 = vmatpush1.xpose.msra.mxu0 0.0
        %2268 = vmatprep.subr.mxu0 0.0
        %2269 = vmatpush1.xpose.msra.mxu0 0.0
        %2270 = vmatprep.subr.mxu0 0.0
        %2271 = vmatpush1.xpose.msra.mxu0 0.0
        %2272 = vmatprep.subr.mxu0 0.0
        %2273 = vmatpush1.xpose.msra.mxu0 0.0
        %2274 = vmatprep.subr.mxu0 0.0
        %2275 = vmatpush1.xpose.msra.mxu0 0.0
        %2276 = vmatprep.subr.mxu0 0.0
        %2277 = vmatpush1.xpose.msra.mxu0 0.0
        %2278 = vmatprep.subr.mxu0 0.0
        %2279 = vmatpush1.xpose.msra.mxu0 0.0
        %2280 = vmatprep.subr.mxu0 0.0
        %2281 = vmatpush1.xpose.msra.mxu0 0.0
        %2282 = vmatprep.subr.mxu0 0.0
        %2283 = vmatpush1.xpose.msra.mxu0 0.0
        %2284 = vmatprep.subr.mxu0 0.0
        %2285 = vmatpush1.xpose.msra.mxu0 0.0
        %2286 = vmatprep.subr.mxu0 0.0
        %2287 = vmatpush1.xpose.msra.mxu0 0.0
        %2288 = vmatprep.subr.mxu0 0.0
        %2289 = vmatpush1.xpose.msra.mxu0 0.0
        %2290 = vmatprep.subr.mxu0 0.0
        %2291 = vmatpush1.xpose.msra.mxu0 0.0
        %2292 = vmatprep.subr.mxu0 0.0
        %2293 = vmatpush1.xpose.msra.mxu0 0.0
        %2294 = vmatprep.mubr.f32.mxu0 0.0
        %2295 = vmatmul.mubr.f32.gmra.mrb[0].mxu0 %v2226
        %v2296 = vpop.f32.mrb[0].mxu0
        %v2297 = vadd.f32 0.0, %v2296
        %v2298 = vpop.f32.mrb[0].mxu0
        %2299 = vdwg.mxu0
        %2300 = vrot.lane.b32.xlu0 %v833, 64
        %v2301 = vpop.permute.xlu0 %2300
        %2302 = vrot.lane.b32.xlu0 %v835, 64
        %v2303 = vpop.permute.xlu0 %2302
        %v2304 = vsel %vm932, %v2301, 0
        %v2306 = vsel %vm932, %v2303, 0
        %2308 = vmatprep.subr.mxu0 0.0
        %2309 = vmatpush1.xpose.msra.mxu0 %v2306
        %2310 = vmatprep.subr.mxu0 0.0
        %2311 = vmatpush1.xpose.msra.mxu0 0.0
        %2312 = vmatprep.subr.mxu0 0.0
        %2313 = vmatpush1.xpose.msra.mxu0 0.0
        %2314 = vmatprep.subr.mxu0 0.0
        %2315 = vmatpush1.xpose.msra.mxu0 0.0
        %2316 = vmatprep.subr.mxu0 0.0
        %2317 = vmatpush1.xpose.msra.mxu0 0.0
        %2318 = vmatprep.subr.mxu0 0.0
        %2319 = vmatpush1.xpose.msra.mxu0 0.0
        %2320 = vmatprep.subr.mxu0 0.0
        %2321 = vmatpush1.xpose.msra.mxu0 0.0
        %2322 = vmatprep.subr.mxu0 0.0
        %2323 = vmatpush1.xpose.msra.mxu0 0.0
        %2324 = vmatprep.subr.mxu0 0.0
        %2325 = vmatpush1.xpose.msra.mxu0 0.0
        %2326 = vmatprep.subr.mxu0 0.0
        %2327 = vmatpush1.xpose.msra.mxu0 0.0
        %2328 = vmatprep.subr.mxu0 0.0
        %2329 = vmatpush1.xpose.msra.mxu0 0.0
        %2330 = vmatprep.subr.mxu0 0.0
        %2331 = vmatpush1.xpose.msra.mxu0 0.0
        %2332 = vmatprep.subr.mxu0 0.0
        %2333 = vmatpush1.xpose.msra.mxu0 0.0
        %2334 = vmatprep.subr.mxu0 0.0
        %2335 = vmatpush1.xpose.msra.mxu0 0.0
        %2336 = vmatprep.subr.mxu0 0.0
        %2337 = vmatpush1.xpose.msra.mxu0 0.0
        %2338 = vmatprep.subr.mxu0 0.0
        %2339 = vmatpush1.xpose.msra.mxu0 0.0
        %2340 = vmatprep.subr.mxu0 0.0
        %2341 = vmatpush1.xpose.msra.mxu0 0.0
        %2342 = vmatprep.subr.mxu0 0.0
        %2343 = vmatpush1.xpose.msra.mxu0 0.0
        %2344 = vmatprep.subr.mxu0 0.0
        %2345 = vmatpush1.xpose.msra.mxu0 0.0
        %2346 = vmatprep.subr.mxu0 0.0
        %2347 = vmatpush1.xpose.msra.mxu0 0.0
        %2348 = vmatprep.subr.mxu0 0.0
        %2349 = vmatpush1.xpose.msra.mxu0 0.0
        %2350 = vmatprep.subr.mxu0 0.0
        %2351 = vmatpush1.xpose.msra.mxu0 0.0
        %2352 = vmatprep.subr.mxu0 0.0
        %2353 = vmatpush1.xpose.msra.mxu0 0.0
        %2354 = vmatprep.subr.mxu0 0.0
        %2355 = vmatpush1.xpose.msra.mxu0 0.0
        %2356 = vmatprep.subr.mxu0 0.0
        %2357 = vmatpush1.xpose.msra.mxu0 0.0
        %2358 = vmatprep.subr.mxu0 0.0
        %2359 = vmatpush1.xpose.msra.mxu0 0.0
        %2360 = vmatprep.subr.mxu0 0.0
        %2361 = vmatpush1.xpose.msra.mxu0 0.0
        %2362 = vmatprep.subr.mxu0 0.0
        %2363 = vmatpush1.xpose.msra.mxu0 0.0
        %2364 = vmatprep.subr.mxu0 0.0
        %2365 = vmatpush1.xpose.msra.mxu0 0.0
        %2366 = vmatprep.subr.mxu0 0.0
        %2367 = vmatpush1.xpose.msra.mxu0 0.0
        %2368 = vmatprep.subr.mxu0 0.0
        %2369 = vmatpush1.xpose.msra.mxu0 0.0
        %2370 = vmatprep.subr.mxu0 0.0
        %2371 = vmatpush1.xpose.msra.mxu0 0.0
        %2372 = vmatprep.mubr.f32.mxu0 0.0
        %2373 = vmatmul.mubr.f32.gmra.mrb[0].mxu0 %v2304
        %v2374 = vpop.f32.mrb[0].mxu0
        %v2375 = vadd.f32 0.0, %v2374
        %v2376 = vpop.f32.mrb[0].mxu0
        %2377 = vdwg.mxu0
        %2378 = vrot.lane.b32.xlu0 %v839, 64
        %v2379 = vpop.permute.xlu0 %2378
        %2380 = vrot.lane.b32.xlu0 %v841, 64
        %v2381 = vpop.permute.xlu0 %2380
        %v2382 = vsel %vm932, %v2379, 0
        %v2384 = vsel %vm932, %v2381, 0
        %2386 = vmatprep.subr.mxu0 0.0
        %2387 = vmatpush1.xpose.msra.mxu0 %v2384
        %2388 = vmatprep.subr.mxu0 0.0
        %2389 = vmatpush1.xpose.msra.mxu0 0.0
        %2390 = vmatprep.subr.mxu0 0.0
        %2391 = vmatpush1.xpose.msra.mxu0 0.0
        %2392 = vmatprep.subr.mxu0 0.0
        %2393 = vmatpush1.xpose.msra.mxu0 0.0
        %2394 = vmatprep.subr.mxu0 0.0
        %2395 = vmatpush1.xpose.msra.mxu0 0.0
        %2396 = vmatprep.subr.mxu0 0.0
        %2397 = vmatpush1.xpose.msra.mxu0 0.0
        %2398 = vmatprep.subr.mxu0 0.0
        %2399 = vmatpush1.xpose.msra.mxu0 0.0
        %2400 = vmatprep.subr.mxu0 0.0
        %2401 = vmatpush1.xpose.msra.mxu0 0.0
        %2402 = vmatprep.subr.mxu0 0.0
        %2403 = vmatpush1.xpose.msra.mxu0 0.0
        %2404 = vmatprep.subr.mxu0 0.0
        %2405 = vmatpush1.xpose.msra.mxu0 0.0
        %2406 = vmatprep.subr.mxu0 0.0
        %2407 = vmatpush1.xpose.msra.mxu0 0.0
        %2408 = vmatprep.subr.mxu0 0.0
        %2409 = vmatpush1.xpose.msra.mxu0 0.0
        %2410 = vmatprep.subr.mxu0 0.0
        %2411 = vmatpush1.xpose.msra.mxu0 0.0
        %2412 = vmatprep.subr.mxu0 0.0
        %2413 = vmatpush1.xpose.msra.mxu0 0.0
        %2414 = vmatprep.subr.mxu0 0.0
        %2415 = vmatpush1.xpose.msra.mxu0 0.0
        %2416 = vmatprep.subr.mxu0 0.0
        %2417 = vmatpush1.xpose.msra.mxu0 0.0
        %2418 = vmatprep.subr.mxu0 0.0
        %2419 = vmatpush1.xpose.msra.mxu0 0.0
        %2420 = vmatprep.subr.mxu0 0.0
        %2421 = vmatpush1.xpose.msra.mxu0 0.0
        %2422 = vmatprep.subr.mxu0 0.0
        %2423 = vmatpush1.xpose.msra.mxu0 0.0
        %2424 = vmatprep.subr.mxu0 0.0
        %2425 = vmatpush1.xpose.msra.mxu0 0.0
        %2426 = vmatprep.subr.mxu0 0.0
        %2427 = vmatpush1.xpose.msra.mxu0 0.0
        %2428 = vmatprep.subr.mxu0 0.0
        %2429 = vmatpush1.xpose.msra.mxu0 0.0
        %2430 = vmatprep.subr.mxu0 0.0
        %2431 = vmatpush1.xpose.msra.mxu0 0.0
        %2432 = vmatprep.subr.mxu0 0.0
        %2433 = vmatpush1.xpose.msra.mxu0 0.0
        %2434 = vmatprep.subr.mxu0 0.0
        %2435 = vmatpush1.xpose.msra.mxu0 0.0
        %2436 = vmatprep.subr.mxu0 0.0
        %2437 = vmatpush1.xpose.msra.mxu0 0.0
        %2438 = vmatprep.subr.mxu0 0.0
        %2439 = vmatpush1.xpose.msra.mxu0 0.0
        %2440 = vmatprep.subr.mxu0 0.0
        %2441 = vmatpush1.xpose.msra.mxu0 0.0
        %2442 = vmatprep.subr.mxu0 0.0
        %2443 = vmatpush1.xpose.msra.mxu0 0.0
        %2444 = vmatprep.subr.mxu0 0.0
        %2445 = vmatpush1.xpose.msra.mxu0 0.0
        %2446 = vmatprep.subr.mxu0 0.0
        %2447 = vmatpush1.xpose.msra.mxu0 0.0
        %2448 = vmatprep.subr.mxu0 0.0
        %2449 = vmatpush1.xpose.msra.mxu0 0.0
        %2450 = vmatprep.mubr.f32.mxu0 0.0
        %2451 = vmatmul.mubr.f32.gmra.mrb[0].mxu0 %v2382
        %v2452 = vpop.f32.mrb[0].mxu0
        %v2453 = vadd.f32 0.0, %v2452
        %v2454 = vpop.f32.mrb[0].mxu0
        %2455 = vdwg.mxu0
        %2456 = vrot.lane.b32.xlu0 %v843, 64
        %v2457 = vpop.permute.xlu0 %2456
        %2458 = vrot.lane.b32.xlu0 %v845, 64
        %v2459 = vpop.permute.xlu0 %2458
        %v2460 = vsel %vm932, %v2457, 0
        %v2462 = vsel %vm932, %v2459, 0
        %2464 = vmatprep.subr.mxu0 0.0
        %2465 = vmatpush1.xpose.msra.mxu0 %v2462
        %2466 = vmatprep.subr.mxu0 0.0
        %2467 = vmatpush1.xpose.msra.mxu0 0.0
        %2468 = vmatprep.subr.mxu0 0.0
        %2469 = vmatpush1.xpose.msra.mxu0 0.0
        %2470 = vmatprep.subr.mxu0 0.0
        %2471 = vmatpush1.xpose.msra.mxu0 0.0
        %2472 = vmatprep.subr.mxu0 0.0
        %2473 = vmatpush1.xpose.msra.mxu0 0.0
        %2474 = vmatprep.subr.mxu0 0.0
        %2475 = vmatpush1.xpose.msra.mxu0 0.0
        %2476 = vmatprep.subr.mxu0 0.0
        %2477 = vmatpush1.xpose.msra.mxu0 0.0
        %2478 = vmatprep.subr.mxu0 0.0
        %2479 = vmatpush1.xpose.msra.mxu0 0.0
        %2480 = vmatprep.subr.mxu0 0.0
        %2481 = vmatpush1.xpose.msra.mxu0 0.0
        %2482 = vmatprep.subr.mxu0 0.0
        %2483 = vmatpush1.xpose.msra.mxu0 0.0
        %2484 = vmatprep.subr.mxu0 0.0
        %2485 = vmatpush1.xpose.msra.mxu0 0.0
        %2486 = vmatprep.subr.mxu0 0.0
        %2487 = vmatpush1.xpose.msra.mxu0 0.0
        %2488 = vmatprep.subr.mxu0 0.0
        %2489 = vmatpush1.xpose.msra.mxu0 0.0
        %2490 = vmatprep.subr.mxu0 0.0
        %2491 = vmatpush1.xpose.msra.mxu0 0.0
        %2492 = vmatprep.subr.mxu0 0.0
        %2493 = vmatpush1.xpose.msra.mxu0 0.0
        %2494 = vmatprep.subr.mxu0 0.0
        %2495 = vmatpush1.xpose.msra.mxu0 0.0
        %2496 = vmatprep.subr.mxu0 0.0
        %2497 = vmatpush1.xpose.msra.mxu0 0.0
        %2498 = vmatprep.subr.mxu0 0.0
        %2499 = vmatpush1.xpose.msra.mxu0 0.0
        %2500 = vmatprep.subr.mxu0 0.0
        %2501 = vmatpush1.xpose.msra.mxu0 0.0
        %2502 = vmatprep.subr.mxu0 0.0
        %2503 = vmatpush1.xpose.msra.mxu0 0.0
        %2504 = vmatprep.subr.mxu0 0.0
        %2505 = vmatpush1.xpose.msra.mxu0 0.0
        %2506 = vmatprep.subr.mxu0 0.0
        %2507 = vmatpush1.xpose.msra.mxu0 0.0
        %2508 = vmatprep.subr.mxu0 0.0
        %2509 = vmatpush1.xpose.msra.mxu0 0.0
        %2510 = vmatprep.subr.mxu0 0.0
        %2511 = vmatpush1.xpose.msra.mxu0 0.0
        %2512 = vmatprep.subr.mxu0 0.0
        %2513 = vmatpush1.xpose.msra.mxu0 0.0
        %2514 = vmatprep.subr.mxu0 0.0
        %2515 = vmatpush1.xpose.msra.mxu0 0.0
        %2516 = vmatprep.subr.mxu0 0.0
        %2517 = vmatpush1.xpose.msra.mxu0 0.0
        %2518 = vmatprep.subr.mxu0 0.0
        %2519 = vmatpush1.xpose.msra.mxu0 0.0
        %2520 = vmatprep.subr.mxu0 0.0
        %2521 = vmatpush1.xpose.msra.mxu0 0.0
        %2522 = vmatprep.subr.mxu0 0.0
        %2523 = vmatpush1.xpose.msra.mxu0 0.0
        %2524 = vmatprep.subr.mxu0 0.0
        %2525 = vmatpush1.xpose.msra.mxu0 0.0
        %2526 = vmatprep.subr.mxu0 0.0
        %2527 = vmatpush1.xpose.msra.mxu0 0.0
        %2528 = vmatprep.mubr.f32.mxu0 0.0
        %2529 = vmatmul.mubr.f32.gmra.mrb[0].mxu0 %v2460
        %v2530 = vpop.f32.mrb[0].mxu0
        %v2531 = vadd.f32 0.0, %v2530
        %v2532 = vpop.f32.mrb[0].mxu0
        %2533 = vdwg.mxu0
        %2534 = vrot.lane.b32.xlu0 %v849, 64
        %v2535 = vpop.permute.xlu0 %2534
        %2536 = vrot.lane.b32.xlu0 %v851, 64
        %v2537 = vpop.permute.xlu0 %2536
        %v2538 = vsel %vm932, %v2535, 0
        %v2540 = vsel %vm932, %v2537, 0
        %2542 = vmatprep.subr.mxu0 0.0
        %2543 = vmatpush1.xpose.msra.mxu0 %v2540
        %2544 = vmatprep.subr.mxu0 0.0
        %2545 = vmatpush1.xpose.msra.mxu0 0.0
        %2546 = vmatprep.subr.mxu0 0.0
        %2547 = vmatpush1.xpose.msra.mxu0 0.0
        %2548 = vmatprep.subr.mxu0 0.0
        %2549 = vmatpush1.xpose.msra.mxu0 0.0
        %2550 = vmatprep.subr.mxu0 0.0
        %2551 = vmatpush1.xpose.msra.mxu0 0.0
        %2552 = vmatprep.subr.mxu0 0.0
        %2553 = vmatpush1.xpose.msra.mxu0 0.0
        %2554 = vmatprep.subr.mxu0 0.0
        %2555 = vmatpush1.xpose.msra.mxu0 0.0
        %2556 = vmatprep.subr.mxu0 0.0
        %2557 = vmatpush1.xpose.msra.mxu0 0.0
        %2558 = vmatprep.subr.mxu0 0.0
        %2559 = vmatpush1.xpose.msra.mxu0 0.0
        %2560 = vmatprep.subr.mxu0 0.0
        %2561 = vmatpush1.xpose.msra.mxu0 0.0
        %2562 = vmatprep.subr.mxu0 0.0
        %2563 = vmatpush1.xpose.msra.mxu0 0.0
        %2564 = vmatprep.subr.mxu0 0.0
        %2565 = vmatpush1.xpose.msra.mxu0 0.0
        %2566 = vmatprep.subr.mxu0 0.0
        %2567 = vmatpush1.xpose.msra.mxu0 0.0
        %2568 = vmatprep.subr.mxu0 0.0
        %2569 = vmatpush1.xpose.msra.mxu0 0.0
        %2570 = vmatprep.subr.mxu0 0.0
        %2571 = vmatpush1.xpose.msra.mxu0 0.0
        %2572 = vmatprep.subr.mxu0 0.0
        %2573 = vmatpush1.xpose.msra.mxu0 0.0
        %2574 = vmatprep.subr.mxu0 0.0
        %2575 = vmatpush1.xpose.msra.mxu0 0.0
        %2576 = vmatprep.subr.mxu0 0.0
        %2577 = vmatpush1.xpose.msra.mxu0 0.0
        %2578 = vmatprep.subr.mxu0 0.0
        %2579 = vmatpush1.xpose.msra.mxu0 0.0
        %2580 = vmatprep.subr.mxu0 0.0
        %2581 = vmatpush1.xpose.msra.mxu0 0.0
        %2582 = vmatprep.subr.mxu0 0.0
        %2583 = vmatpush1.xpose.msra.mxu0 0.0
        %2584 = vmatprep.subr.mxu0 0.0
        %2585 = vmatpush1.xpose.msra.mxu0 0.0
        %2586 = vmatprep.subr.mxu0 0.0
        %2587 = vmatpush1.xpose.msra.mxu0 0.0
        %2588 = vmatprep.subr.mxu0 0.0
        %2589 = vmatpush1.xpose.msra.mxu0 0.0
        %2590 = vmatprep.subr.mxu0 0.0
        %2591 = vmatpush1.xpose.msra.mxu0 0.0
        %2592 = vmatprep.subr.mxu0 0.0
        %2593 = vmatpush1.xpose.msra.mxu0 0.0
        %2594 = vmatprep.subr.mxu0 0.0
        %2595 = vmatpush1.xpose.msra.mxu0 0.0
        %2596 = vmatprep.subr.mxu0 0.0
        %2597 = vmatpush1.xpose.msra.mxu0 0.0
        %2598 = vmatprep.subr.mxu0 0.0
        %2599 = vmatpush1.xpose.msra.mxu0 0.0
        %2600 = vmatprep.subr.mxu0 0.0
        %2601 = vmatpush1.xpose.msra.mxu0 0.0
        %2602 = vmatprep.subr.mxu0 0.0
        %2603 = vmatpush1.xpose.msra.mxu0 0.0
        %2604 = vmatprep.subr.mxu0 0.0
        %2605 = vmatpush1.xpose.msra.mxu0 0.0
        %2606 = vmatprep.mubr.f32.mxu0 0.0
        %2607 = vmatmul.mubr.f32.gmra.mrb[0].mxu0 %v2538
        %v2608 = vpop.f32.mrb[0].mxu0
        %v2609 = vadd.f32 0.0, %v2608
        %v2610 = vpop.f32.mrb[0].mxu0
        %2611 = vdwg.mxu0
        %2612 = vrot.lane.b32.xlu0 %v853, 64
        %v2613 = vpop.permute.xlu0 %2612
        %2614 = vrot.lane.b32.xlu0 %v855, 64
        %v2615 = vpop.permute.xlu0 %2614
        %v2616 = vsel %vm932, %v2613, 0
        %v2618 = vsel %vm932, %v2615, 0
        %2620 = vmatprep.subr.mxu0 0.0
        %2621 = vmatpush1.xpose.msra.mxu0 %v2618
        %2622 = vmatprep.subr.mxu0 0.0
        %2623 = vmatpush1.xpose.msra.mxu0 0.0
        %2624 = vmatprep.subr.mxu0 0.0
        %2625 = vmatpush1.xpose.msra.mxu0 0.0
        %2626 = vmatprep.subr.mxu0 0.0
        %2627 = vmatpush1.xpose.msra.mxu0 0.0
        %2628 = vmatprep.subr.mxu0 0.0
        %2629 = vmatpush1.xpose.msra.mxu0 0.0
        %2630 = vmatprep.subr.mxu0 0.0
        %2631 = vmatpush1.xpose.msra.mxu0 0.0
        %2632 = vmatprep.subr.mxu0 0.0
        %2633 = vmatpush1.xpose.msra.mxu0 0.0
        %2634 = vmatprep.subr.mxu0 0.0
        %2635 = vmatpush1.xpose.msra.mxu0 0.0
        %2636 = vmatprep.subr.mxu0 0.0
        %2637 = vmatpush1.xpose.msra.mxu0 0.0
        %2638 = vmatprep.subr.mxu0 0.0
        %2639 = vmatpush1.xpose.msra.mxu0 0.0
        %2640 = vmatprep.subr.mxu0 0.0
        %2641 = vmatpush1.xpose.msra.mxu0 0.0
        %2642 = vmatprep.subr.mxu0 0.0
        %2643 = vmatpush1.xpose.msra.mxu0 0.0
        %2644 = vmatprep.subr.mxu0 0.0
        %2645 = vmatpush1.xpose.msra.mxu0 0.0
        %2646 = vmatprep.subr.mxu0 0.0
        %2647 = vmatpush1.xpose.msra.mxu0 0.0
        %2648 = vmatprep.subr.mxu0 0.0
        %2649 = vmatpush1.xpose.msra.mxu0 0.0
        %2650 = vmatprep.subr.mxu0 0.0
        %2651 = vmatpush1.xpose.msra.mxu0 0.0
        %2652 = vmatprep.subr.mxu0 0.0
        %2653 = vmatpush1.xpose.msra.mxu0 0.0
        %2654 = vmatprep.subr.mxu0 0.0
        %2655 = vmatpush1.xpose.msra.mxu0 0.0
        %2656 = vmatprep.subr.mxu0 0.0
        %2657 = vmatpush1.xpose.msra.mxu0 0.0
        %2658 = vmatprep.subr.mxu0 0.0
        %2659 = vmatpush1.xpose.msra.mxu0 0.0
        %2660 = vmatprep.subr.mxu0 0.0
        %2661 = vmatpush1.xpose.msra.mxu0 0.0
        %2662 = vmatprep.subr.mxu0 0.0
        %2663 = vmatpush1.xpose.msra.mxu0 0.0
        %2664 = vmatprep.subr.mxu0 0.0
        %2665 = vmatpush1.xpose.msra.mxu0 0.0
        %2666 = vmatprep.subr.mxu0 0.0
        %2667 = vmatpush1.xpose.msra.mxu0 0.0
        %2668 = vmatprep.subr.mxu0 0.0
        %2669 = vmatpush1.xpose.msra.mxu0 0.0
        %2670 = vmatprep.subr.mxu0 0.0
        %2671 = vmatpush1.xpose.msra.mxu0 0.0
        %2672 = vmatprep.subr.mxu0 0.0
        %2673 = vmatpush1.xpose.msra.mxu0 0.0
        %2674 = vmatprep.subr.mxu0 0.0
        %2675 = vmatpush1.xpose.msra.mxu0 0.0
        %2676 = vmatprep.subr.mxu0 0.0
        %2677 = vmatpush1.xpose.msra.mxu0 0.0
        %2678 = vmatprep.subr.mxu0 0.0
        %2679 = vmatpush1.xpose.msra.mxu0 0.0
        %2680 = vmatprep.subr.mxu0 0.0
        %2681 = vmatpush1.xpose.msra.mxu0 0.0
        %2682 = vmatprep.subr.mxu0 0.0
        %2683 = vmatpush1.xpose.msra.mxu0 0.0
        %2684 = vmatprep.mubr.f32.mxu0 0.0
        %2685 = vmatmul.mubr.f32.gmra.mrb[0].mxu0 %v2616
        %v2686 = vpop.f32.mrb[0].mxu0
        %v2687 = vadd.f32 0.0, %v2686
        %v2688 = vpop.f32.mrb[0].mxu0
        %2689 = vdwg.mxu0
        %2690 = vrot.lane.b32.xlu0 %v859, 64
        %v2691 = vpop.permute.xlu0 %2690
        %2692 = vrot.lane.b32.xlu0 %v861, 64
        %v2693 = vpop.permute.xlu0 %2692
        %v2694 = vsel %vm932, %v2691, 0
        %v2696 = vsel %vm932, %v2693, 0
        %2698 = vmatprep.subr.mxu0 0.0
        %2699 = vmatpush1.xpose.msra.mxu0 %v2696
        %2700 = vmatprep.subr.mxu0 0.0
        %2701 = vmatpush1.xpose.msra.mxu0 0.0
        %2702 = vmatprep.subr.mxu0 0.0
        %2703 = vmatpush1.xpose.msra.mxu0 0.0
        %2704 = vmatprep.subr.mxu0 0.0
        %2705 = vmatpush1.xpose.msra.mxu0 0.0
        %2706 = vmatprep.subr.mxu0 0.0
        %2707 = vmatpush1.xpose.msra.mxu0 0.0
        %2708 = vmatprep.subr.mxu0 0.0
        %2709 = vmatpush1.xpose.msra.mxu0 0.0
        %2710 = vmatprep.subr.mxu0 0.0
        %2711 = vmatpush1.xpose.msra.mxu0 0.0
        %2712 = vmatprep.subr.mxu0 0.0
        %2713 = vmatpush1.xpose.msra.mxu0 0.0
        %2714 = vmatprep.subr.mxu0 0.0
        %2715 = vmatpush1.xpose.msra.mxu0 0.0
        %2716 = vmatprep.subr.mxu0 0.0
        %2717 = vmatpush1.xpose.msra.mxu0 0.0
        %2718 = vmatprep.subr.mxu0 0.0
        %2719 = vmatpush1.xpose.msra.mxu0 0.0
        %2720 = vmatprep.subr.mxu0 0.0
        %2721 = vmatpush1.xpose.msra.mxu0 0.0
        %2722 = vmatprep.subr.mxu0 0.0
        %2723 = vmatpush1.xpose.msra.mxu0 0.0
        %2724 = vmatprep.subr.mxu0 0.0
        %2725 = vmatpush1.xpose.msra.mxu0 0.0
        %2726 = vmatprep.subr.mxu0 0.0
        %2727 = vmatpush1.xpose.msra.mxu0 0.0
        %2728 = vmatprep.subr.mxu0 0.0
        %2729 = vmatpush1.xpose.msra.mxu0 0.0
        %2730 = vmatprep.subr.mxu0 0.0
        %2731 = vmatpush1.xpose.msra.mxu0 0.0
        %2732 = vmatprep.subr.mxu0 0.0
        %2733 = vmatpush1.xpose.msra.mxu0 0.0
        %2734 = vmatprep.subr.mxu0 0.0
        %2735 = vmatpush1.xpose.msra.mxu0 0.0
        %2736 = vmatprep.subr.mxu0 0.0
        %2737 = vmatpush1.xpose.msra.mxu0 0.0
        %2738 = vmatprep.subr.mxu0 0.0
        %2739 = vmatpush1.xpose.msra.mxu0 0.0
        %2740 = vmatprep.subr.mxu0 0.0
        %2741 = vmatpush1.xpose.msra.mxu0 0.0
        %2742 = vmatprep.subr.mxu0 0.0
        %2743 = vmatpush1.xpose.msra.mxu0 0.0
        %2744 = vmatprep.subr.mxu0 0.0
        %2745 = vmatpush1.xpose.msra.mxu0 0.0
        %2746 = vmatprep.subr.mxu0 0.0
        %2747 = vmatpush1.xpose.msra.mxu0 0.0
        %2748 = vmatprep.subr.mxu0 0.0
        %2749 = vmatpush1.xpose.msra.mxu0 0.0
        %2750 = vmatprep.subr.mxu0 0.0
        %2751 = vmatpush1.xpose.msra.mxu0 0.0
        %2752 = vmatprep.subr.mxu0 0.0
        %2753 = vmatpush1.xpose.msra.mxu0 0.0
        %2754 = vmatprep.subr.mxu0 0.0
        %2755 = vmatpush1.xpose.msra.mxu0 0.0
        %2756 = vmatprep.subr.mxu0 0.0
        %2757 = vmatpush1.xpose.msra.mxu0 0.0
        %2758 = vmatprep.subr.mxu0 0.0
        %2759 = vmatpush1.xpose.msra.mxu0 0.0
        %2760 = vmatprep.subr.mxu0 0.0
        %2761 = vmatpush1.xpose.msra.mxu0 0.0
        %2762 = vmatprep.mubr.f32.mxu0 0.0
        %2763 = vmatmul.mubr.f32.gmra.mrb[0].mxu0 %v2694
        %v2764 = vpop.f32.mrb[0].mxu0
        %v2765 = vadd.f32 0.0, %v2764
        %v2766 = vpop.f32.mrb[0].mxu0
        %2767 = vdwg.mxu0
        %2768 = vrot.lane.b32.xlu0 %v863, 64
        %v2769 = vpop.permute.xlu0 %2768
        %2770 = vrot.lane.b32.xlu0 %v865, 64
        %v2771 = vpop.permute.xlu0 %2770
        %v2772 = vsel %vm932, %v2769, 0
        %v2774 = vsel %vm932, %v2771, 0
        %2776 = vmatprep.subr.mxu0 0.0
        %2777 = vmatpush1.xpose.msra.mxu0 %v2774
        %2778 = vmatprep.subr.mxu0 0.0
        %2779 = vmatpush1.xpose.msra.mxu0 0.0
        %2780 = vmatprep.subr.mxu0 0.0
        %2781 = vmatpush1.xpose.msra.mxu0 0.0
        %2782 = vmatprep.subr.mxu0 0.0
        %2783 = vmatpush1.xpose.msra.mxu0 0.0
        %2784 = vmatprep.subr.mxu0 0.0
        %2785 = vmatpush1.xpose.msra.mxu0 0.0
        %2786 = vmatprep.subr.mxu0 0.0
        %2787 = vmatpush1.xpose.msra.mxu0 0.0
        %2788 = vmatprep.subr.mxu0 0.0
        %2789 = vmatpush1.xpose.msra.mxu0 0.0
        %2790 = vmatprep.subr.mxu0 0.0
        %2791 = vmatpush1.xpose.msra.mxu0 0.0
        %2792 = vmatprep.subr.mxu0 0.0
        %2793 = vmatpush1.xpose.msra.mxu0 0.0
        %2794 = vmatprep.subr.mxu0 0.0
        %2795 = vmatpush1.xpose.msra.mxu0 0.0
        %2796 = vmatprep.subr.mxu0 0.0
        %2797 = vmatpush1.xpose.msra.mxu0 0.0
        %2798 = vmatprep.subr.mxu0 0.0
        %2799 = vmatpush1.xpose.msra.mxu0 0.0
        %2800 = vmatprep.subr.mxu0 0.0
        %2801 = vmatpush1.xpose.msra.mxu0 0.0
        %2802 = vmatprep.subr.mxu0 0.0
        %2803 = vmatpush1.xpose.msra.mxu0 0.0
        %2804 = vmatprep.subr.mxu0 0.0
        %2805 = vmatpush1.xpose.msra.mxu0 0.0
        %2806 = vmatprep.subr.mxu0 0.0
        %2807 = vmatpush1.xpose.msra.mxu0 0.0
        %2808 = vmatprep.subr.mxu0 0.0
        %2809 = vmatpush1.xpose.msra.mxu0 0.0
        %2810 = vmatprep.subr.mxu0 0.0
        %2811 = vmatpush1.xpose.msra.mxu0 0.0
        %2812 = vmatprep.subr.mxu0 0.0
        %2813 = vmatpush1.xpose.msra.mxu0 0.0
        %2814 = vmatprep.subr.mxu0 0.0
        %2815 = vmatpush1.xpose.msra.mxu0 0.0
        %2816 = vmatprep.subr.mxu0 0.0
        %2817 = vmatpush1.xpose.msra.mxu0 0.0
        %2818 = vmatprep.subr.mxu0 0.0
        %2819 = vmatpush1.xpose.msra.mxu0 0.0
        %2820 = vmatprep.subr.mxu0 0.0
        %2821 = vmatpush1.xpose.msra.mxu0 0.0
        %2822 = vmatprep.subr.mxu0 0.0
        %2823 = vmatpush1.xpose.msra.mxu0 0.0
        %2824 = vmatprep.subr.mxu0 0.0
        %2825 = vmatpush1.xpose.msra.mxu0 0.0
        %2826 = vmatprep.subr.mxu0 0.0
        %2827 = vmatpush1.xpose.msra.mxu0 0.0
        %2828 = vmatprep.subr.mxu0 0.0
        %2829 = vmatpush1.xpose.msra.mxu0 0.0
        %2830 = vmatprep.subr.mxu0 0.0
        %2831 = vmatpush1.xpose.msra.mxu0 0.0
        %2832 = vmatprep.subr.mxu0 0.0
        %2833 = vmatpush1.xpose.msra.mxu0 0.0
        %2834 = vmatprep.subr.mxu0 0.0
        %2835 = vmatpush1.xpose.msra.mxu0 0.0
        %2836 = vmatprep.subr.mxu0 0.0
        %2837 = vmatpush1.xpose.msra.mxu0 0.0
        %2838 = vmatprep.subr.mxu0 0.0
        %2839 = vmatpush1.xpose.msra.mxu0 0.0
        %2840 = vmatprep.mubr.f32.mxu0 0.0
        %2841 = vmatmul.mubr.f32.gmra.mrb[0].mxu0 %v2772
        %v2842 = vpop.f32.mrb[0].mxu0
        %v2843 = vadd.f32 0.0, %v2842
        %v2844 = vpop.f32.mrb[0].mxu0
        %2845 = vdwg.mxu0
        %v2846 = vsel %vm1541, %v2297, -inf
        %2847 = vmax.xlane.f32.xlu0 %v2846
        %v2848 = vpop.xlane.xlu0 %2847
        %v2849 = vsel %vm1541, %v2375, -inf
        %2850 = vmax.xlane.f32.xlu0 %v2849
        %v2851 = vpop.xlane.xlu0 %2850
        %v2852 = vsel %vm1541, %v2453, -inf
        %2853 = vmax.xlane.f32.xlu0 %v2852
        %v2854 = vpop.xlane.xlu0 %2853
        %v2855 = vsel %vm1541, %v2531, -inf
        %2856 = vmax.xlane.f32.xlu0 %v2855
        %v2857 = vpop.xlane.xlu0 %2856
        %v2858 = vsel %vm1541, %v2609, -inf
        %2859 = vmax.xlane.f32.xlu0 %v2858
        %v2860 = vpop.xlane.xlu0 %2859
        %v2861 = vsel %vm1541, %v2687, -inf
        %2862 = vmax.xlane.f32.xlu0 %v2861
        %v2863 = vpop.xlane.xlu0 %2862
        %v2864 = vsel %vm1541, %v2765, -inf
        %2865 = vmax.xlane.f32.xlu0 %v2864
        %v2866 = vpop.xlane.xlu0 %2865
        %v2867 = vsel %vm1541, %v2843, -inf
        %2868 = vmax.xlane.f32.xlu0 %v2867
        %v2869 = vpop.xlane.xlu0 %2868
        %v2870 = vsub.f32 %v2297, %v2848
        %v2871 = vsub.f32 %v2375, %v2851
        %v2872 = vsub.f32 %v2453, %v2854
        %v2873 = vsub.f32 %v2531, %v2857
        %v2874 = vsub.f32 %v2609, %v2860
        %v2875 = vsub.f32 %v2687, %v2863
        %v2876 = vsub.f32 %v2765, %v2866
        %v2877 = vsub.f32 %v2843, %v2869
        %v2878 = vmul.f32 %v2870, 1.442695
        %v2879 = vpow.pop %v2878
        %v2880 = vmul.f32 %v2871, 1.442695
        %v2881 = vpow.pop %v2880
        %v2882 = vmul.f32 %v2872, 1.442695
        %v2883 = vpow.pop %v2882
        %v2884 = vmul.f32 %v2873, 1.442695
        %v2885 = vpow.pop %v2884
        %v2886 = vmul.f32 %v2874, 1.442695
        %v2887 = vpow.pop %v2886
        %v2888 = vmul.f32 %v2875, 1.442695
        %v2889 = vpow.pop %v2888
        %v2890 = vmul.f32 %v2876, 1.442695
        %v2891 = vpow.pop %v2890
        %v2892 = vmul.f32 %v2877, 1.442695
        %v2893 = vpow.pop %v2892
        %v2894 = vsel %vm1541, %v2879, 0.0
        %2895 = vadd.xlane.f32.xlu0 %v2894
        %v2896 = vpop.xlane.xlu0 %2895
        %v2897 = vsel %vm1541, %v2881, 0.0
        %2898 = vadd.xlane.f32.xlu0 %v2897
        %v2899 = vpop.xlane.xlu0 %2898
        %v2900 = vsel %vm1541, %v2883, 0.0
        %2901 = vadd.xlane.f32.xlu0 %v2900
        %v2902 = vpop.xlane.xlu0 %2901
        %v2903 = vsel %vm1541, %v2885, 0.0
        %2904 = vadd.xlane.f32.xlu0 %v2903
        %v2905 = vpop.xlane.xlu0 %2904
        %v2906 = vsel %vm1541, %v2887, 0.0
        %2907 = vadd.xlane.f32.xlu0 %v2906
        %v2908 = vpop.xlane.xlu0 %2907
        %v2909 = vsel %vm1541, %v2889, 0.0
        %2910 = vadd.xlane.f32.xlu0 %v2909
        %v2911 = vpop.xlane.xlu0 %2910
        %v2912 = vsel %vm1541, %v2891, 0.0
        %2913 = vadd.xlane.f32.xlu0 %v2912
        %v2914 = vpop.xlane.xlu0 %2913
        %v2915 = vsel %vm1541, %v2893, 0.0
        %2916 = vadd.xlane.f32.xlu0 %v2915
        %v2917 = vpop.xlane.xlu0 %2916
        %v2918 = vrcp.pop %v2896
        %v2919 = vrcp.pop %v2899
        %v2920 = vrcp.pop %v2902
        %v2921 = vrcp.pop %v2905
        %v2922 = vrcp.pop %v2908
        %v2923 = vrcp.pop %v2911
        %v2924 = vrcp.pop %v2914
        %v2925 = vrcp.pop %v2917
        %v2926 = vmul.f32 %v2879, %v2918
        %v2927 = vmul.f32 %v2881, %v2919
        %v2928 = vmul.f32 %v2883, %v2920
        %v2929 = vmul.f32 %v2885, %v2921
        %v2930 = vmul.f32 %v2887, %v2922
        %v2931 = vmul.f32 %v2889, %v2923
        %v2932 = vmul.f32 %v2891, %v2924
        %v2933 = vmul.f32 %v2893, %v2925
        %2935 = vrot.lane.b32.xlu0 %v902, 64
        %v2936 = vpop.permute.xlu0 %2935
        %v2939 = vsel %vm1541, %v2926, 0
        %2941 = vmatprep.subr.mxu0 0.0
        %2942 = vmatpush1.msra.mxu0 %v2936
        %2943 = vmatprep.subr.mxu0 0.0
        %2944 = vmatpush1.msra.mxu0 0.0
        %2945 = vmatprep.subr.mxu0 0.0
        %2946 = vmatpush1.msra.mxu0 0.0
        %2947 = vmatprep.subr.mxu0 0.0
        %2948 = vmatpush1.msra.mxu0 0.0
        %2949 = vmatprep.subr.mxu0 0.0
        %2950 = vmatpush1.msra.mxu0 0.0
        %2951 = vmatprep.subr.mxu0 0.0
        %2952 = vmatpush1.msra.mxu0 0.0
        %2953 = vmatprep.subr.mxu0 0.0
        %2954 = vmatpush1.msra.mxu0 0.0
        %2955 = vmatprep.subr.mxu0 0.0
        %2956 = vmatpush1.msra.mxu0 0.0
        %2957 = vmatprep.subr.mxu0 0.0
        %2958 = vmatpush1.msra.mxu0 0.0
        %2959 = vmatprep.subr.mxu0 0.0
        %2960 = vmatpush1.msra.mxu0 0.0
        %2961 = vmatprep.subr.mxu0 0.0
        %2962 = vmatpush1.msra.mxu0 0.0
        %2963 = vmatprep.subr.mxu0 0.0
        %2964 = vmatpush1.msra.mxu0 0.0
        %2965 = vmatprep.subr.mxu0 0.0
        %2966 = vmatpush1.msra.mxu0 0.0
        %2967 = vmatprep.subr.mxu0 0.0
        %2968 = vmatpush1.msra.mxu0 0.0
        %2969 = vmatprep.subr.mxu0 0.0
        %2970 = vmatpush1.msra.mxu0 0.0
        %2971 = vmatprep.subr.mxu0 0.0
        %2972 = vmatpush1.msra.mxu0 0.0
        %2973 = vmatprep.subr.mxu0 0.0
        %2974 = vmatpush1.msra.mxu0 0.0
        %2975 = vmatprep.subr.mxu0 0.0
        %2976 = vmatpush1.msra.mxu0 0.0
        %2977 = vmatprep.subr.mxu0 0.0
        %2978 = vmatpush1.msra.mxu0 0.0
        %2979 = vmatprep.subr.mxu0 0.0
        %2980 = vmatpush1.msra.mxu0 0.0
        %2981 = vmatprep.subr.mxu0 0.0
        %2982 = vmatpush1.msra.mxu0 0.0
        %2983 = vmatprep.subr.mxu0 0.0
        %2984 = vmatpush1.msra.mxu0 0.0
        %2985 = vmatprep.subr.mxu0 0.0
        %2986 = vmatpush1.msra.mxu0 0.0
        %2987 = vmatprep.subr.mxu0 0.0
        %2988 = vmatpush1.msra.mxu0 0.0
        %2989 = vmatprep.subr.mxu0 0.0
        %2990 = vmatpush1.msra.mxu0 0.0
        %2991 = vmatprep.subr.mxu0 0.0
        %2992 = vmatpush1.msra.mxu0 0.0
        %2993 = vmatprep.subr.mxu0 0.0
        %2994 = vmatpush1.msra.mxu0 0.0
        %2995 = vmatprep.subr.mxu0 0.0
        %2996 = vmatpush1.msra.mxu0 0.0
        %2997 = vmatprep.subr.mxu0 0.0
        %2998 = vmatpush1.msra.mxu0 0.0
        %2999 = vmatprep.subr.mxu0 0.0
        %3000 = vmatpush1.msra.mxu0 0.0
        %3001 = vmatprep.subr.mxu0 0.0
        %3002 = vmatpush1.msra.mxu0 0.0
        %3003 = vmatprep.subr.mxu0 0.0
        %3004 = vmatpush1.msra.mxu0 0.0
        %3005 = vmatprep.mubr.f32.mxu0 0.0
        %3006 = vmatmul.mubr.f32.gmra.mrb[0].mxu0 %v2939
        %v3007 = vpop.f32.mrb[0].mxu0
        %v3008 = vadd.f32 0.0, %v3007
        %v3009 = vpop.f32.mrb[0].mxu0
        %3010 = vdwg.mxu0
        %3012 = vrot.lane.b32.xlu0 %v905, 64
        %v3013 = vpop.permute.xlu0 %3012
        %v3016 = vsel %vm1541, %v2927, 0
        %3018 = vmatprep.subr.mxu0 0.0
        %3019 = vmatpush1.msra.mxu0 %v3013
        %3020 = vmatprep.subr.mxu0 0.0
        %3021 = vmatpush1.msra.mxu0 0.0
        %3022 = vmatprep.subr.mxu0 0.0
        %3023 = vmatpush1.msra.mxu0 0.0
        %3024 = vmatprep.subr.mxu0 0.0
        %3025 = vmatpush1.msra.mxu0 0.0
        %3026 = vmatprep.subr.mxu0 0.0
        %3027 = vmatpush1.msra.mxu0 0.0
        %3028 = vmatprep.subr.mxu0 0.0
        %3029 = vmatpush1.msra.mxu0 0.0
        %3030 = vmatprep.subr.mxu0 0.0
        %3031 = vmatpush1.msra.mxu0 0.0
        %3032 = vmatprep.subr.mxu0 0.0
        %3033 = vmatpush1.msra.mxu0 0.0
        %3034 = vmatprep.subr.mxu0 0.0
        %3035 = vmatpush1.msra.mxu0 0.0
        %3036 = vmatprep.subr.mxu0 0.0
        %3037 = vmatpush1.msra.mxu0 0.0
        %3038 = vmatprep.subr.mxu0 0.0
        %3039 = vmatpush1.msra.mxu0 0.0
        %3040 = vmatprep.subr.mxu0 0.0
        %3041 = vmatpush1.msra.mxu0 0.0
        %3042 = vmatprep.subr.mxu0 0.0
        %3043 = vmatpush1.msra.mxu0 0.0
        %3044 = vmatprep.subr.mxu0 0.0
        %3045 = vmatpush1.msra.mxu0 0.0
        %3046 = vmatprep.subr.mxu0 0.0
        %3047 = vmatpush1.msra.mxu0 0.0
        %3048 = vmatprep.subr.mxu0 0.0
        %3049 = vmatpush1.msra.mxu0 0.0
        %3050 = vmatprep.subr.mxu0 0.0
        %3051 = vmatpush1.msra.mxu0 0.0
        %3052 = vmatprep.subr.mxu0 0.0
        %3053 = vmatpush1.msra.mxu0 0.0
        %3054 = vmatprep.subr.mxu0 0.0
        %3055 = vmatpush1.msra.mxu0 0.0
        %3056 = vmatprep.subr.mxu0 0.0
        %3057 = vmatpush1.msra.mxu0 0.0
        %3058 = vmatprep.subr.mxu0 0.0
        %3059 = vmatpush1.msra.mxu0 0.0
        %3060 = vmatprep.subr.mxu0 0.0
        %3061 = vmatpush1.msra.mxu0 0.0
        %3062 = vmatprep.subr.mxu0 0.0
        %3063 = vmatpush1.msra.mxu0 0.0
        %3064 = vmatprep.subr.mxu0 0.0
        %3065 = vmatpush1.msra.mxu0 0.0
        %3066 = vmatprep.subr.mxu0 0.0
        %3067 = vmatpush1.msra.mxu0 0.0
        %3068 = vmatprep.subr.mxu0 0.0
        %3069 = vmatpush1.msra.mxu0 0.0
        %3070 = vmatprep.subr.mxu0 0.0
        %3071 = vmatpush1.msra.mxu0 0.0
        %3072 = vmatprep.subr.mxu0 0.0
        %3073 = vmatpush1.msra.mxu0 0.0
        %3074 = vmatprep.subr.mxu0 0.0
        %3075 = vmatpush1.msra.mxu0 0.0
        %3076 = vmatprep.subr.mxu0 0.0
        %3077 = vmatpush1.msra.mxu0 0.0
        %3078 = vmatprep.subr.mxu0 0.0
        %3079 = vmatpush1.msra.mxu0 0.0
        %3080 = vmatprep.subr.mxu0 0.0
        %3081 = vmatpush1.msra.mxu0 0.0
        %3082 = vmatprep.mubr.f32.mxu0 0.0
        %3083 = vmatmul.mubr.f32.gmra.mrb[0].mxu0 %v3016
        %v3084 = vpop.f32.mrb[0].mxu0
        %v3085 = vadd.f32 0.0, %v3084
        %v3086 = vpop.f32.mrb[0].mxu0
        %3087 = vdwg.mxu0
        %3089 = vrot.lane.b32.xlu0 %v910, 64
        %v3090 = vpop.permute.xlu0 %3089
        %v3093 = vsel %vm1541, %v2928, 0
        %3095 = vmatprep.subr.mxu0 0.0
        %3096 = vmatpush1.msra.mxu0 %v3090
        %3097 = vmatprep.subr.mxu0 0.0
        %3098 = vmatpush1.msra.mxu0 0.0
        %3099 = vmatprep.subr.mxu0 0.0
        %3100 = vmatpush1.msra.mxu0 0.0
        %3101 = vmatprep.subr.mxu0 0.0
        %3102 = vmatpush1.msra.mxu0 0.0
        %3103 = vmatprep.subr.mxu0 0.0
        %3104 = vmatpush1.msra.mxu0 0.0
        %3105 = vmatprep.subr.mxu0 0.0
        %3106 = vmatpush1.msra.mxu0 0.0
        %3107 = vmatprep.subr.mxu0 0.0
        %3108 = vmatpush1.msra.mxu0 0.0
        %3109 = vmatprep.subr.mxu0 0.0
        %3110 = vmatpush1.msra.mxu0 0.0
        %3111 = vmatprep.subr.mxu0 0.0
        %3112 = vmatpush1.msra.mxu0 0.0
        %3113 = vmatprep.subr.mxu0 0.0
        %3114 = vmatpush1.msra.mxu0 0.0
        %3115 = vmatprep.subr.mxu0 0.0
        %3116 = vmatpush1.msra.mxu0 0.0
        %3117 = vmatprep.subr.mxu0 0.0
        %3118 = vmatpush1.msra.mxu0 0.0
        %3119 = vmatprep.subr.mxu0 0.0
        %3120 = vmatpush1.msra.mxu0 0.0
        %3121 = vmatprep.subr.mxu0 0.0
        %3122 = vmatpush1.msra.mxu0 0.0
        %3123 = vmatprep.subr.mxu0 0.0
        %3124 = vmatpush1.msra.mxu0 0.0
        %3125 = vmatprep.subr.mxu0 0.0
        %3126 = vmatpush1.msra.mxu0 0.0
        %3127 = vmatprep.subr.mxu0 0.0
        %3128 = vmatpush1.msra.mxu0 0.0
        %3129 = vmatprep.subr.mxu0 0.0
        %3130 = vmatpush1.msra.mxu0 0.0
        %3131 = vmatprep.subr.mxu0 0.0
        %3132 = vmatpush1.msra.mxu0 0.0
        %3133 = vmatprep.subr.mxu0 0.0
        %3134 = vmatpush1.msra.mxu0 0.0
        %3135 = vmatprep.subr.mxu0 0.0
        %3136 = vmatpush1.msra.mxu0 0.0
        %3137 = vmatprep.subr.mxu0 0.0
        %3138 = vmatpush1.msra.mxu0 0.0
        %3139 = vmatprep.subr.mxu0 0.0
        %3140 = vmatpush1.msra.mxu0 0.0
        %3141 = vmatprep.subr.mxu0 0.0
        %3142 = vmatpush1.msra.mxu0 0.0
        %3143 = vmatprep.subr.mxu0 0.0
        %3144 = vmatpush1.msra.mxu0 0.0
        %3145 = vmatprep.subr.mxu0 0.0
        %3146 = vmatpush1.msra.mxu0 0.0
        %3147 = vmatprep.subr.mxu0 0.0
        %3148 = vmatpush1.msra.mxu0 0.0
        %3149 = vmatprep.subr.mxu0 0.0
        %3150 = vmatpush1.msra.mxu0 0.0
        %3151 = vmatprep.subr.mxu0 0.0
        %3152 = vmatpush1.msra.mxu0 0.0
        %3153 = vmatprep.subr.mxu0 0.0
        %3154 = vmatpush1.msra.mxu0 0.0
        %3155 = vmatprep.subr.mxu0 0.0
        %3156 = vmatpush1.msra.mxu0 0.0
        %3157 = vmatprep.subr.mxu0 0.0
        %3158 = vmatpush1.msra.mxu0 0.0
        %3159 = vmatprep.mubr.f32.mxu0 0.0
        %3160 = vmatmul.mubr.f32.gmra.mrb[0].mxu0 %v3093
        %v3161 = vpop.f32.mrb[0].mxu0
        %v3162 = vadd.f32 0.0, %v3161
        %v3163 = vpop.f32.mrb[0].mxu0
        %3164 = vdwg.mxu0
        %3166 = vrot.lane.b32.xlu0 %v913, 64
        %v3167 = vpop.permute.xlu0 %3166
        %v3170 = vsel %vm1541, %v2929, 0
        %3172 = vmatprep.subr.mxu0 0.0
        %3173 = vmatpush1.msra.mxu0 %v3167
        %3174 = vmatprep.subr.mxu0 0.0
        %3175 = vmatpush1.msra.mxu0 0.0
        %3176 = vmatprep.subr.mxu0 0.0
        %3177 = vmatpush1.msra.mxu0 0.0
        %3178 = vmatprep.subr.mxu0 0.0
        %3179 = vmatpush1.msra.mxu0 0.0
        %3180 = vmatprep.subr.mxu0 0.0
        %3181 = vmatpush1.msra.mxu0 0.0
        %3182 = vmatprep.subr.mxu0 0.0
        %3183 = vmatpush1.msra.mxu0 0.0
        %3184 = vmatprep.subr.mxu0 0.0
        %3185 = vmatpush1.msra.mxu0 0.0
        %3186 = vmatprep.subr.mxu0 0.0
        %3187 = vmatpush1.msra.mxu0 0.0
        %3188 = vmatprep.subr.mxu0 0.0
        %3189 = vmatpush1.msra.mxu0 0.0
        %3190 = vmatprep.subr.mxu0 0.0
        %3191 = vmatpush1.msra.mxu0 0.0
        %3192 = vmatprep.subr.mxu0 0.0
        %3193 = vmatpush1.msra.mxu0 0.0
        %3194 = vmatprep.subr.mxu0 0.0
        %3195 = vmatpush1.msra.mxu0 0.0
        %3196 = vmatprep.subr.mxu0 0.0
        %3197 = vmatpush1.msra.mxu0 0.0
        %3198 = vmatprep.subr.mxu0 0.0
        %3199 = vmatpush1.msra.mxu0 0.0
        %3200 = vmatprep.subr.mxu0 0.0
        %3201 = vmatpush1.msra.mxu0 0.0
        %3202 = vmatprep.subr.mxu0 0.0
        %3203 = vmatpush1.msra.mxu0 0.0
        %3204 = vmatprep.subr.mxu0 0.0
        %3205 = vmatpush1.msra.mxu0 0.0
        %3206 = vmatprep.subr.mxu0 0.0
        %3207 = vmatpush1.msra.mxu0 0.0
        %3208 = vmatprep.subr.mxu0 0.0
        %3209 = vmatpush1.msra.mxu0 0.0
        %3210 = vmatprep.subr.mxu0 0.0
        %3211 = vmatpush1.msra.mxu0 0.0
        %3212 = vmatprep.subr.mxu0 0.0
        %3213 = vmatpush1.msra.mxu0 0.0
        %3214 = vmatprep.subr.mxu0 0.0
        %3215 = vmatpush1.msra.mxu0 0.0
        %3216 = vmatprep.subr.mxu0 0.0
        %3217 = vmatpush1.msra.mxu0 0.0
        %3218 = vmatprep.subr.mxu0 0.0
        %3219 = vmatpush1.msra.mxu0 0.0
        %3220 = vmatprep.subr.mxu0 0.0
        %3221 = vmatpush1.msra.mxu0 0.0
        %3222 = vmatprep.subr.mxu0 0.0
        %3223 = vmatpush1.msra.mxu0 0.0
        %3224 = vmatprep.subr.mxu0 0.0
        %3225 = vmatpush1.msra.mxu0 0.0
        %3226 = vmatprep.subr.mxu0 0.0
        %3227 = vmatpush1.msra.mxu0 0.0
        %3228 = vmatprep.subr.mxu0 0.0
        %3229 = vmatpush1.msra.mxu0 0.0
        %3230 = vmatprep.subr.mxu0 0.0
        %3231 = vmatpush1.msra.mxu0 0.0
        %3232 = vmatprep.subr.mxu0 0.0
        %3233 = vmatpush1.msra.mxu0 0.0
        %3234 = vmatprep.subr.mxu0 0.0
        %3235 = vmatpush1.msra.mxu0 0.0
        %3236 = vmatprep.mubr.f32.mxu0 0.0
        %3237 = vmatmul.mubr.f32.gmra.mrb[0].mxu0 %v3170
        %v3238 = vpop.f32.mrb[0].mxu0
        %v3239 = vadd.f32 0.0, %v3238
        %v3240 = vpop.f32.mrb[0].mxu0
        %3241 = vdwg.mxu0
        %3243 = vrot.lane.b32.xlu0 %v918, 64
        %v3244 = vpop.permute.xlu0 %3243
        %v3247 = vsel %vm1541, %v2930, 0
        %3249 = vmatprep.subr.mxu0 0.0
        %3250 = vmatpush1.msra.mxu0 %v3244
        %3251 = vmatprep.subr.mxu0 0.0
        %3252 = vmatpush1.msra.mxu0 0.0
        %3253 = vmatprep.subr.mxu0 0.0
        %3254 = vmatpush1.msra.mxu0 0.0
        %3255 = vmatprep.subr.mxu0 0.0
        %3256 = vmatpush1.msra.mxu0 0.0
        %3257 = vmatprep.subr.mxu0 0.0
        %3258 = vmatpush1.msra.mxu0 0.0
        %3259 = vmatprep.subr.mxu0 0.0
        %3260 = vmatpush1.msra.mxu0 0.0
        %3261 = vmatprep.subr.mxu0 0.0
        %3262 = vmatpush1.msra.mxu0 0.0
        %3263 = vmatprep.subr.mxu0 0.0
        %3264 = vmatpush1.msra.mxu0 0.0
        %3265 = vmatprep.subr.mxu0 0.0
        %3266 = vmatpush1.msra.mxu0 0.0
        %3267 = vmatprep.subr.mxu0 0.0
        %3268 = vmatpush1.msra.mxu0 0.0
        %3269 = vmatprep.subr.mxu0 0.0
        %3270 = vmatpush1.msra.mxu0 0.0
        %3271 = vmatprep.subr.mxu0 0.0
        %3272 = vmatpush1.msra.mxu0 0.0
        %3273 = vmatprep.subr.mxu0 0.0
        %3274 = vmatpush1.msra.mxu0 0.0
        %3275 = vmatprep.subr.mxu0 0.0
        %3276 = vmatpush1.msra.mxu0 0.0
        %3277 = vmatprep.subr.mxu0 0.0
        %3278 = vmatpush1.msra.mxu0 0.0
        %3279 = vmatprep.subr.mxu0 0.0
        %3280 = vmatpush1.msra.mxu0 0.0
        %3281 = vmatprep.subr.mxu0 0.0
        %3282 = vmatpush1.msra.mxu0 0.0
        %3283 = vmatprep.subr.mxu0 0.0
        %3284 = vmatpush1.msra.mxu0 0.0
        %3285 = vmatprep.subr.mxu0 0.0
        %3286 = vmatpush1.msra.mxu0 0.0
        %3287 = vmatprep.subr.mxu0 0.0
        %3288 = vmatpush1.msra.mxu0 0.0
        %3289 = vmatprep.subr.mxu0 0.0
        %3290 = vmatpush1.msra.mxu0 0.0
        %3291 = vmatprep.subr.mxu0 0.0
        %3292 = vmatpush1.msra.mxu0 0.0
        %3293 = vmatprep.subr.mxu0 0.0
        %3294 = vmatpush1.msra.mxu0 0.0
        %3295 = vmatprep.subr.mxu0 0.0
        %3296 = vmatpush1.msra.mxu0 0.0
        %3297 = vmatprep.subr.mxu0 0.0
        %3298 = vmatpush1.msra.mxu0 0.0
        %3299 = vmatprep.subr.mxu0 0.0
        %3300 = vmatpush1.msra.mxu0 0.0
        %3301 = vmatprep.subr.mxu0 0.0
        %3302 = vmatpush1.msra.mxu0 0.0
        %3303 = vmatprep.subr.mxu0 0.0
        %3304 = vmatpush1.msra.mxu0 0.0
        %3305 = vmatprep.subr.mxu0 0.0
        %3306 = vmatpush1.msra.mxu0 0.0
        %3307 = vmatprep.subr.mxu0 0.0
        %3308 = vmatpush1.msra.mxu0 0.0
        %3309 = vmatprep.subr.mxu0 0.0
        %3310 = vmatpush1.msra.mxu0 0.0
        %3311 = vmatprep.subr.mxu0 0.0
        %3312 = vmatpush1.msra.mxu0 0.0
        %3313 = vmatprep.mubr.f32.mxu0 0.0
        %3314 = vmatmul.mubr.f32.gmra.mrb[0].mxu0 %v3247
        %v3315 = vpop.f32.mrb[0].mxu0
        %v3316 = vadd.f32 0.0, %v3315
        %v3317 = vpop.f32.mrb[0].mxu0
        %3318 = vdwg.mxu0
        %3320 = vrot.lane.b32.xlu0 %v921, 64
        %v3321 = vpop.permute.xlu0 %3320
        %v3324 = vsel %vm1541, %v2931, 0
        %3326 = vmatprep.subr.mxu0 0.0
        %3327 = vmatpush1.msra.mxu0 %v3321
        %3328 = vmatprep.subr.mxu0 0.0
        %3329 = vmatpush1.msra.mxu0 0.0
        %3330 = vmatprep.subr.mxu0 0.0
        %3331 = vmatpush1.msra.mxu0 0.0
        %3332 = vmatprep.subr.mxu0 0.0
        %3333 = vmatpush1.msra.mxu0 0.0
        %3334 = vmatprep.subr.mxu0 0.0
        %3335 = vmatpush1.msra.mxu0 0.0
        %3336 = vmatprep.subr.mxu0 0.0
        %3337 = vmatpush1.msra.mxu0 0.0
        %3338 = vmatprep.subr.mxu0 0.0
        %3339 = vmatpush1.msra.mxu0 0.0
        %3340 = vmatprep.subr.mxu0 0.0
        %3341 = vmatpush1.msra.mxu0 0.0
        %3342 = vmatprep.subr.mxu0 0.0
        %3343 = vmatpush1.msra.mxu0 0.0
        %3344 = vmatprep.subr.mxu0 0.0
        %3345 = vmatpush1.msra.mxu0 0.0
        %3346 = vmatprep.subr.mxu0 0.0
        %3347 = vmatpush1.msra.mxu0 0.0
        %3348 = vmatprep.subr.mxu0 0.0
        %3349 = vmatpush1.msra.mxu0 0.0
        %3350 = vmatprep.subr.mxu0 0.0
        %3351 = vmatpush1.msra.mxu0 0.0
        %3352 = vmatprep.subr.mxu0 0.0
        %3353 = vmatpush1.msra.mxu0 0.0
        %3354 = vmatprep.subr.mxu0 0.0
        %3355 = vmatpush1.msra.mxu0 0.0
        %3356 = vmatprep.subr.mxu0 0.0
        %3357 = vmatpush1.msra.mxu0 0.0
        %3358 = vmatprep.subr.mxu0 0.0
        %3359 = vmatpush1.msra.mxu0 0.0
        %3360 = vmatprep.subr.mxu0 0.0
        %3361 = vmatpush1.msra.mxu0 0.0
        %3362 = vmatprep.subr.mxu0 0.0
        %3363 = vmatpush1.msra.mxu0 0.0
        %3364 = vmatprep.subr.mxu0 0.0
        %3365 = vmatpush1.msra.mxu0 0.0
        %3366 = vmatprep.subr.mxu0 0.0
        %3367 = vmatpush1.msra.mxu0 0.0
        %3368 = vmatprep.subr.mxu0 0.0
        %3369 = vmatpush1.msra.mxu0 0.0
        %3370 = vmatprep.subr.mxu0 0.0
        %3371 = vmatpush1.msra.mxu0 0.0
        %3372 = vmatprep.subr.mxu0 0.0
        %3373 = vmatpush1.msra.mxu0 0.0
        %3374 = vmatprep.subr.mxu0 0.0
        %3375 = vmatpush1.msra.mxu0 0.0
        %3376 = vmatprep.subr.mxu0 0.0
        %3377 = vmatpush1.msra.mxu0 0.0
        %3378 = vmatprep.subr.mxu0 0.0
        %3379 = vmatpush1.msra.mxu0 0.0
        %3380 = vmatprep.subr.mxu0 0.0
        %3381 = vmatpush1.msra.mxu0 0.0
        %3382 = vmatprep.subr.mxu0 0.0
        %3383 = vmatpush1.msra.mxu0 0.0
        %3384 = vmatprep.subr.mxu0 0.0
        %3385 = vmatpush1.msra.mxu0 0.0
        %3386 = vmatprep.subr.mxu0 0.0
        %3387 = vmatpush1.msra.mxu0 0.0
        %3388 = vmatprep.subr.mxu0 0.0
        %3389 = vmatpush1.msra.mxu0 0.0
        %3390 = vmatprep.mubr.f32.mxu0 0.0
        %3391 = vmatmul.mubr.f32.gmra.mrb[0].mxu0 %v3324
        %v3392 = vpop.f32.mrb[0].mxu0
        %v3393 = vadd.f32 0.0, %v3392
        %v3394 = vpop.f32.mrb[0].mxu0
        %3395 = vdwg.mxu0
        %3397 = vrot.lane.b32.xlu0 %v926, 64
        %v3398 = vpop.permute.xlu0 %3397
        %v3401 = vsel %vm1541, %v2932, 0
        %3403 = vmatprep.subr.mxu0 0.0
        %3404 = vmatpush1.msra.mxu0 %v3398
        %3405 = vmatprep.subr.mxu0 0.0
        %3406 = vmatpush1.msra.mxu0 0.0
        %3407 = vmatprep.subr.mxu0 0.0
        %3408 = vmatpush1.msra.mxu0 0.0
        %3409 = vmatprep.subr.mxu0 0.0
        %3410 = vmatpush1.msra.mxu0 0.0
        %3411 = vmatprep.subr.mxu0 0.0
        %3412 = vmatpush1.msra.mxu0 0.0
        %3413 = vmatprep.subr.mxu0 0.0
        %3414 = vmatpush1.msra.mxu0 0.0
        %3415 = vmatprep.subr.mxu0 0.0
        %3416 = vmatpush1.msra.mxu0 0.0
        %3417 = vmatprep.subr.mxu0 0.0
        %3418 = vmatpush1.msra.mxu0 0.0
        %3419 = vmatprep.subr.mxu0 0.0
        %3420 = vmatpush1.msra.mxu0 0.0
        %3421 = vmatprep.subr.mxu0 0.0
        %3422 = vmatpush1.msra.mxu0 0.0
        %3423 = vmatprep.subr.mxu0 0.0
        %3424 = vmatpush1.msra.mxu0 0.0
        %3425 = vmatprep.subr.mxu0 0.0
        %3426 = vmatpush1.msra.mxu0 0.0
        %3427 = vmatprep.subr.mxu0 0.0
        %3428 = vmatpush1.msra.mxu0 0.0
        %3429 = vmatprep.subr.mxu0 0.0
        %3430 = vmatpush1.msra.mxu0 0.0
        %3431 = vmatprep.subr.mxu0 0.0
        %3432 = vmatpush1.msra.mxu0 0.0
        %3433 = vmatprep.subr.mxu0 0.0
        %3434 = vmatpush1.msra.mxu0 0.0
        %3435 = vmatprep.subr.mxu0 0.0
        %3436 = vmatpush1.msra.mxu0 0.0
        %3437 = vmatprep.subr.mxu0 0.0
        %3438 = vmatpush1.msra.mxu0 0.0
        %3439 = vmatprep.subr.mxu0 0.0
        %3440 = vmatpush1.msra.mxu0 0.0
        %3441 = vmatprep.subr.mxu0 0.0
        %3442 = vmatpush1.msra.mxu0 0.0
        %3443 = vmatprep.subr.mxu0 0.0
        %3444 = vmatpush1.msra.mxu0 0.0
        %3445 = vmatprep.subr.mxu0 0.0
        %3446 = vmatpush1.msra.mxu0 0.0
        %3447 = vmatprep.subr.mxu0 0.0
        %3448 = vmatpush1.msra.mxu0 0.0
        %3449 = vmatprep.subr.mxu0 0.0
        %3450 = vmatpush1.msra.mxu0 0.0
        %3451 = vmatprep.subr.mxu0 0.0
        %3452 = vmatpush1.msra.mxu0 0.0
        %3453 = vmatprep.subr.mxu0 0.0
        %3454 = vmatpush1.msra.mxu0 0.0
        %3455 = vmatprep.subr.mxu0 0.0
        %3456 = vmatpush1.msra.mxu0 0.0
        %3457 = vmatprep.subr.mxu0 0.0
        %3458 = vmatpush1.msra.mxu0 0.0
        %3459 = vmatprep.subr.mxu0 0.0
        %3460 = vmatpush1.msra.mxu0 0.0
        %3461 = vmatprep.subr.mxu0 0.0
        %3462 = vmatpush1.msra.mxu0 0.0
        %3463 = vmatprep.subr.mxu0 0.0
        %3464 = vmatpush1.msra.mxu0 0.0
        %3465 = vmatprep.subr.mxu0 0.0
        %3466 = vmatpush1.msra.mxu0 0.0
        %3467 = vmatprep.mubr.f32.mxu0 0.0
        %3468 = vmatmul.mubr.f32.gmra.mrb[0].mxu0 %v3401
        %v3469 = vpop.f32.mrb[0].mxu0
        %v3470 = vadd.f32 0.0, %v3469
        %v3471 = vpop.f32.mrb[0].mxu0
        %3472 = vdwg.mxu0
        %3474 = vrot.lane.b32.xlu0 %v929, 64
        %v3475 = vpop.permute.xlu0 %3474
        %v3478 = vsel %vm1541, %v2933, 0
        %3480 = vmatprep.subr.mxu0 0.0
        %3481 = vmatpush1.msra.mxu0 %v3475
        %3482 = vmatprep.subr.mxu0 0.0
        %3483 = vmatpush1.msra.mxu0 0.0
        %3484 = vmatprep.subr.mxu0 0.0
        %3485 = vmatpush1.msra.mxu0 0.0
        %3486 = vmatprep.subr.mxu0 0.0
        %3487 = vmatpush1.msra.mxu0 0.0
        %3488 = vmatprep.subr.mxu0 0.0
        %3489 = vmatpush1.msra.mxu0 0.0
        %3490 = vmatprep.subr.mxu0 0.0
        %3491 = vmatpush1.msra.mxu0 0.0
        %3492 = vmatprep.subr.mxu0 0.0
        %3493 = vmatpush1.msra.mxu0 0.0
        %3494 = vmatprep.subr.mxu0 0.0
        %3495 = vmatpush1.msra.mxu0 0.0
        %3496 = vmatprep.subr.mxu0 0.0
        %3497 = vmatpush1.msra.mxu0 0.0
        %3498 = vmatprep.subr.mxu0 0.0
        %3499 = vmatpush1.msra.mxu0 0.0
        %3500 = vmatprep.subr.mxu0 0.0
        %3501 = vmatpush1.msra.mxu0 0.0
        %3502 = vmatprep.subr.mxu0 0.0
        %3503 = vmatpush1.msra.mxu0 0.0
        %3504 = vmatprep.subr.mxu0 0.0
        %3505 = vmatpush1.msra.mxu0 0.0
        %3506 = vmatprep.subr.mxu0 0.0
        %3507 = vmatpush1.msra.mxu0 0.0
        %3508 = vmatprep.subr.mxu0 0.0
        %3509 = vmatpush1.msra.mxu0 0.0
        %3510 = vmatprep.subr.mxu0 0.0
        %3511 = vmatpush1.msra.mxu0 0.0
        %3512 = vmatprep.subr.mxu0 0.0
        %3513 = vmatpush1.msra.mxu0 0.0
        %3514 = vmatprep.subr.mxu0 0.0
        %3515 = vmatpush1.msra.mxu0 0.0
        %3516 = vmatprep.subr.mxu0 0.0
        %3517 = vmatpush1.msra.mxu0 0.0
        %3518 = vmatprep.subr.mxu0 0.0
        %3519 = vmatpush1.msra.mxu0 0.0
        %3520 = vmatprep.subr.mxu0 0.0
        %3521 = vmatpush1.msra.mxu0 0.0
        %3522 = vmatprep.subr.mxu0 0.0
        %3523 = vmatpush1.msra.mxu0 0.0
        %3524 = vmatprep.subr.mxu0 0.0
        %3525 = vmatpush1.msra.mxu0 0.0
        %3526 = vmatprep.subr.mxu0 0.0
        %3527 = vmatpush1.msra.mxu0 0.0
        %3528 = vmatprep.subr.mxu0 0.0
        %3529 = vmatpush1.msra.mxu0 0.0
        %3530 = vmatprep.subr.mxu0 0.0
        %3531 = vmatpush1.msra.mxu0 0.0
        %3532 = vmatprep.subr.mxu0 0.0
        %3533 = vmatpush1.msra.mxu0 0.0
        %3534 = vmatprep.subr.mxu0 0.0
        %3535 = vmatpush1.msra.mxu0 0.0
        %3536 = vmatprep.subr.mxu0 0.0
        %3537 = vmatpush1.msra.mxu0 0.0
        %3538 = vmatprep.subr.mxu0 0.0
        %3539 = vmatpush1.msra.mxu0 0.0
        %3540 = vmatprep.subr.mxu0 0.0
        %3541 = vmatpush1.msra.mxu0 0.0
        %3542 = vmatprep.subr.mxu0 0.0
        %3543 = vmatpush1.msra.mxu0 0.0
        %3544 = vmatprep.mubr.f32.mxu0 0.0
        %3545 = vmatmul.mubr.f32.gmra.mrb[0].mxu0 %v3478
        %v3546 = vpop.f32.mrb[0].mxu0
        %v3547 = vadd.f32 0.0, %v3546
        %v3548 = vpop.f32.mrb[0].mxu0
        %3549 = vdwg.mxu0
        %v3550 = vpack.c.bf16 %v3085, %v3008
        %v3551 = vpack.c.bf16 %v3239, %v3162
        %v3552 = vpack.c.bf16 %v3393, %v3316
        %v3553 = vpack.c.bf16 %v3547, %v3470
        %3558 = vrot.lane.b32.xlu0 %v3550, 64
        %v3559 = vpop.permute.xlu0 %3558
        %3560 = vrot.lane.b32.xlu0 %v3551, 64
        %v3561 = vpop.permute.xlu0 %3560
        %3562 = vrot.lane.b32.xlu0 %v3552, 64
        %v3563 = vpop.permute.xlu0 %3562
        %3564 = vrot.lane.b32.xlu0 %v3553, 64
        %v3565 = vpop.permute.xlu0 %3564
        %vm3570 = vcmask 1048064
        %3571 = vst.msk [vmem:[#allocation3] sm:$0xff] %vm3570, %v3559
        %3572 = vst.msk [vmem:[#allocation3 + $0x8] sm:$0xff] %vm3570, %v3561
        %3573 = vst.msk [vmem:[#allocation3 + $0x10] sm:$0xff] %vm3570, %v3563
        %3574 = vst.msk [vmem:[#allocation3 + $0x18] sm:$0xff] %vm3570, %v3565
        %v3575 = vld [vmem:[#allocation3] sm:$0xff]
        %v3576 = vld [vmem:[#allocation3 + $0x8] sm:$0xff]
        %v3577 = vld [vmem:[#allocation3 + $0x10] sm:$0xff]
        %v3578 = vld [vmem:[#allocation3 + $0x18] sm:$0xff]
        %s3579 = smul.u32 %s31, 16
        %s3580 = smul.addr %s3579, 4
        %s3581 = scalar_lea.vmem [#allocation12], %s3580
        %v3582 = vld [vmem:[%s3581] sm:$0xf]
        %v3583 = vld [vmem:[%s3581 + $0x4] sm:$0xf]
        %v3584 = vld [vmem:[%s3581 + $0x8] sm:$0xf]
        %v3585 = vld [vmem:[%s3581 + $0xc] sm:$0xf]
        %v3586 = vld [vmem:[%s3581 + $0x10] sm:$0xf]
        %v3587 = vld [vmem:[%s3581 + $0x14] sm:$0xf]
        %v3588 = vld [vmem:[%s3581 + $0x18] sm:$0xf]
        %v3589 = vld [vmem:[%s3581 + $0x1c] sm:$0xf]
        %v3590 = vld [vmem:[%s3581 + $0x20] sm:$0xf]
        %v3591 = vld [vmem:[%s3581 + $0x24] sm:$0xf]
        %v3592 = vld [vmem:[%s3581 + $0x28] sm:$0xf]
        %v3593 = vld [vmem:[%s3581 + $0x2c] sm:$0xf]
        %v3594 = vld [vmem:[%s3581 + $0x30] sm:$0xf]
        %v3595 = vld [vmem:[%s3581 + $0x34] sm:$0xf]
        %v3596 = vld [vmem:[%s3581 + $0x38] sm:$0xf]
        %v3597 = vld [vmem:[%s3581 + $0x3c] sm:$0xf]
        %v3614 = vunpack.c.l.b16 %v3582
        %v3615 = vunpack.c.l.b16 %v3583
        %v3616 = vunpack.c.l.b16 %v3584
        %v3617 = vunpack.c.l.b16 %v3585
        %v3618 = vunpack.c.l.b16 %v3586
        %v3619 = vunpack.c.l.b16 %v3587
        %v3620 = vunpack.c.l.b16 %v3588
        %v3621 = vunpack.c.l.b16 %v3589
        %v3622 = vunpack.c.l.b16 %v3590
        %v3623 = vunpack.c.l.b16 %v3591
        %v3624 = vunpack.c.l.b16 %v3592
        %v3625 = vunpack.c.l.b16 %v3593
        %v3626 = vunpack.c.l.b16 %v3594
        %v3627 = vunpack.c.l.b16 %v3595
        %v3628 = vunpack.c.l.b16 %v3596
        %v3629 = vunpack.c.l.b16 %v3597
        %v3630 = vpack.c.b16 %v3615, %v3614
        %v3631 = vpack.c.b16 %v3617, %v3616
        %v3632 = vpack.c.b16 %v3619, %v3618
        %v3633 = vpack.c.b16 %v3621, %v3620
        %v3634 = vpack.c.b16 %v3623, %v3622
        %v3635 = vpack.c.b16 %v3625, %v3624
        %v3636 = vpack.c.b16 %v3627, %v3626
        %v3637 = vpack.c.b16 %v3629, %v3628
        %3646 = vmatprep.subr.bf16.mxu0 0
        %3647 = vmatpush1.bf16.msra.mxu0 %v3630
        %3648 = vmatprep.subr.bf16.mxu0 0
        %3649 = vmatpush1.bf16.msra.mxu0 %v3631
        %3650 = vmatprep.subr.bf16.mxu0 0
        %3651 = vmatpush1.bf16.msra.mxu0 %v3632
        %3652 = vmatprep.subr.bf16.mxu0 0
        %3653 = vmatpush1.bf16.msra.mxu0 %v3633
        %3654 = vmatprep.subr.bf16.mxu0 0
        %3655 = vmatpush1.bf16.msra.mxu0 %v3634
        %3656 = vmatprep.subr.bf16.mxu0 0
        %3657 = vmatpush1.bf16.msra.mxu0 %v3635
        %3658 = vmatprep.subr.bf16.mxu0 0
        %3659 = vmatpush1.bf16.msra.mxu0 %v3636
        %3660 = vmatprep.subr.bf16.mxu0 0
        %3661 = vmatpush1.bf16.msra.mxu0 %v3637
        %3662 = vmatprep.subr.bf16.mxu0 0
        %3663 = vmatpush1.bf16.msra.mxu0 0
        %3664 = vmatprep.subr.bf16.mxu0 0
        %3665 = vmatpush1.bf16.msra.mxu0 0
        %3666 = vmatprep.subr.bf16.mxu0 0
        %3667 = vmatpush1.bf16.msra.mxu0 0
        %3668 = vmatprep.subr.bf16.mxu0 0
        %3669 = vmatpush1.bf16.msra.mxu0 0
        %3670 = vmatprep.subr.bf16.mxu0 0
        %3671 = vmatpush1.bf16.msra.mxu0 0
        %3672 = vmatprep.subr.bf16.mxu0 0
        %3673 = vmatpush1.bf16.msra.mxu0 0
        %3674 = vmatprep.subr.bf16.mxu0 0
        %3675 = vmatpush1.bf16.msra.mxu0 0
        %3676 = vmatprep.subr.bf16.mxu0 0
        %3677 = vmatpush1.bf16.msra.mxu0 0
        %3678 = vmatprep.mubr.bf16.mxu0 0
        %3679 = vmatmul.mubr.bf16.gmra.mrb[0].mxu0 %v3575
        %v3680 = vpop.f32.mrb[0].mxu0
        %v3681 = vadd.f32 0.0, %v3680
        %v3682 = vpop.f32.mrb[0].mxu0
        %v3683 = vpop.f32.mrb[0].mxu0
        %v3684 = vadd.f32 0.0, %v3683
        %v3685 = vpop.f32.mrb[0].mxu0
        %3686 = vmatprep.mubr.bf16.mxu0 0
        %3687 = vmatmul.mubr.bf16.gmra.mrb[0].mxu0 %v3576
        %v3688 = vpop.f32.mrb[0].mxu0
        %v3689 = vadd.f32 0.0, %v3688
        %v3690 = vpop.f32.mrb[0].mxu0
        %v3691 = vpop.f32.mrb[0].mxu0
        %v3692 = vadd.f32 0.0, %v3691
        %v3693 = vpop.f32.mrb[0].mxu0
        %3694 = vmatprep.mubr.bf16.mxu0 0
        %3695 = vmatmul.mubr.bf16.gmra.mrb[0].mxu0 %v3577
        %v3696 = vpop.f32.mrb[0].mxu0
        %v3697 = vadd.f32 0.0, %v3696
        %v3698 = vpop.f32.mrb[0].mxu0
        %v3699 = vpop.f32.mrb[0].mxu0
        %v3700 = vadd.f32 0.0, %v3699
        %v3701 = vpop.f32.mrb[0].mxu0
        %3702 = vmatprep.mubr.bf16.mxu0 0
        %3703 = vmatmul.mubr.bf16.gmra.mrb[0].mxu0 %v3578
        %v3704 = vpop.f32.mrb[0].mxu0
        %v3705 = vadd.f32 0.0, %v3704
        %v3706 = vpop.f32.mrb[0].mxu0
        %v3707 = vpop.f32.mrb[0].mxu0
        %v3708 = vadd.f32 0.0, %v3707
        %v3709 = vpop.f32.mrb[0].mxu0
        %3710 = vdwg.mxu0
        %v3711 = vadd.f32 %v484, %v3681
        %v3712 = vadd.f32 %v485, %v3684
        %v3713 = vadd.f32 %v486, %v3689
        %v3714 = vadd.f32 %v487, %v3692
        %v3715 = vadd.f32 %v488, %v3697
        %v3716 = vadd.f32 %v489, %v3700
        %v3717 = vadd.f32 %v490, %v3705
        %v3718 = vadd.f32 %v491, %v3708
        %v3719 = vlaneseq
        %v3720 = vshrl.u32 %v3719, 7
        %v3721 = vsub.s32 4, %v3720
        %v3722 = vrot.slane %v494, %v3721
        %v3723 = vadd.f32 %v3711, %v3722
        %v3724 = vadd.f32 %v3712, %v3722
        %v3725 = vadd.f32 %v3713, %v3722
        %v3726 = vadd.f32 %v3714, %v3722
        %v3727 = vadd.f32 %v3715, %v3722
        %v3728 = vadd.f32 %v3716, %v3722
        %v3729 = vadd.f32 %v3717, %v3722
        %v3730 = vadd.f32 %v3718, %v3722
        %3731 = vadd.xlane.f32.xlu0 %v3723
        %v3732 = vpop.xlane.xlu0 %3731
        %3733 = vadd.xlane.f32.xlu0 %v3724
        %v3734 = vpop.xlane.xlu0 %3733
        %3735 = vadd.xlane.f32.xlu0 %v3725
        %v3736 = vpop.xlane.xlu0 %3735
        %3737 = vadd.xlane.f32.xlu0 %v3726
        %v3738 = vpop.xlane.xlu0 %3737
        %3739 = vadd.xlane.f32.xlu0 %v3727
        %v3740 = vpop.xlane.xlu0 %3739
        %3741 = vadd.xlane.f32.xlu0 %v3728
        %v3742 = vpop.xlane.xlu0 %3741
        %3743 = vadd.xlane.f32.xlu0 %v3729
        %v3744 = vpop.xlane.xlu0 %3743
        %3745 = vadd.xlane.f32.xlu0 %v3730
        %v3746 = vpop.xlane.xlu0 %3745
        %v3747 = vmul.f32 %v3732, %v511
        %v3748 = vmul.f32 %v3734, %v511
        %v3749 = vmul.f32 %v3736, %v511
        %v3750 = vmul.f32 %v3738, %v511
        %v3751 = vmul.f32 %v3740, %v511
        %v3752 = vmul.f32 %v3742, %v511
        %v3753 = vmul.f32 %v3744, %v511
        %v3754 = vmul.f32 %v3746, %v511
        %v3755 = vsub.f32 %v3723, %v3747
        %v3756 = vsub.f32 %v3724, %v3748
        %v3757 = vsub.f32 %v3725, %v3749
        %v3758 = vsub.f32 %v3726, %v3750
        %v3759 = vsub.f32 %v3727, %v3751
        %v3760 = vsub.f32 %v3728, %v3752
        %v3761 = vsub.f32 %v3729, %v3753
        %v3762 = vsub.f32 %v3730, %v3754
        %v3763 = vmul.f32 %v3755, %v3755
        %v3764 = vmul.f32 %v3756, %v3756
        %v3765 = vmul.f32 %v3757, %v3757
        %v3766 = vmul.f32 %v3758, %v3758
        %v3767 = vmul.f32 %v3759, %v3759
        %v3768 = vmul.f32 %v3760, %v3760
        %v3769 = vmul.f32 %v3761, %v3761
        %v3770 = vmul.f32 %v3762, %v3762
        %3771 = vadd.xlane.f32.xlu0 %v3763
        %v3772 = vpop.xlane.xlu0 %3771
        %3773 = vadd.xlane.f32.xlu0 %v3764
        %v3774 = vpop.xlane.xlu0 %3773
        %3775 = vadd.xlane.f32.xlu0 %v3765
        %v3776 = vpop.xlane.xlu0 %3775
        %3777 = vadd.xlane.f32.xlu0 %v3766
        %v3778 = vpop.xlane.xlu0 %3777
        %3779 = vadd.xlane.f32.xlu0 %v3767
        %v3780 = vpop.xlane.xlu0 %3779
        %3781 = vadd.xlane.f32.xlu0 %v3768
        %v3782 = vpop.xlane.xlu0 %3781
        %3783 = vadd.xlane.f32.xlu0 %v3769
        %v3784 = vpop.xlane.xlu0 %3783
        %3785 = vadd.xlane.f32.xlu0 %v3770
        %v3786 = vpop.xlane.xlu0 %3785
        %v3787 = vmul.f32 %v3772, %v511
        %v3788 = vmul.f32 %v3774, %v511
        %v3789 = vmul.f32 %v3776, %v511
        %v3790 = vmul.f32 %v3778, %v511
        %v3791 = vmul.f32 %v3780, %v511
        %v3792 = vmul.f32 %v3782, %v511
        %v3793 = vmul.f32 %v3784, %v511
        %v3794 = vmul.f32 %v3786, %v511
        %v3795 = vadd.f32 %v3787, 1e-12
        %v3796 = vadd.f32 %v3788, 1e-12
        %v3797 = vadd.f32 %v3789, 1e-12
        %v3798 = vadd.f32 %v3790, 1e-12
        %v3799 = vadd.f32 %v3791, 1e-12
        %v3800 = vadd.f32 %v3792, 1e-12
        %v3801 = vadd.f32 %v3793, 1e-12
        %v3802 = vadd.f32 %v3794, 1e-12
        %v3803 = vrsqrt.pop %v3795
        %v3804 = vrsqrt.pop %v3796
        %v3805 = vrsqrt.pop %v3797
        %v3806 = vrsqrt.pop %v3798
        %v3807 = vrsqrt.pop %v3799
        %v3808 = vrsqrt.pop %v3800
        %v3809 = vrsqrt.pop %v3801
        %v3810 = vrsqrt.pop %v3802
        %v3811 = vmul.f32 %v3755, %v3803
        %v3812 = vmul.f32 %v3756, %v3804
        %v3813 = vmul.f32 %v3757, %v3805
        %v3814 = vmul.f32 %v3758, %v3806
        %v3815 = vmul.f32 %v3759, %v3807
        %v3816 = vmul.f32 %v3760, %v3808
        %v3817 = vmul.f32 %v3761, %v3809
        %v3818 = vmul.f32 %v3762, %v3810
        %v3819 = vlaneseq
        %v3820 = vshrl.u32 %v3819, 7
        %v3821 = vsub.s32 2, %v3820
        %v3822 = vrot.slane %v494, %v3821
        %v3823 = vmul.f32 %v3811, %v3822
        %v3824 = vmul.f32 %v3812, %v3822
        %v3825 = vmul.f32 %v3813, %v3822
        %v3826 = vmul.f32 %v3814, %v3822
        %v3827 = vmul.f32 %v3815, %v3822
        %v3828 = vmul.f32 %v3816, %v3822
        %v3829 = vmul.f32 %v3817, %v3822
        %v3830 = vmul.f32 %v3818, %v3822
        %v3831 = vlaneseq
        %v3832 = vshrl.u32 %v3831, 7
        %v3833 = vsub.s32 3, %v3832
        %v3834 = vrot.slane %v494, %v3833
        %v3835 = vadd.f32 %v3823, %v3834
        %v3836 = vadd.f32 %v3824, %v3834
        %v3837 = vadd.f32 %v3825, %v3834
        %v3838 = vadd.f32 %v3826, %v3834
        %v3839 = vadd.f32 %v3827, %v3834
        %v3840 = vadd.f32 %v3828, %v3834
        %v3841 = vadd.f32 %v3829, %v3834
        %v3842 = vadd.f32 %v3830, %v3834
        %v3843 = vpack.c.bf16 %v3836, %v3835
        %v3844 = vpack.c.bf16 %v3838, %v3837
        %v3845 = vpack.c.bf16 %v3840, %v3839
        %v3846 = vpack.c.bf16 %v3842, %v3841
        %s3847 = smul.u32 %s31, 64
        %s3848 = smul.addr %s3847, 4
        %s3849 = scalar_lea.vmem [#allocation15], %s3848
        %v3850 = vld [vmem:[%s3849] sm:$0xff]
        %v3851 = vld [vmem:[%s3849 + $0x8] sm:$0xff]
        %v3852 = vld [vmem:[%s3849 + $0x10] sm:$0xff]
        %v3853 = vld [vmem:[%s3849 + $0x18] sm:$0xff]
        %v3854 = vld [vmem:[%s3849 + $0x20] sm:$0xff]
        %v3855 = vld [vmem:[%s3849 + $0x28] sm:$0xff]
        %v3856 = vld [vmem:[%s3849 + $0x30] sm:$0xff]
        %v3857 = vld [vmem:[%s3849 + $0x38] sm:$0xff]
        %v3858 = vld [vmem:[%s3849 + $0x40] sm:$0xff]
        %v3859 = vld [vmem:[%s3849 + $0x48] sm:$0xff]
        %v3860 = vld [vmem:[%s3849 + $0x50] sm:$0xff]
        %v3861 = vld [vmem:[%s3849 + $0x58] sm:$0xff]
        %v3862 = vld [vmem:[%s3849 + $0x60] sm:$0xff]
        %v3863 = vld [vmem:[%s3849 + $0x68] sm:$0xff]
        %v3864 = vld [vmem:[%s3849 + $0x70] sm:$0xff]
        %v3865 = vld [vmem:[%s3849 + $0x78] sm:$0xff]
        %v3866 = vld [vmem:[%s3849 + $0x80] sm:$0xff]
        %v3867 = vld [vmem:[%s3849 + $0x88] sm:$0xff]
        %v3868 = vld [vmem:[%s3849 + $0x90] sm:$0xff]
        %v3869 = vld [vmem:[%s3849 + $0x98] sm:$0xff]
        %v3870 = vld [vmem:[%s3849 + $0xa0] sm:$0xff]
        %v3871 = vld [vmem:[%s3849 + $0xa8] sm:$0xff]
        %v3872 = vld [vmem:[%s3849 + $0xb0] sm:$0xff]
        %v3873 = vld [vmem:[%s3849 + $0xb8] sm:$0xff]
        %v3874 = vld [vmem:[%s3849 + $0xc0] sm:$0xff]
        %v3875 = vld [vmem:[%s3849 + $0xc8] sm:$0xff]
        %v3876 = vld [vmem:[%s3849 + $0xd0] sm:$0xff]
        %v3877 = vld [vmem:[%s3849 + $0xd8] sm:$0xff]
        %v3878 = vld [vmem:[%s3849 + $0xe0] sm:$0xff]
        %v3879 = vld [vmem:[%s3849 + $0xe8] sm:$0xff]
        %v3880 = vld [vmem:[%s3849 + $0xf0] sm:$0xff]
        %v3881 = vld [vmem:[%s3849 + $0xf8] sm:$0xff]
        %s3882 = smul.u32 %s31, 4
        %s3883 = scalar_lea.vmem [#allocation16], %s3882
        %v3884 = vld [vmem:[%s3883] sm:$0xf]
        %v3886 = vlaneseq
        %v3887 = vshrl.u32 %v3886, 7
        %v3888 = vsub.s32 0, %v3887
        %v3889 = vrot.slane %v3884, %v3888
        %v3890 = vlaneseq
        %v3891 = vshrl.u32 %v3890, 7
        %v3892 = vsub.s32 1, %v3891
        %v3893 = vrot.slane %v3884, %v3892
        %v3894 = vlaneseq
        %v3895 = vshrl.u32 %v3894, 7
        %v3896 = vsub.s32 2, %v3895
        %v3897 = vrot.slane %v3884, %v3896
        %v3898 = vlaneseq
        %v3899 = vshrl.u32 %v3898, 7
        %v3900 = vsub.s32 3, %v3899
        %v3901 = vrot.slane %v3884, %v3900
        %v3938 = vunpack.c.l.b16 %v3850
        %v3939 = vunpack.c.h.b16 %v3850
        %v3940 = vunpack.c.l.b16 %v3851
        %v3941 = vunpack.c.h.b16 %v3851
        %v3942 = vunpack.c.l.b16 %v3852
        %v3943 = vunpack.c.h.b16 %v3852
        %v3944 = vunpack.c.l.b16 %v3853
        %v3945 = vunpack.c.h.b16 %v3853
        %v3946 = vunpack.c.l.b16 %v3854
        %v3947 = vunpack.c.h.b16 %v3854
        %v3948 = vunpack.c.l.b16 %v3855
        %v3949 = vunpack.c.h.b16 %v3855
        %v3950 = vunpack.c.l.b16 %v3856
        %v3951 = vunpack.c.h.b16 %v3856
        %v3952 = vunpack.c.l.b16 %v3857
        %v3953 = vunpack.c.h.b16 %v3857
        %v3954 = vunpack.c.l.b16 %v3858
        %v3955 = vunpack.c.h.b16 %v3858
        %v3956 = vunpack.c.l.b16 %v3859
        %v3957 = vunpack.c.h.b16 %v3859
        %v3958 = vunpack.c.l.b16 %v3860
        %v3959 = vunpack.c.h.b16 %v3860
        %v3960 = vunpack.c.l.b16 %v3861
        %v3961 = vunpack.c.h.b16 %v3861
        %v3962 = vunpack.c.l.b16 %v3862
        %v3963 = vunpack.c.h.b16 %v3862
        %v3964 = vunpack.c.l.b16 %v3863
        %v3965 = vunpack.c.h.b16 %v3863
        %v3966 = vunpack.c.l.b16 %v3864
        %v3967 = vunpack.c.h.b16 %v3864
        %v3968 = vunpack.c.l.b16 %v3865
        %v3969 = vunpack.c.h.b16 %v3865
        %v3970 = vunpack.c.l.b16 %v3866
        %v3971 = vunpack.c.h.b16 %v3866
        %v3972 = vunpack.c.l.b16 %v3867
        %v3973 = vunpack.c.h.b16 %v3867
        %v3974 = vunpack.c.l.b16 %v3868
        %v3975 = vunpack.c.h.b16 %v3868
        %v3976 = vunpack.c.l.b16 %v3869
        %v3977 = vunpack.c.h.b16 %v3869
        %v3978 = vunpack.c.l.b16 %v3870
        %v3979 = vunpack.c.h.b16 %v3870
        %v3980 = vunpack.c.l.b16 %v3871
        %v3981 = vunpack.c.h.b16 %v3871
        %v3982 = vunpack.c.l.b16 %v3872
        %v3983 = vunpack.c.h.b16 %v3872
        %v3984 = vunpack.c.l.b16 %v3873
        %v3985 = vunpack.c.h.b16 %v3873
        %v3986 = vunpack.c.l.b16 %v3874
        %v3987 = vunpack.c.h.b16 %v3874
        %v3988 = vunpack.c.l.b16 %v3875
        %v3989 = vunpack.c.h.b16 %v3875
        %v3990 = vunpack.c.l.b16 %v3876
        %v3991 = vunpack.c.h.b16 %v3876
        %v3992 = vunpack.c.l.b16 %v3877
        %v3993 = vunpack.c.h.b16 %v3877
        %v3994 = vunpack.c.l.b16 %v3878
        %v3995 = vunpack.c.h.b16 %v3878
        %v3996 = vunpack.c.l.b16 %v3879
        %v3997 = vunpack.c.h.b16 %v3879
        %v3998 = vunpack.c.l.b16 %v3880
        %v3999 = vunpack.c.h.b16 %v3880
        %v4000 = vunpack.c.l.b16 %v3881
        %v4001 = vunpack.c.h.b16 %v3881
        %v4002 = vpack.c.b16 %v3942, %v3938
        %v4003 = vpack.c.b16 %v3943, %v3939
        %v4004 = vpack.c.b16 %v3944, %v3940
        %v4005 = vpack.c.b16 %v3945, %v3941
        %v4006 = vpack.c.b16 %v3950, %v3946
        %v4007 = vpack.c.b16 %v3951, %v3947
        %v4008 = vpack.c.b16 %v3952, %v3948
        %v4009 = vpack.c.b16 %v3953, %v3949
        %v4010 = vpack.c.b16 %v3958, %v3954
        %v4011 = vpack.c.b16 %v3959, %v3955
        %v4012 = vpack.c.b16 %v3960, %v3956
        %v4013 = vpack.c.b16 %v3961, %v3957
        %v4014 = vpack.c.b16 %v3966, %v3962
        %v4015 = vpack.c.b16 %v3967, %v3963
        %v4016 = vpack.c.b16 %v3968, %v3964
        %v4017 = vpack.c.b16 %v3969, %v3965
        %v4018 = vpack.c.b16 %v3974, %v3970
        %v4019 = vpack.c.b16 %v3975, %v3971
        %v4020 = vpack.c.b16 %v3976, %v3972
        %v4021 = vpack.c.b16 %v3977, %v3973
        %v4022 = vpack.c.b16 %v3982, %v3978
        %v4023 = vpack.c.b16 %v3983, %v3979
        %v4024 = vpack.c.b16 %v3984, %v3980
        %v4025 = vpack.c.b16 %v3985, %v3981
        %v4026 = vpack.c.b16 %v3990, %v3986
        %v4027 = vpack.c.b16 %v3991, %v3987
        %v4028 = vpack.c.b16 %v3992, %v3988
        %v4029 = vpack.c.b16 %v3993, %v3989
        %v4030 = vpack.c.b16 %v3998, %v3994
        %v4031 = vpack.c.b16 %v3999, %v3995
        %v4032 = vpack.c.b16 %v4000, %v3996
        %v4033 = vpack.c.b16 %v4001, %v3997
        %4066 = vmatprep.subr.bf16.mxu0 %v4003
        %4067 = vmatpush1.bf16.msra.mxu0 %v4002
        %4068 = vmatprep.subr.bf16.mxu0 %v4007
        %4069 = vmatpush1.bf16.msra.mxu0 %v4006
        %4070 = vmatprep.subr.bf16.mxu0 %v4011
        %4071 = vmatpush1.bf16.msra.mxu0 %v4010
        %4072 = vmatprep.subr.bf16.mxu0 %v4015
        %4073 = vmatpush1.bf16.msra.mxu0 %v4014
        %4074 = vmatprep.subr.bf16.mxu0 %v4019
        %4075 = vmatpush1.bf16.msra.mxu0 %v4018
        %4076 = vmatprep.subr.bf16.mxu0 %v4023
        %4077 = vmatpush1.bf16.msra.mxu0 %v4022
        %4078 = vmatprep.subr.bf16.mxu0 %v4027
        %4079 = vmatpush1.bf16.msra.mxu0 %v4026
        %4080 = vmatprep.subr.bf16.mxu0 %v4031
        %4081 = vmatpush1.bf16.msra.mxu0 %v4030
        %4082 = vmatprep.subr.bf16.mxu0 0
        %4083 = vmatpush1.bf16.msra.mxu0 0
        %4084 = vmatprep.subr.bf16.mxu0 0
        %4085 = vmatpush1.bf16.msra.mxu0 0
        %4086 = vmatprep.subr.bf16.mxu0 0
        %4087 = vmatpush1.bf16.msra.mxu0 0
        %4088 = vmatprep.subr.bf16.mxu0 0
        %4089 = vmatpush1.bf16.msra.mxu0 0
        %4090 = vmatprep.subr.bf16.mxu0 0
        %4091 = vmatpush1.bf16.msra.mxu0 0
        %4092 = vmatprep.subr.bf16.mxu0 0
        %4093 = vmatpush1.bf16.msra.mxu0 0
        %4094 = vmatprep.subr.bf16.mxu0 0
        %4095 = vmatpush1.bf16.msra.mxu0 0
        %4096 = vmatprep.subr.bf16.mxu0 0
        %4097 = vmatpush1.bf16.msra.mxu0 0
        %4098 = vmatprep.mubr.bf16.mxu0 0
        %4099 = vmatmul.mubr.bf16.gmra.mrb[0].mxu0 %v3843
        %v4100 = vpop.f32.mrb[0].mxu0
        %v4101 = vadd.f32 %v3889, %v4100
        %v4102 = vpop.f32.mrb[0].mxu0
        %v4103 = vadd.f32 %v3893, %v4102
        %v4104 = vpop.f32.mrb[0].mxu0
        %v4105 = vadd.f32 %v3889, %v4104
        %v4106 = vpop.f32.mrb[0].mxu0
        %v4107 = vadd.f32 %v3893, %v4106
        %4108 = vmatprep.mubr.bf16.mxu0 0
        %4109 = vmatmul.mubr.bf16.gmra.mrb[0].mxu0 %v3844
        %v4110 = vpop.f32.mrb[0].mxu0
        %v4111 = vadd.f32 %v3889, %v4110
        %v4112 = vpop.f32.mrb[0].mxu0
        %v4113 = vadd.f32 %v3893, %v4112
        %v4114 = vpop.f32.mrb[0].mxu0
        %v4115 = vadd.f32 %v3889, %v4114
        %v4116 = vpop.f32.mrb[0].mxu0
        %v4117 = vadd.f32 %v3893, %v4116
        %4118 = vmatprep.mubr.bf16.mxu0 0
        %4119 = vmatmul.mubr.bf16.gmra.mrb[0].mxu0 %v3845
        %v4120 = vpop.f32.mrb[0].mxu0
        %v4121 = vadd.f32 %v3889, %v4120
        %v4122 = vpop.f32.mrb[0].mxu0
        %v4123 = vadd.f32 %v3893, %v4122
        %v4124 = vpop.f32.mrb[0].mxu0
        %v4125 = vadd.f32 %v3889, %v4124
        %v4126 = vpop.f32.mrb[0].mxu0
        %v4127 = vadd.f32 %v3893, %v4126
        %4128 = vmatprep.mubr.bf16.mxu0 0
        %4129 = vmatmul.mubr.bf16.gmra.mrb[0].mxu0 %v3846
        %v4130 = vpop.f32.mrb[0].mxu0
        %v4131 = vadd.f32 %v3889, %v4130
        %v4132 = vpop.f32.mrb[0].mxu0
        %v4133 = vadd.f32 %v3893, %v4132
        %v4134 = vpop.f32.mrb[0].mxu0
        %v4135 = vadd.f32 %v3889, %v4134
        %v4136 = vpop.f32.mrb[0].mxu0
        %v4137 = vadd.f32 %v3893, %v4136
        %4138 = vdwg.mxu0
        %4139 = vmatprep.subr.bf16.mxu0 %v4005
        %4140 = vmatpush1.bf16.msra.mxu0 %v4004
        %4141 = vmatprep.subr.bf16.mxu0 %v4009
        %4142 = vmatpush1.bf16.msra.mxu0 %v4008
        %4143 = vmatprep.subr.bf16.mxu0 %v4013
        %4144 = vmatpush1.bf16.msra.mxu0 %v4012
        %4145 = vmatprep.subr.bf16.mxu0 %v4017
        %4146 = vmatpush1.bf16.msra.mxu0 %v4016
        %4147 = vmatprep.subr.bf16.mxu0 %v4021
        %4148 = vmatpush1.bf16.msra.mxu0 %v4020
        %4149 = vmatprep.subr.bf16.mxu0 %v4025
        %4150 = vmatpush1.bf16.msra.mxu0 %v4024
        %4151 = vmatprep.subr.bf16.mxu0 %v4029
        %4152 = vmatpush1.bf16.msra.mxu0 %v4028
        %4153 = vmatprep.subr.bf16.mxu0 %v4033
        %4154 = vmatpush1.bf16.msra.mxu0 %v4032
        %4155 = vmatprep.subr.bf16.mxu0 0
        %4156 = vmatpush1.bf16.msra.mxu0 0
        %4157 = vmatprep.subr.bf16.mxu0 0
        %4158 = vmatpush1.bf16.msra.mxu0 0
        %4159 = vmatprep.subr.bf16.mxu0 0
        %4160 = vmatpush1.bf16.msra.mxu0 0
        %4161 = vmatprep.subr.bf16.mxu0 0
        %4162 = vmatpush1.bf16.msra.mxu0 0
        %4163 = vmatprep.subr.bf16.mxu0 0
        %4164 = vmatpush1.bf16.msra.mxu0 0
        %4165 = vmatprep.subr.bf16.mxu0 0
        %4166 = vmatpush1.bf16.msra.mxu0 0
        %4167 = vmatprep.subr.bf16.mxu0 0
        %4168 = vmatpush1.bf16.msra.mxu0 0
        %4169 = vmatprep.subr.bf16.mxu0 0
        %4170 = vmatpush1.bf16.msra.mxu0 0
        %4171 = vmatprep.mubr.bf16.mxu0 0
        %4172 = vmatmul.mubr.bf16.gmra.mrb[0].mxu0 %v3843
        %v4173 = vpop.f32.mrb[0].mxu0
        %v4174 = vadd.f32 %v3897, %v4173
        %v4175 = vpop.f32.mrb[0].mxu0
        %v4176 = vadd.f32 %v3901, %v4175
        %v4177 = vpop.f32.mrb[0].mxu0
        %v4178 = vadd.f32 %v3897, %v4177
        %v4179 = vpop.f32.mrb[0].mxu0
        %v4180 = vadd.f32 %v3901, %v4179
        %4181 = vmatprep.mubr.bf16.mxu0 0
        %4182 = vmatmul.mubr.bf16.gmra.mrb[0].mxu0 %v3844
        %v4183 = vpop.f32.mrb[0].mxu0
        %v4184 = vadd.f32 %v3897, %v4183
        %v4185 = vpop.f32.mrb[0].mxu0
        %v4186 = vadd.f32 %v3901, %v4185
        %v4187 = vpop.f32.mrb[0].mxu0
        %v4188 = vadd.f32 %v3897, %v4187
        %v4189 = vpop.f32.mrb[0].mxu0
        %v4190 = vadd.f32 %v3901, %v4189
        %4191 = vmatprep.mubr.bf16.mxu0 0
        %4192 = vmatmul.mubr.bf16.gmra.mrb[0].mxu0 %v3845
        %v4193 = vpop.f32.mrb[0].mxu0
        %v4194 = vadd.f32 %v3897, %v4193
        %v4195 = vpop.f32.mrb[0].mxu0
        %v4196 = vadd.f32 %v3901, %v4195
        %v4197 = vpop.f32.mrb[0].mxu0
        %v4198 = vadd.f32 %v3897, %v4197
        %v4199 = vpop.f32.mrb[0].mxu0
        %v4200 = vadd.f32 %v3901, %v4199
        %4201 = vmatprep.mubr.bf16.mxu0 0
        %4202 = vmatmul.mubr.bf16.gmra.mrb[0].mxu0 %v3846
        %v4203 = vpop.f32.mrb[0].mxu0
        %v4204 = vadd.f32 %v3897, %v4203
        %v4205 = vpop.f32.mrb[0].mxu0
        %v4206 = vadd.f32 %v3901, %v4205
        %v4207 = vpop.f32.mrb[0].mxu0
        %v4208 = vadd.f32 %v3897, %v4207
        %v4209 = vpop.f32.mrb[0].mxu0
        %v4210 = vadd.f32 %v3901, %v4209
        %4211 = vdwg.mxu0
        %v4212 = vmul.f32 %v4101, 1.702
        %v4213 = vmul.f32 %v4103, 1.702
        %v4214 = vmul.f32 %v4174, 1.702
        %v4215 = vmul.f32 %v4176, 1.702
        %v4216 = vmul.f32 %v4105, 1.702
        %v4217 = vmul.f32 %v4107, 1.702
        %v4218 = vmul.f32 %v4178, 1.702
        %v4219 = vmul.f32 %v4180, 1.702
        %v4220 = vmul.f32 %v4111, 1.702
        %v4221 = vmul.f32 %v4113, 1.702
        %v4222 = vmul.f32 %v4184, 1.702
        %v4223 = vmul.f32 %v4186, 1.702
        %v4224 = vmul.f32 %v4115, 1.702
        %v4225 = vmul.f32 %v4117, 1.702
        %v4226 = vmul.f32 %v4188, 1.702
        %v4227 = vmul.f32 %v4190, 1.702
        %v4228 = vmul.f32 %v4121, 1.702
        %v4229 = vmul.f32 %v4123, 1.702
        %v4230 = vmul.f32 %v4194, 1.702
        %v4231 = vmul.f32 %v4196, 1.702
        %v4232 = vmul.f32 %v4125, 1.702
        %v4233 = vmul.f32 %v4127, 1.702
        %v4234 = vmul.f32 %v4198, 1.702
        %v4235 = vmul.f32 %v4200, 1.702
        %v4236 = vmul.f32 %v4131, 1.702
        %v4237 = vmul.f32 %v4133, 1.702
        %v4238 = vmul.f32 %v4204, 1.702
        %v4239 = vmul.f32 %v4206, 1.702
        %v4240 = vmul.f32 %v4135, 1.702
        %v4241 = vmul.f32 %v4137, 1.702
        %v4242 = vmul.f32 %v4208, 1.702
        %v4243 = vmul.f32 %v4210, 1.702
        %v4244 = vxor.u32 %v4212, 2147483648
        %v4245 = vxor.u32 %v4213, 2147483648
        %v4246 = vxor.u32 %v4214, 2147483648
        %v4247 = vxor.u32 %v4215, 2147483648
        %v4248 = vxor.u32 %v4216, 2147483648
        %v4249 = vxor.u32 %v4217, 2147483648
        %v4250 = vxor.u32 %v4218, 2147483648
        %v4251 = vxor.u32 %v4219, 2147483648
        %v4252 = vxor.u32 %v4220, 2147483648
        %v4253 = vxor.u32 %v4221, 2147483648
        %v4254 = vxor.u32 %v4222, 2147483648
        %v4255 = vxor.u32 %v4223, 2147483648
        %v4256 = vxor.u32 %v4224, 2147483648
        %v4257 = vxor.u32 %v4225, 2147483648
        %v4258 = vxor.u32 %v4226, 2147483648
        %v4259 = vxor.u32 %v4227, 2147483648
        %v4260 = vxor.u32 %v4228, 2147483648
        %v4261 = vxor.u32 %v4229, 2147483648
        %v4262 = vxor.u32 %v4230, 2147483648
        %v4263 = vxor.u32 %v4231, 2147483648
        %v4264 = vxor.u32 %v4232, 2147483648
        %v4265 = vxor.u32 %v4233, 2147483648
        %v4266 = vxor.u32 %v4234, 2147483648
        %v4267 = vxor.u32 %v4235, 2147483648
        %v4268 = vxor.u32 %v4236, 2147483648
        %v4269 = vxor.u32 %v4237, 2147483648
        %v4270 = vxor.u32 %v4238, 2147483648
        %v4271 = vxor.u32 %v4239, 2147483648
        %v4272 = vxor.u32 %v4240, 2147483648
        %v4273 = vxor.u32 %v4241, 2147483648
        %v4274 = vxor.u32 %v4242, 2147483648
        %v4275 = vxor.u32 %v4243, 2147483648
        %v4276 = vmul.f32 %v4244, 1.442695
        %v4277 = vpow.pop %v4276
        %v4278 = vmul.f32 %v4245, 1.442695
        %v4279 = vpow.pop %v4278
        %v4280 = vmul.f32 %v4246, 1.442695
        %v4281 = vpow.pop %v4280
        %v4282 = vmul.f32 %v4247, 1.442695
        %v4283 = vpow.pop %v4282
        %v4284 = vmul.f32 %v4248, 1.442695
        %v4285 = vpow.pop %v4284
        %v4286 = vmul.f32 %v4249, 1.442695
        %v4287 = vpow.pop %v4286
        %v4288 = vmul.f32 %v4250, 1.442695
        %v4289 = vpow.pop %v4288
        %v4290 = vmul.f32 %v4251, 1.442695
        %v4291 = vpow.pop %v4290
        %v4292 = vmul.f32 %v4252, 1.442695
        %v4293 = vpow.pop %v4292
        %v4294 = vmul.f32 %v4253, 1.442695
        %v4295 = vpow.pop %v4294
        %v4296 = vmul.f32 %v4254, 1.442695
        %v4297 = vpow.pop %v4296
        %v4298 = vmul.f32 %v4255, 1.442695
        %v4299 = vpow.pop %v4298
        %v4300 = vmul.f32 %v4256, 1.442695
        %v4301 = vpow.pop %v4300
        %v4302 = vmul.f32 %v4257, 1.442695
        %v4303 = vpow.pop %v4302
        %v4304 = vmul.f32 %v4258, 1.442695
        %v4305 = vpow.pop %v4304
        %v4306 = vmul.f32 %v4259, 1.442695
        %v4307 = vpow.pop %v4306
        %v4308 = vmul.f32 %v4260, 1.442695
        %v4309 = vpow.pop %v4308
        %v4310 = vmul.f32 %v4261, 1.442695
        %v4311 = vpow.pop %v4310
        %v4312 = vmul.f32 %v4262, 1.442695
        %v4313 = vpow.pop %v4312
        %v4314 = vmul.f32 %v4263, 1.442695
        %v4315 = vpow.pop %v4314
        %v4316 = vmul.f32 %v4264, 1.442695
        %v4317 = vpow.pop %v4316
        %v4318 = vmul.f32 %v4265, 1.442695
        %v4319 = vpow.pop %v4318
        %v4320 = vmul.f32 %v4266, 1.442695
        %v4321 = vpow.pop %v4320
        %v4322 = vmul.f32 %v4267, 1.442695
        %v4323 = vpow.pop %v4322
        %v4324 = vmul.f32 %v4268, 1.442695
        %v4325 = vpow.pop %v4324
        %v4326 = vmul.f32 %v4269, 1.442695
        %v4327 = vpow.pop %v4326
        %v4328 = vmul.f32 %v4270, 1.442695
        %v4329 = vpow.pop %v4328
        %v4330 = vmul.f32 %v4271, 1.442695
        %v4331 = vpow.pop %v4330
        %v4332 = vmul.f32 %v4272, 1.442695
        %v4333 = vpow.pop %v4332
        %v4334 = vmul.f32 %v4273, 1.442695
        %v4335 = vpow.pop %v4334
        %v4336 = vmul.f32 %v4274, 1.442695
        %v4337 = vpow.pop %v4336
        %v4338 = vmul.f32 %v4275, 1.442695
        %v4339 = vpow.pop %v4338
        %v4340 = vadd.f32 %v4277, 1.0
        %v4341 = vadd.f32 %v4279, 1.0
        %v4342 = vadd.f32 %v4281, 1.0
        %v4343 = vadd.f32 %v4283, 1.0
        %v4344 = vadd.f32 %v4285, 1.0
        %v4345 = vadd.f32 %v4287, 1.0
        %v4346 = vadd.f32 %v4289, 1.0
        %v4347 = vadd.f32 %v4291, 1.0
        %v4348 = vadd.f32 %v4293, 1.0
        %v4349 = vadd.f32 %v4295, 1.0
        %v4350 = vadd.f32 %v4297, 1.0
        %v4351 = vadd.f32 %v4299, 1.0
        %v4352 = vadd.f32 %v4301, 1.0
        %v4353 = vadd.f32 %v4303, 1.0
        %v4354 = vadd.f32 %v4305, 1.0
        %v4355 = vadd.f32 %v4307, 1.0
        %v4356 = vadd.f32 %v4309, 1.0
        %v4357 = vadd.f32 %v4311, 1.0
        %v4358 = vadd.f32 %v4313, 1.0
        %v4359 = vadd.f32 %v4315, 1.0
        %v4360 = vadd.f32 %v4317, 1.0
        %v4361 = vadd.f32 %v4319, 1.0
        %v4362 = vadd.f32 %v4321, 1.0
        %v4363 = vadd.f32 %v4323, 1.0
        %v4364 = vadd.f32 %v4325, 1.0
        %v4365 = vadd.f32 %v4327, 1.0
        %v4366 = vadd.f32 %v4329, 1.0
        %v4367 = vadd.f32 %v4331, 1.0
        %v4368 = vadd.f32 %v4333, 1.0
        %v4369 = vadd.f32 %v4335, 1.0
        %v4370 = vadd.f32 %v4337, 1.0
        %v4371 = vadd.f32 %v4339, 1.0
        %v4372 = vrcp.pop %v4340
        %v4373 = vmul.f32 1.0, %v4372
        %v4374 = vrcp.pop %v4341
        %v4375 = vmul.f32 1.0, %v4374
        %v4376 = vrcp.pop %v4342
        %v4377 = vmul.f32 1.0, %v4376
        %v4378 = vrcp.pop %v4343
        %v4379 = vmul.f32 1.0, %v4378
        %v4380 = vrcp.pop %v4344
        %v4381 = vmul.f32 1.0, %v4380
        %v4382 = vrcp.pop %v4345
        %v4383 = vmul.f32 1.0, %v4382
        %v4384 = vrcp.pop %v4346
        %v4385 = vmul.f32 1.0, %v4384
        %v4386 = vrcp.pop %v4347
        %v4387 = vmul.f32 1.0, %v4386
        %v4388 = vrcp.pop %v4348
        %v4389 = vmul.f32 1.0, %v4388
        %v4390 = vrcp.pop %v4349
        %v4391 = vmul.f32 1.0, %v4390
        %v4392 = vrcp.pop %v4350
        %v4393 = vmul.f32 1.0, %v4392
        %v4394 = vrcp.pop %v4351
        %v4395 = vmul.f32 1.0, %v4394
        %v4396 = vrcp.pop %v4352
        %v4397 = vmul.f32 1.0, %v4396
        %v4398 = vrcp.pop %v4353
        %v4399 = vmul.f32 1.0, %v4398
        %v4400 = vrcp.pop %v4354
        %v4401 = vmul.f32 1.0, %v4400
        %v4402 = vrcp.pop %v4355
        %v4403 = vmul.f32 1.0, %v4402
        %v4404 = vrcp.pop %v4356
        %v4405 = vmul.f32 1.0, %v4404
        %v4406 = vrcp.pop %v4357
        %v4407 = vmul.f32 1.0, %v4406
        %v4408 = vrcp.pop %v4358
        %v4409 = vmul.f32 1.0, %v4408
        %v4410 = vrcp.pop %v4359
        %v4411 = vmul.f32 1.0, %v4410
        %v4412 = vrcp.pop %v4360
        %v4413 = vmul.f32 1.0, %v4412
        %v4414 = vrcp.pop %v4361
        %v4415 = vmul.f32 1.0, %v4414
        %v4416 = vrcp.pop %v4362
        %v4417 = vmul.f32 1.0, %v4416
        %v4418 = vrcp.pop %v4363
        %v4419 = vmul.f32 1.0, %v4418
        %v4420 = vrcp.pop %v4364
        %v4421 = vmul.f32 1.0, %v4420
        %v4422 = vrcp.pop %v4365
        %v4423 = vmul.f32 1.0, %v4422
        %v4424 = vrcp.pop %v4366
        %v4425 = vmul.f32 1.0, %v4424
        %v4426 = vrcp.pop %v4367
        %v4427 = vmul.f32 1.0, %v4426
        %v4428 = vrcp.pop %v4368
        %v4429 = vmul.f32 1.0, %v4428
        %v4430 = vrcp.pop %v4369
        %v4431 = vmul.f32 1.0, %v4430
        %v4432 = vrcp.pop %v4370
        %v4433 = vmul.f32 1.0, %v4432
        %v4434 = vrcp.pop %v4371
        %v4435 = vmul.f32 1.0, %v4434
        %v4436 = vmul.f32 %v4101, %v4373
        %v4437 = vmul.f32 %v4103, %v4375
        %v4438 = vmul.f32 %v4174, %v4377
        %v4439 = vmul.f32 %v4176, %v4379
        %v4440 = vmul.f32 %v4105, %v4381
        %v4441 = vmul.f32 %v4107, %v4383
        %v4442 = vmul.f32 %v4178, %v4385
        %v4443 = vmul.f32 %v4180, %v4387
        %v4444 = vmul.f32 %v4111, %v4389
        %v4445 = vmul.f32 %v4113, %v4391
        %v4446 = vmul.f32 %v4184, %v4393
        %v4447 = vmul.f32 %v4186, %v4395
        %v4448 = vmul.f32 %v4115, %v4397
        %v4449 = vmul.f32 %v4117, %v4399
        %v4450 = vmul.f32 %v4188, %v4401
        %v4451 = vmul.f32 %v4190, %v4403
        %v4452 = vmul.f32 %v4121, %v4405
        %v4453 = vmul.f32 %v4123, %v4407
        %v4454 = vmul.f32 %v4194, %v4409
        %v4455 = vmul.f32 %v4196, %v4411
        %v4456 = vmul.f32 %v4125, %v4413
        %v4457 = vmul.f32 %v4127, %v4415
        %v4458 = vmul.f32 %v4198, %v4417
        %v4459 = vmul.f32 %v4200, %v4419
        %v4460 = vmul.f32 %v4131, %v4421
        %v4461 = vmul.f32 %v4133, %v4423
        %v4462 = vmul.f32 %v4204, %v4425
        %v4463 = vmul.f32 %v4206, %v4427
        %v4464 = vmul.f32 %v4135, %v4429
        %v4465 = vmul.f32 %v4137, %v4431
        %v4466 = vmul.f32 %v4208, %v4433
        %v4467 = vmul.f32 %v4210, %v4435
        %v4468 = vpack.c.bf16 %v4440, %v4436
        %v4469 = vpack.c.bf16 %v4441, %v4437
        %v4470 = vpack.c.bf16 %v4442, %v4438
        %v4471 = vpack.c.bf16 %v4443, %v4439
        %v4472 = vpack.c.bf16 %v4448, %v4444
        %v4473 = vpack.c.bf16 %v4449, %v4445
        %v4474 = vpack.c.bf16 %v4450, %v4446
        %v4475 = vpack.c.bf16 %v4451, %v4447
        %v4476 = vpack.c.bf16 %v4456, %v4452
        %v4477 = vpack.c.bf16 %v4457, %v4453
        %v4478 = vpack.c.bf16 %v4458, %v4454
        %v4479 = vpack.c.bf16 %v4459, %v4455
        %v4480 = vpack.c.bf16 %v4464, %v4460
        %v4481 = vpack.c.bf16 %v4465, %v4461
        %v4482 = vpack.c.bf16 %v4466, %v4462
        %v4483 = vpack.c.bf16 %v4467, %v4463
        %s4484 = smul.addr %s3847, 4
        %s4485 = scalar_lea.vmem [#allocation18], %s4484
        %v4486 = vld [vmem:[%s4485] sm:$0xf]
        %v4487 = vld [vmem:[%s4485 + $0x4] sm:$0xf]
        %v4488 = vld [vmem:[%s4485 + $0x8] sm:$0xf]
        %v4489 = vld [vmem:[%s4485 + $0xc] sm:$0xf]
        %v4490 = vld [vmem:[%s4485 + $0x10] sm:$0xf]
        %v4491 = vld [vmem:[%s4485 + $0x14] sm:$0xf]
        %v4492 = vld [vmem:[%s4485 + $0x18] sm:$0xf]
        %v4493 = vld [vmem:[%s4485 + $0x1c] sm:$0xf]
        %v4494 = vld [vmem:[%s4485 + $0x20] sm:$0xf]
        %v4495 = vld [vmem:[%s4485 + $0x24] sm:$0xf]
        %v4496 = vld [vmem:[%s4485 + $0x28] sm:$0xf]
        %v4497 = vld [vmem:[%s4485 + $0x2c] sm:$0xf]
        %v4498 = vld [vmem:[%s4485 + $0x30] sm:$0xf]
        %v4499 = vld [vmem:[%s4485 + $0x34] sm:$0xf]
        %v4500 = vld [vmem:[%s4485 + $0x38] sm:$0xf]
        %v4501 = vld [vmem:[%s4485 + $0x3c] sm:$0xf]
        %v4502 = vld [vmem:[%s4485 + $0x40] sm:$0xf]
        %v4503 = vld [vmem:[%s4485 + $0x44] sm:$0xf]
        %v4504 = vld [vmem:[%s4485 + $0x48] sm:$0xf]
        %v4505 = vld [vmem:[%s4485 + $0x4c] sm:$0xf]
        %v4506 = vld [vmem:[%s4485 + $0x50] sm:$0xf]
        %v4507 = vld [vmem:[%s4485 + $0x54] sm:$0xf]
        %v4508 = vld [vmem:[%s4485 + $0x58] sm:$0xf]
        %v4509 = vld [vmem:[%s4485 + $0x5c] sm:$0xf]
        %v4510 = vld [vmem:[%s4485 + $0x60] sm:$0xf]
        %v4511 = vld [vmem:[%s4485 + $0x64] sm:$0xf]
        %v4512 = vld [vmem:[%s4485 + $0x68] sm:$0xf]
        %v4513 = vld [vmem:[%s4485 + $0x6c] sm:$0xf]
        %v4514 = vld [vmem:[%s4485 + $0x70] sm:$0xf]
        %v4515 = vld [vmem:[%s4485 + $0x74] sm:$0xf]
        %v4516 = vld [vmem:[%s4485 + $0x78] sm:$0xf]
        %v4517 = vld [vmem:[%s4485 + $0x7c] sm:$0xf]
        %v4518 = vld [vmem:[%s4485 + $0x80] sm:$0xf]
        %v4519 = vld [vmem:[%s4485 + $0x84] sm:$0xf]
        %v4520 = vld [vmem:[%s4485 + $0x88] sm:$0xf]
        %v4521 = vld [vmem:[%s4485 + $0x8c] sm:$0xf]
        %v4522 = vld [vmem:[%s4485 + $0x90] sm:$0xf]
        %v4523 = vld [vmem:[%s4485 + $0x94] sm:$0xf]
        %v4524 = vld [vmem:[%s4485 + $0x98] sm:$0xf]
        %v4525 = vld [vmem:[%s4485 + $0x9c] sm:$0xf]
        %v4526 = vld [vmem:[%s4485 + $0xa0] sm:$0xf]
        %v4527 = vld [vmem:[%s4485 + $0xa4] sm:$0xf]
        %v4528 = vld [vmem:[%s4485 + $0xa8] sm:$0xf]
        %v4529 = vld [vmem:[%s4485 + $0xac] sm:$0xf]
        %v4530 = vld [vmem:[%s4485 + $0xb0] sm:$0xf]
        %v4531 = vld [vmem:[%s4485 + $0xb4] sm:$0xf]
        %v4532 = vld [vmem:[%s4485 + $0xb8] sm:$0xf]
        %v4533 = vld [vmem:[%s4485 + $0xbc] sm:$0xf]
        %v4534 = vld [vmem:[%s4485 + $0xc0] sm:$0xf]
        %v4535 = vld [vmem:[%s4485 + $0xc4] sm:$0xf]
        %v4536 = vld [vmem:[%s4485 + $0xc8] sm:$0xf]
        %v4537 = vld [vmem:[%s4485 + $0xcc] sm:$0xf]
        %v4538 = vld [vmem:[%s4485 + $0xd0] sm:$0xf]
        %v4539 = vld [vmem:[%s4485 + $0xd4] sm:$0xf]
        %v4540 = vld [vmem:[%s4485 + $0xd8] sm:$0xf]
        %v4541 = vld [vmem:[%s4485 + $0xdc] sm:$0xf]
        %v4542 = vld [vmem:[%s4485 + $0xe0] sm:$0xf]
        %v4543 = vld [vmem:[%s4485 + $0xe4] sm:$0xf]
        %v4544 = vld [vmem:[%s4485 + $0xe8] sm:$0xf]
        %v4545 = vld [vmem:[%s4485 + $0xec] sm:$0xf]
        %v4546 = vld [vmem:[%s4485 + $0xf0] sm:$0xf]
        %v4547 = vld [vmem:[%s4485 + $0xf4] sm:$0xf]
        %v4548 = vld [vmem:[%s4485 + $0xf8] sm:$0xf]
        %v4549 = vld [vmem:[%s4485 + $0xfc] sm:$0xf]
        %v4550 = vlaneseq
        %v4551 = vshrl.u32 %v4550, 7
        %v4552 = vsub.s32 5, %v4551
        %v4553 = vrot.slane %v494, %v4552
        %v4618 = vunpack.c.l.b16 %v4486
        %v4619 = vunpack.c.l.b16 %v4487
        %v4620 = vunpack.c.l.b16 %v4488
        %v4621 = vunpack.c.l.b16 %v4489
        %v4622 = vunpack.c.l.b16 %v4490
        %v4623 = vunpack.c.l.b16 %v4491
        %v4624 = vunpack.c.l.b16 %v4492
        %v4625 = vunpack.c.l.b16 %v4493
        %v4626 = vunpack.c.l.b16 %v4494
        %v4627 = vunpack.c.l.b16 %v4495
        %v4628 = vunpack.c.l.b16 %v4496
        %v4629 = vunpack.c.l.b16 %v4497
        %v4630 = vunpack.c.l.b16 %v4498
        %v4631 = vunpack.c.l.b16 %v4499
        %v4632 = vunpack.c.l.b16 %v4500
        %v4633 = vunpack.c.l.b16 %v4501
        %v4634 = vunpack.c.l.b16 %v4502
        %v4635 = vunpack.c.l.b16 %v4503
        %v4636 = vunpack.c.l.b16 %v4504
        %v4637 = vunpack.c.l.b16 %v4505
        %v4638 = vunpack.c.l.b16 %v4506
        %v4639 = vunpack.c.l.b16 %v4507
        %v4640 = vunpack.c.l.b16 %v4508
        %v4641 = vunpack.c.l.b16 %v4509
        %v4642 = vunpack.c.l.b16 %v4510
        %v4643 = vunpack.c.l.b16 %v4511
        %v4644 = vunpack.c.l.b16 %v4512
        %v4645 = vunpack.c.l.b16 %v4513
        %v4646 = vunpack.c.l.b16 %v4514
        %v4647 = vunpack.c.l.b16 %v4515
        %v4648 = vunpack.c.l.b16 %v4516
        %v4649 = vunpack.c.l.b16 %v4517
        %v4650 = vunpack.c.l.b16 %v4518
        %v4651 = vunpack.c.l.b16 %v4519
        %v4652 = vunpack.c.l.b16 %v4520
        %v4653 = vunpack.c.l.b16 %v4521
        %v4654 = vunpack.c.l.b16 %v4522
        %v4655 = vunpack.c.l.b16 %v4523
        %v4656 = vunpack.c.l.b16 %v4524
        %v4657 = vunpack.c.l.b16 %v4525
        %v4658 = vunpack.c.l.b16 %v4526
        %v4659 = vunpack.c.l.b16 %v4527
        %v4660 = vunpack.c.l.b16 %v4528
        %v4661 = vunpack.c.l.b16 %v4529
        %v4662 = vunpack.c.l.b16 %v4530
        %v4663 = vunpack.c.l.b16 %v4531
        %v4664 = vunpack.c.l.b16 %v4532
        %v4665 = vunpack.c.l.b16 %v4533
        %v4666 = vunpack.c.l.b16 %v4534
        %v4667 = vunpack.c.l.b16 %v4535
        %v4668 = vunpack.c.l.b16 %v4536
        %v4669 = vunpack.c.l.b16 %v4537
        %v4670 = vunpack.c.l.b16 %v4538
        %v4671 = vunpack.c.l.b16 %v4539
        %v4672 = vunpack.c.l.b16 %v4540
        %v4673 = vunpack.c.l.b16 %v4541
        %v4674 = vunpack.c.l.b16 %v4542
        %v4675 = vunpack.c.l.b16 %v4543
        %v4676 = vunpack.c.l.b16 %v4544
        %v4677 = vunpack.c.l.b16 %v4545
        %v4678 = vunpack.c.l.b16 %v4546
        %v4679 = vunpack.c.l.b16 %v4547
        %v4680 = vunpack.c.l.b16 %v4548
        %v4681 = vunpack.c.l.b16 %v4549
        %v4682 = vpack.c.b16 %v4619, %v4618
        %v4683 = vpack.c.b16 %v4621, %v4620
        %v4684 = vpack.c.b16 %v4623, %v4622
        %v4685 = vpack.c.b16 %v4625, %v4624
        %v4686 = vpack.c.b16 %v4627, %v4626
        %v4687 = vpack.c.b16 %v4629, %v4628
        %v4688 = vpack.c.b16 %v4631, %v4630
        %v4689 = vpack.c.b16 %v4633, %v4632
        %v4690 = vpack.c.b16 %v4635, %v4634
        %v4691 = vpack.c.b16 %v4637, %v4636
        %v4692 = vpack.c.b16 %v4639, %v4638
        %v4693 = vpack.c.b16 %v4641, %v4640
        %v4694 = vpack.c.b16 %v4643, %v4642
        %v4695 = vpack.c.b16 %v4645, %v4644
        %v4696 = vpack.c.b16 %v4647, %v4646
        %v4697 = vpack.c.b16 %v4649, %v4648
        %v4698 = vpack.c.b16 %v4651, %v4650
        %v4699 = vpack.c.b16 %v4653, %v4652
        %v4700 = vpack.c.b16 %v4655, %v4654
        %v4701 = vpack.c.b16 %v4657, %v4656
        %v4702 = vpack.c.b16 %v4659, %v4658
        %v4703 = vpack.c.b16 %v4661, %v4660
        %v4704 = vpack.c.b16 %v4663, %v4662
        %v4705 = vpack.c.b16 %v4665, %v4664
        %v4706 = vpack.c.b16 %v4667, %v4666
        %v4707 = vpack.c.b16 %v4669, %v4668
        %v4708 = vpack.c.b16 %v4671, %v4670
        %v4709 = vpack.c.b16 %v4673, %v4672
        %v4710 = vpack.c.b16 %v4675, %v4674
        %v4711 = vpack.c.b16 %v4677, %v4676
        %v4712 = vpack.c.b16 %v4679, %v4678
        %v4713 = vpack.c.b16 %v4681, %v4680
        %4746 = vmatprep.subr.bf16.mxu0 0
        %4747 = vmatpush1.bf16.msra.mxu0 %v4682
        %4748 = vmatprep.subr.bf16.mxu0 0
        %4749 = vmatpush1.bf16.msra.mxu0 %v4683
        %4750 = vmatprep.subr.bf16.mxu0 0
        %4751 = vmatpush1.bf16.msra.mxu0 %v4684
        %4752 = vmatprep.subr.bf16.mxu0 0
        %4753 = vmatpush1.bf16.msra.mxu0 %v4685
        %4754 = vmatprep.subr.bf16.mxu0 0
        %4755 = vmatpush1.bf16.msra.mxu0 %v4686
        %4756 = vmatprep.subr.bf16.mxu0 0
        %4757 = vmatpush1.bf16.msra.mxu0 %v4687
        %4758 = vmatprep.subr.bf16.mxu0 0
        %4759 = vmatpush1.bf16.msra.mxu0 %v4688
        %4760 = vmatprep.subr.bf16.mxu0 0
        %4761 = vmatpush1.bf16.msra.mxu0 %v4689
        %4762 = vmatprep.subr.bf16.mxu0 0
        %4763 = vmatpush1.bf16.msra.mxu0 %v4690
        %4764 = vmatprep.subr.bf16.mxu0 0
        %4765 = vmatpush1.bf16.msra.mxu0 %v4691
        %4766 = vmatprep.subr.bf16.mxu0 0
        %4767 = vmatpush1.bf16.msra.mxu0 %v4692
        %4768 = vmatprep.subr.bf16.mxu0 0
        %4769 = vmatpush1.bf16.msra.mxu0 %v4693
        %4770 = vmatprep.subr.bf16.mxu0 0
        %4771 = vmatpush1.bf16.msra.mxu0 %v4694
        %4772 = vmatprep.subr.bf16.mxu0 0
        %4773 = vmatpush1.bf16.msra.mxu0 %v4695
        %4774 = vmatprep.subr.bf16.mxu0 0
        %4775 = vmatpush1.bf16.msra.mxu0 %v4696
        %4776 = vmatprep.subr.bf16.mxu0 0
        %4777 = vmatpush1.bf16.msra.mxu0 %v4697
        %4778 = vmatprep.mubr.bf16.mxu0 %v4469
        %4779 = vmatmul.mubr.bf16.gmra.mrb[0].mxu0 %v4468
        %v4780 = vpop.f32.mrb[0].mxu0
        %v4781 = vadd.f32 %v4553, %v4780
        %v4782 = vpop.f32.mrb[0].mxu0
        %v4783 = vpop.f32.mrb[0].mxu0
        %v4784 = vadd.f32 %v4553, %v4783
        %v4785 = vpop.f32.mrb[0].mxu0
        %4786 = vmatprep.mubr.bf16.mxu0 %v4473
        %4787 = vmatmul.mubr.bf16.gmra.mrb[0].mxu0 %v4472
        %v4788 = vpop.f32.mrb[0].mxu0
        %v4789 = vadd.f32 %v4553, %v4788
        %v4790 = vpop.f32.mrb[0].mxu0
        %v4791 = vpop.f32.mrb[0].mxu0
        %v4792 = vadd.f32 %v4553, %v4791
        %v4793 = vpop.f32.mrb[0].mxu0
        %4794 = vmatprep.mubr.bf16.mxu0 %v4477
        %4795 = vmatmul.mubr.bf16.gmra.mrb[0].mxu0 %v4476
        %v4796 = vpop.f32.mrb[0].mxu0
        %v4797 = vadd.f32 %v4553, %v4796
        %v4798 = vpop.f32.mrb[0].mxu0
        %v4799 = vpop.f32.mrb[0].mxu0
        %v4800 = vadd.f32 %v4553, %v4799
        %v4801 = vpop.f32.mrb[0].mxu0
        %4802 = vmatprep.mubr.bf16.mxu0 %v4481
        %4803 = vmatmul.mubr.bf16.gmra.mrb[0].mxu0 %v4480
        %v4804 = vpop.f32.mrb[0].mxu0
        %v4805 = vadd.f32 %v4553, %v4804
        %v4806 = vpop.f32.mrb[0].mxu0
        %v4807 = vpop.f32.mrb[0].mxu0
        %v4808 = vadd.f32 %v4553, %v4807
        %v4809 = vpop.f32.mrb[0].mxu0
        %4810 = vdwg.mxu0
        %4811 = vmatprep.subr.bf16.mxu0 0
        %4812 = vmatpush1.bf16.msra.mxu0 %v4698
        %4813 = vmatprep.subr.bf16.mxu0 0
        %4814 = vmatpush1.bf16.msra.mxu0 %v4699
        %4815 = vmatprep.subr.bf16.mxu0 0
        %4816 = vmatpush1.bf16.msra.mxu0 %v4700
        %4817 = vmatprep.subr.bf16.mxu0 0
        %4818 = vmatpush1.bf16.msra.mxu0 %v4701
        %4819 = vmatprep.subr.bf16.mxu0 0
        %4820 = vmatpush1.bf16.msra.mxu0 %v4702
        %4821 = vmatprep.subr.bf16.mxu0 0
        %4822 = vmatpush1.bf16.msra.mxu0 %v4703
        %4823 = vmatprep.subr.bf16.mxu0 0
        %4824 = vmatpush1.bf16.msra.mxu0 %v4704
        %4825 = vmatprep.subr.bf16.mxu0 0
        %4826 = vmatpush1.bf16.msra.mxu0 %v4705
        %4827 = vmatprep.subr.bf16.mxu0 0
        %4828 = vmatpush1.bf16.msra.mxu0 %v4706
        %4829 = vmatprep.subr.bf16.mxu0 0
        %4830 = vmatpush1.bf16.msra.mxu0 %v4707
        %4831 = vmatprep.subr.bf16.mxu0 0
        %4832 = vmatpush1.bf16.msra.mxu0 %v4708
        %4833 = vmatprep.subr.bf16.mxu0 0
        %4834 = vmatpush1.bf16.msra.mxu0 %v4709
        %4835 = vmatprep.subr.bf16.mxu0 0
        %4836 = vmatpush1.bf16.msra.mxu0 %v4710
        %4837 = vmatprep.subr.bf16.mxu0 0
        %4838 = vmatpush1.bf16.msra.mxu0 %v4711
        %4839 = vmatprep.subr.bf16.mxu0 0
        %4840 = vmatpush1.bf16.msra.mxu0 %v4712
        %4841 = vmatprep.subr.bf16.mxu0 0
        %4842 = vmatpush1.bf16.msra.mxu0 %v4713
        %4843 = vmatprep.mubr.bf16.mxu0 %v4471
        %4844 = vmatmul.mubr.bf16.gmra.mrb[0].mxu0 %v4470
        %v4845 = vpop.f32.mrb[0].mxu0
        %v4846 = vadd.f32 %v4781, %v4845
        %v4847 = vpop.f32.mrb[0].mxu0
        %v4848 = vpop.f32.mrb[0].mxu0
        %v4849 = vadd.f32 %v4784, %v4848
        %v4850 = vpop.f32.mrb[0].mxu0
        %4851 = vmatprep.mubr.bf16.mxu0 %v4475
        %4852 = vmatmul.mubr.bf16.gmra.mrb[0].mxu0 %v4474
        %v4853 = vpop.f32.mrb[0].mxu0
        %v4854 = vadd.f32 %v4789, %v4853
        %v4855 = vpop.f32.mrb[0].mxu0
        %v4856 = vpop.f32.mrb[0].mxu0
        %v4857 = vadd.f32 %v4792, %v4856
        %v4858 = vpop.f32.mrb[0].mxu0
        %4859 = vmatprep.mubr.bf16.mxu0 %v4479
        %4860 = vmatmul.mubr.bf16.gmra.mrb[0].mxu0 %v4478
        %v4861 = vpop.f32.mrb[0].mxu0
        %v4862 = vadd.f32 %v4797, %v4861
        %v4863 = vpop.f32.mrb[0].mxu0
        %v4864 = vpop.f32.mrb[0].mxu0
        %v4865 = vadd.f32 %v4800, %v4864
        %v4866 = vpop.f32.mrb[0].mxu0
        %4867 = vmatprep.mubr.bf16.mxu0 %v4483
        %4868 = vmatmul.mubr.bf16.gmra.mrb[0].mxu0 %v4482
        %v4869 = vpop.f32.mrb[0].mxu0
        %v4870 = vadd.f32 %v4805, %v4869
        %v4871 = vpop.f32.mrb[0].mxu0
        %v4872 = vpop.f32.mrb[0].mxu0
        %v4873 = vadd.f32 %v4808, %v4872
        %v4874 = vpop.f32.mrb[0].mxu0
        %4875 = vdwg.mxu0
        %v4876 = vadd.f32 %v3723, %v4846
        %v4877 = vadd.f32 %v3724, %v4849
        %v4878 = vadd.f32 %v3725, %v4854
        %v4879 = vadd.f32 %v3726, %v4857
        %v4880 = vadd.f32 %v3727, %v4862
        %v4881 = vadd.f32 %v3728, %v4865
        %v4882 = vadd.f32 %v3729, %v4870
        %v4883 = vadd.f32 %v3730, %v4873
        %4884 = vst [vmem:[#allocation2] sm:$0xff] %v4876
        %4885 = vst [vmem:[#allocation2 + $0x8] sm:$0xff] %v4877
        %4886 = vst [vmem:[#allocation2 + $0x10] sm:$0xff] %v4878
        %4887 = vst [vmem:[#allocation2 + $0x18] sm:$0xff] %v4879
        %4888 = vst [vmem:[#allocation2 + $0x20] sm:$0xff] %v4880
        %4889 = vst [vmem:[#allocation2 + $0x28] sm:$0xff] %v4881
        %4890 = vst [vmem:[#allocation2 + $0x30] sm:$0xff] %v4882
        %4891 = vst [vmem:[#allocation2 + $0x38] sm:$0xff] %v4883
        %p4892 = scmp.eq.s32.totalorder %s31, 1
        // Predicated region
        $region97: #{video_header_forward.1} parent=55 // pred_check
          %p4893 = pneg %p4892
        $region98: #{video_header_forward.1} parent=55 // pred_check_branch
          %4895 = sbr.rel (%p4893) target = $region100
        $region99: #{video_header_forward.1} parent=55 // pred_region
          %v4896 = vld [vmem:[#allocation4] sm:$0xff]
          %v4897 = vld [vmem:[#allocation4 + $0x8] sm:$0xff]
          %v4898 = vld [vmem:[#allocation4 + $0x10] sm:$0xff]
          %v4899 = vld [vmem:[#allocation4 + $0x18] sm:$0xff]
          %v4900 = vld [vmem:[#allocation4 + $0x20] sm:$0xff]
          %v4901 = vld [vmem:[#allocation4 + $0x28] sm:$0xff]
          %v4902 = vld [vmem:[#allocation4 + $0x30] sm:$0xff]
          %v4903 = vld [vmem:[#allocation4 + $0x38] sm:$0xff]
          %v4904 = vadd.f32 %v4876, %v4896
          %v4905 = vadd.f32 %v4877, %v4897
          %v4906 = vadd.f32 %v4878, %v4898
          %v4907 = vadd.f32 %v4879, %v4899
          %v4908 = vadd.f32 %v4880, %v4900
          %v4909 = vadd.f32 %v4881, %v4901
          %v4910 = vadd.f32 %v4882, %v4902
          %v4911 = vadd.f32 %v4883, %v4903
          %v4912 = vrot.slane %v4904, 4
          %v4913 = vadd.f32 %v4904, %v4912
          %v4914 = vrot.slane %v4913, 2
          %v4915 = vadd.f32 %v4913, %v4914
          %v4916 = vrot.slane %v4915, 1
          %v4917 = vadd.f32 %v4915, %v4916
          %v4918 = vrot.slane %v4905, 4
          %v4919 = vadd.f32 %v4905, %v4918
          %v4920 = vrot.slane %v4919, 2
          %v4921 = vadd.f32 %v4919, %v4920
          %v4922 = vrot.slane %v4921, 1
          %v4923 = vadd.f32 %v4921, %v4922
          %v4924 = vrot.slane %v4906, 4
          %v4925 = vadd.f32 %v4906, %v4924
          %v4926 = vrot.slane %v4925, 2
          %v4927 = vadd.f32 %v4925, %v4926
          %v4928 = vrot.slane %v4927, 1
          %v4929 = vadd.f32 %v4927, %v4928
          %v4930 = vrot.slane %v4907, 4
          %v4931 = vadd.f32 %v4907, %v4930
          %v4932 = vrot.slane %v4931, 2
          %v4933 = vadd.f32 %v4931, %v4932
          %v4934 = vrot.slane %v4933, 1
          %v4935 = vadd.f32 %v4933, %v4934
          %v4936 = vrot.slane %v4908, 4
          %v4937 = vadd.f32 %v4908, %v4936
          %v4938 = vrot.slane %v4937, 2
          %v4939 = vadd.f32 %v4937, %v4938
          %v4940 = vrot.slane %v4939, 1
          %v4941 = vadd.f32 %v4939, %v4940
          %v4942 = vrot.slane %v4909, 4
          %v4943 = vadd.f32 %v4909, %v4942
          %v4944 = vrot.slane %v4943, 2
          %v4945 = vadd.f32 %v4943, %v4944
          %v4946 = vrot.slane %v4945, 1
          %v4947 = vadd.f32 %v4945, %v4946
          %v4948 = vrot.slane %v4910, 4
          %v4949 = vadd.f32 %v4910, %v4948
          %v4950 = vrot.slane %v4949, 2
          %v4951 = vadd.f32 %v4949, %v4950
          %v4952 = vrot.slane %v4951, 1
          %v4953 = vadd.f32 %v4951, %v4952
          %v4954 = vrot.slane %v4911, 4
          %v4955 = vadd.f32 %v4911, %v4954
          %v4956 = vrot.slane %v4955, 2
          %v4957 = vadd.f32 %v4955, %v4956
          %v4958 = vrot.slane %v4957, 1
          %v4959 = vadd.f32 %v4957, %v4958
          %v4960 = vrcp.pop 8.0
          %v4961 = vmul.f32 %v4917, %v4960
          %v4962 = vmul.f32 %v4923, %v4960
          %v4963 = vmul.f32 %v4929, %v4960
          %v4964 = vmul.f32 %v4935, %v4960
          %v4965 = vmul.f32 %v4941, %v4960
          %v4966 = vmul.f32 %v4947, %v4960
          %v4967 = vmul.f32 %v4953, %v4960
          %v4968 = vmul.f32 %v4959, %v4960
          %vm4977 = vcmask 1041409
          %v4978 = vsel %vm4977, %v4962, %v4961
          %vm4979 = vcmask 1042434
          %v4980 = vsel %vm4979, %v4963, %v4978
          %vm4981 = vcmask 1043459
          %v4982 = vsel %vm4981, %v4964, %v4980
          %vm4983 = vcmask 1044484
          %v4984 = vsel %vm4983, %v4965, %v4982
          %vm4985 = vcmask 1045509
          %v4986 = vsel %vm4985, %v4966, %v4984
          %vm4987 = vcmask 1046534
          %v4988 = vsel %vm4987, %v4967, %v4986
          %vm4989 = vcmask 1047559
          %v4990 = vsel %vm4989, %v4968, %v4988
          %4992 = vst [vmem:[#allocation19] sm:$0xff] %v4990
        $region100: #{video_header_forward.1} parent=55 // pred_fallthru
          _
        // Predicated region
        $region101: #{video_header_forward.1} parent=55 // pred_check
          %p4993 = pneg %p250
        $region102: #{video_header_forward.1} parent=55 // pred_check_branch
          %4995 = sbr.rel (%p4993) target = $region104
        $region103: #{video_header_forward.1} parent=55 // pred_region
          %s4997 = ssub.s32 128, 128
          %4998 = vsyncadd [#allocation6], %s4997
          %s4999 = smul.addr %s30, 128
          %s5000 = scalar_lea.hbm %s9, %s4999
          %s5002 = sshll.u32 [#allocation19], 4
          %s5003 = int_to_ptr.vmem [resolvable:$true] %s5002
          %5005 = dma.vmem_to_hbm [thread:$0]  %s5003, 128, %s5000, [#allocation6]
        $region104: #{video_header_forward.1} parent=55 // pred_fallthru
          _
        // Predicated region
        $region105: #{video_header_forward.1} parent=55 // pred_check
          %p5006 = pneg %p250
        $region106: #{video_header_forward.1} parent=55 // pred_check_branch
          %5008 = sbr.rel (%p5006) target = $region108
        $region107: #{video_header_forward.1} parent=55 // pred_region
          %5009 = dma.done [#allocation6], 128
        $region108: #{video_header_forward.1} parent=55 // pred_fallthru
          _
      $region56: #{video_header_forward.1} parent=5 // pred_fallthru
        _
      %p5010 = scmp.le.s32.totalorder 2, %s21
      // Predicated region
      $region109: #{video_header_forward.1} parent=5 // pred_check
        %p5011 = pneg %p5010
      $region110: #{video_header_forward.1} parent=5 // pred_check_branch
        %5013 = sbr.rel (%p5011) target = $region112
      $region111: #{video_header_forward.1} parent=5 // pred_region
        %s5014 = ssub.s32 %s21, 2
      $region112: #{video_header_forward.1} parent=5 // pred_fallthru
        _
    $region6: #{video_header_forward.1} parent=1 // loop_footer
      %s25 = sadd.s32 1, %s21
    $region7: #{video_header_forward.1} parent=1 // loop_footer_branch
      %20 = sbr.rel target = $region3
    $region8: #{video_header_forward.1} parent=1 // loop_exit
      _
    %5015 = vsyncpa [#allocation5], 1
    %s5016 = scalar_lea.sflag [#allocation5], 1
    %5017 = vsyncpa %s5016, 1
    %5018 = vsyncpa [#allocation8], 1
    %5019 = vsyncpa [#allocation11], 1
    %5020 = vsyncpa [#allocation14], 1
    %5021 = vsyncpa [#allocation17], 1
    %5022 = vsyncpa [#allocation6], 1
    %s5023 = scalar_lea.sflag [#allocation6], 1
    %5024 = vsyncpa %s5023, 1

</llo_original>
